<compile_context>
chip_gen: v5e
topology: v5e:2x2
jax: 0.10.0
libtpu: 0.0.40
codegen_flags: <defaults>
</compile_context>

<pallas_src>
import functools

import jax
import jax.numpy as jnp
from jax.experimental import pallas as pl
from jax.experimental.pallas import tpu as pltpu

BN_EPS = 1e-5
_LANE = 128


# ----------------------------------------------------------------------------
# Kernels
# ----------------------------------------------------------------------------
def _conv_chain_kernel(x1_ref, w1_ref, b1_ref, w2_ref, b2_ref, w3_ref, b3_ref,
                       h_ref, sum_ref, ssq_ref, *, w_len):
    """One position-tile of the fused conv1->conv2->conv3 chain (all + ReLU).

    Layout: channels in sublanes, flattened (row, width) positions in lanes.
      x1_ref : (K1*Cin, M)   conv1 im2col slab (built in the wrapper)
      w*_ref : (Cout, K*Cin) packed weights,  b*_ref : (Cout, 1)
      h_ref  : (Cout, M)     un-normalised conv3 output (lane-dense store)
      sum_ref/ssq_ref : (1, Cout, 1) per-tile BatchNorm partial statistics
    """
    cout, m = h_ref.shape

    # Width index of every lane position inside its row (computed once).
    wpos = jax.lax.broadcasted_iota(jnp.int32, (cout, m), 1) % w_len

    def shifted(h2d, s):
        # out[:, p] = h2d[:, p - s] within a row, zero at the row boundary.
        rolled = pltpu.roll(h2d, shift=s % m, axis=1)          # XLU lane rotate
        mask = (wpos >= s) if s > 0 else (wpos < w_len + s)
        return jnp.where(mask, rolled, 0.0)

    def conv3tap(h2d, wp_ref, b_ref):
        # Fused K*Cin = 192 contraction: stack [x(p-1); x(p); x(p+1)] along sublanes.
        cat = jnp.concatenate([shifted(h2d, 1), h2d, shifted(h2d, -1)], axis=0)
        z = jnp.dot(wp_ref[...], cat, preferred_element_type=jnp.float32) + b_ref[...]
        return jnp.maximum(z, 0.0)

    # conv1: single matmul over K1*Cin (im2col already done by the wrapper).
    h1 = jnp.dot(w1_ref[...], x1_ref[...],
                 preferred_element_type=jnp.float32) + b1_ref[...]
    h1 = jnp.maximum(h1, 0.0)

    h2 = conv3tap(h1, w2_ref, b2_ref)
    h3 = conv3tap(h2, w3_ref, b3_ref)

    # Lane-dense un-normalised output + per-tile BN partial stats.
    h_ref[...] = h3.astype(h_ref.dtype)
    sum_ref[...] = jnp.sum(h3, axis=1, keepdims=True)[None]
    ssq_ref[...] = jnp.sum(h3 * h3, axis=1, keepdims=True)[None]


def _bn_apply_kernel(h_ref, scale_ref, shift_ref, o_ref):
    """Normalise pass: one FMA per element with folded per-channel scale/shift."""
    o_ref[...] = h_ref[...] * scale_ref[...] + shift_ref[...]


# ----------------------------------------------------------------------------
# Wrapper
# ----------------------------------------------------------------------------
def _choose_m_tile(r, w, max_tile):
    """Largest whole-row position tile dividing r*w, multiple of 128 lanes."""
    m = r * w
    for rows in range(r, 0, -1):
        mt = rows * w
        if mt <= max_tile and m % mt == 0 and mt % _LANE == 0:
            return mt
    return m          # fallback: one full-extent block (always legal)


@functools.partial(jax.jit, static_argnames=("max_tile_positions",))
def time_attention_forward(x_nchw, params, *, max_tile_positions=1024):
    w1, b1, w2, b2, w3, b3, gamma, beta = params
    n, cin, hgt, wid = x_nchw.shape
    cout = w1.shape[0]
    k1 = w1.shape[3]
    pad1 = (k1 - 1) // 2
    r = n * hgt
    m = r * wid
    f32 = jnp.float32

    # ---- layout prep in the wrapper (plain XLA ops) -------------------------
    # conv1 im2col, channels/taps in sublanes, positions in lanes: (K1*Cin, M)
    x_rows = jnp.transpose(x_nchw, (0, 2, 3, 1)).reshape(r, wid, cin).astype(f32)
    xp = jnp.pad(x_rows, ((0, 0), (pad1, pad1), (0, 0)))
    cols = jnp.stack([xp[:, k:k + wid, :] for k in range(k1)], axis=2)  # (R,W,K,Cin)
    x1t = cols.reshape(m, k1 * cin).T                                    # (K*Cin, M)

    def pack_w(wgt):            # OIHW (O, I, 1, K) -> (O, K*I), tap-major
        return jnp.transpose(wgt[:, :, 0, :], (0, 2, 1)).reshape(wgt.shape[0], -1).astype(f32)

    w1p, w2p, w3p = pack_w(w1), pack_w(w2), pack_w(w3)
    b1c = b1.reshape(cout, 1).astype(f32)
    b2c = b2.reshape(cout, 1).astype(f32)
    b3c = b3.reshape(cout, 1).astype(f32)
    kcin1 = k1 * cin

    m_tile = _choose_m_tile(r, wid, max_tile_positions)
    n_tiles = m // m_tile

    cparams = pltpu.CompilerParams(dimension_semantics=("parallel",),
                                   vmem_limit_bytes=32 * 1024 * 1024)

    def full(shape):
        return pl.BlockSpec(shape, lambda i, _r=len(shape): (0,) * _r)

    # ---- pass 1: fused conv chain + per-tile BN statistics ------------------
    conv_kernel = functools.partial(_conv_chain_kernel, w_len=wid)
    h_buf, tsum, tssq = pl.pallas_call(
        conv_kernel,
        grid=(n_tiles,),
        in_specs=[
            pl.BlockSpec((kcin1, m_tile), lambda i: (0, i)),
            full((cout, kcin1)), full((cout, 1)),
            full((cout, 3 * cout)), full((cout, 1)),
            full((cout, 3 * cout)), full((cout, 1)),
        ],
        out_specs=[
            pl.BlockSpec((cout, m_tile), lambda i: (0, i)),
            pl.BlockSpec((1, cout, 1), lambda i: (i, 0, 0)),
            pl.BlockSpec((1, cout, 1), lambda i: (i, 0, 0)),
        ],
        out_shape=[
            jax.ShapeDtypeStruct((cout, m), f32),
            jax.ShapeDtypeStruct((n_tiles, cout, 1), f32),
            jax.ShapeDtypeStruct((n_tiles, cout, 1), f32),
        ],
        compiler_params=cparams,
    )(x1t, w1p, b1c, w2p, b2c, w3p, b3c)

    # ---- tiny global stats reduction + fold gamma/beta into scale/shift -----
    nf = jnp.float32(m)
    mu = jnp.sum(tsum[:, :, 0], axis=0) / nf                 # (Cout,)
    ex2 = jnp.sum(tssq[:, :, 0], axis=0) / nf
    var = jnp.maximum(ex2 - mu * mu, 0.0)                    # biased (training-mode) var
    inv = jax.lax.rsqrt(var + BN_EPS)
    g = gamma.astype(f32)
    scale = (g * inv).reshape(cout, 1)
    shift = (beta.astype(f32) - mu * g * inv).reshape(cout, 1)

    # ---- pass 2: normalise (pure mem-bound FMA, lane-dense in/out) ----------
    y = pl.pallas_call(
        _bn_apply_kernel,
        grid=(n_tiles,),
        in_specs=[pl.BlockSpec((cout, m_tile), lambda i: (0, i)),
                  full((cout, 1)), full((cout, 1))],
        out_specs=pl.BlockSpec((cout, m_tile), lambda i: (0, i)),
        out_shape=jax.ShapeDtypeStruct((cout, m), f32),
        compiler_params=cparams,
    )(h_buf, scale, shift)

    # (Cout, N*H*W) -> NCHW
    return jnp.transpose(y.reshape(cout, n, hgt, wid), (1, 0, 2, 3))


# ----------------------------------------------------------------------------
# Pure-JAX reference (mirrors the PyTorch forward; training-mode BatchNorm)
# ----------------------------------------------------------------------------
def reference_forward(x, params):
    w1, b1, w2, b2, w3, b3, gamma, beta = params

    def conv(inp, wgt, bias, pad):
        y = jax.lax.conv_general_dilated(
            inp, wgt, window_strides=(1, 1), padding=((0, 0), (pad, pad)),
            dimension_numbers=("NCHW", "OIHW", "NCHW"))
        return y + bias.reshape(1, -1, 1, 1)

    h = jax.nn.relu(conv(x, w1, b1, 4))
    h = jax.nn.relu(conv(h, w2, b2, 1))
    h = jax.nn.relu(conv(h, w3, b3, 1))
    mu = jnp.mean(h, axis=(0, 2, 3), keepdims=True)
    var = jnp.mean((h - mu) ** 2, axis=(0, 2, 3), keepdims=True)
    return ((h - mu) * jax.lax.rsqrt(var + BN_EPS)
            * gamma.reshape(1, -1, 1, 1) + beta.reshape(1, -1, 1, 1))


if __name__ == "__main__":
    key = jax.random.PRNGKey(0)
    kx, k1, k2, k3, kb1, kb2, kb3 = jax.random.split(key, 7)

    # R*W = 32*64 = 2048 positions -> two 1024-position tiles (exercises the
    # grid + two-phase BatchNorm path).
    N, Cin, H, W = 2, 4, 16, 64
    Cout = 64

    x = jax.random.normal(kx, (N, Cin, H, W), jnp.float32)
    w1 = 0.1 * jax.random.normal(k1, (Cout, Cin, 1, 9), jnp.float32)
    b1 = 0.1 * jax.random.normal(kb1, (Cout,), jnp.float32)
    w2 = 0.1 * jax.random.normal(k2, (Cout, Cout, 1, 3), jnp.float32)
    b2 = 0.1 * jax.random.normal(kb2, (Cout,), jnp.float32)
    w3 = 0.1 * jax.random.normal(k3, (Cout, Cout, 1, 3), jnp.float32)
    b3 = 0.1 * jax.random.normal(kb3, (Cout,), jnp.float32)
    gamma = jnp.ones((Cout,), jnp.float32)   # BatchNorm2d default affine init
    beta = jnp.zeros((Cout,), jnp.float32)
    params = (w1, b1, w2, b2, w3, b3, gamma, beta)

    out = jax.block_until_ready(time_attention_forward(x, params))
    ref = jax.block_until_ready(reference_forward(x, params))

    assert out.shape == (N, Cout, H, W), out.shape
    max_err = float(jnp.max(jnp.abs(out - ref)))
    assert max_err < 5e-4, f"max abs err = {max_err}"
    print("KERNEL_OK")
</pallas_src>

<mosaic_0001>
module attributes {stable_mosaic.version = 11 : i64} {
  func.func @_conv_chain_kernel(%arg0: i32, %arg1: memref<36x1024xf32, #tpu.memory_space<vmem>>, %arg2: memref<64x36xf32, #tpu.memory_space<vmem>>, %arg3: memref<64x1xf32, #tpu.memory_space<vmem>>, %arg4: memref<64x192xf32, #tpu.memory_space<vmem>>, %arg5: memref<64x1xf32, #tpu.memory_space<vmem>>, %arg6: memref<64x192xf32, #tpu.memory_space<vmem>>, %arg7: memref<64x1xf32, #tpu.memory_space<vmem>>, %arg8: memref<64x1024xf32, #tpu.memory_space<vmem>>, %arg9: memref<1x64x1xf32, #tpu.memory_space<vmem>>, %arg10: memref<1x64x1xf32, #tpu.memory_space<vmem>>) attributes {dimension_semantics = [#tpu.dimension_semantics<parallel>], iteration_bounds = array<i64: 2>, scalar_prefetch = 0 : i64, scratch_operands = 0 : i64, tpu.core_type = #tpu.core_type<tc>, window_params = [{transform_indices = @transform_0, window_bounds = array<i64: 36, 1024>}, {pipeline_mode = #tpu.pipeline_mode<synchronous>, transform_indices = @transform_1, window_bounds = array<i64: 64, 36>}, {pipeline_mode = #tpu.pipeline_mode<synchronous>, transform_indices = @transform_2, window_bounds = array<i64: 64, 1>}, {pipeline_mode = #tpu.pipeline_mode<synchronous>, transform_indices = @transform_3, window_bounds = array<i64: 64, 192>}, {pipeline_mode = #tpu.pipeline_mode<synchronous>, transform_indices = @transform_4, window_bounds = array<i64: 64, 1>}, {pipeline_mode = #tpu.pipeline_mode<synchronous>, transform_indices = @transform_5, window_bounds = array<i64: 64, 192>}, {pipeline_mode = #tpu.pipeline_mode<synchronous>, transform_indices = @transform_6, window_bounds = array<i64: 64, 1>}, {transform_indices = @transform_7, window_bounds = array<i64: 64, 1024>}, {transform_indices = @transform_8, window_bounds = array<i64: 1, 64, 1>}, {transform_indices = @transform_9, window_bounds = array<i64: 1, 64, 1>}]} {
    %0 = tpu.iota {dimensions = array<i32: 1>} : vector<64x1024xi32>
    %c64_i32 = arith.constant 64 : i32
    %c0_i32 = arith.constant 0 : i32
    %1 = arith.cmpi eq, %c64_i32, %c0_i32 : i32
    %c1_i32 = arith.constant 1 : i32
    %2 = arith.select %1, %c1_i32, %c64_i32 : i32
    %3 = vector.broadcast %2 : i32 to vector<64x1024xi32>
    %4 = arith.remsi %0, %3 : vector<64x1024xi32>
    %c0_i32_0 = arith.constant 0 : i32
    %5 = vector.broadcast %c0_i32_0 : i32 to vector<64x1024xi32>
    %6 = arith.cmpi ne, %4, %5 : vector<64x1024xi32>
    %c0_i32_1 = arith.constant 0 : i32
    %7 = vector.broadcast %c0_i32_1 : i32 to vector<64x1024xi32>
    %8 = arith.cmpi slt, %4, %7 : vector<64x1024xi32>
    %c0_i32_2 = arith.constant 0 : i32
    %9 = arith.cmpi slt, %2, %c0_i32_2 : i32
    %10 = vector.broadcast %9 : i1 to vector<64x1024xi1>
    %11 = vector.broadcast %10 : vector<64x1024xi1> to vector<64x1024xi1>
    %12 = arith.xori %8, %11 : vector<64x1024xi1>
    %13 = arith.andi %12, %6 : vector<64x1024xi1>
    %14 = vector.broadcast %2 : i32 to vector<64x1024xi32>
    %15 = arith.addi %4, %14 : vector<64x1024xi32>
    %16 = arith.select %13, %15, %4 : vector<64x1024xi1>, vector<64x1024xi32>
    %c0 = arith.constant 0 : index
    %c0_3 = arith.constant 0 : index
    %17 = vector.load %arg2[%c0, %c0_3] : memref<64x36xf32, #tpu.memory_space<vmem>>, vector<64x36xf32>
    %c0_4 = arith.constant 0 : index
    %c0_5 = arith.constant 0 : index
    %18 = vector.load %arg1[%c0_4, %c0_5] : memref<36x1024xf32, #tpu.memory_space<vmem>>, vector<36x1024xf32>
    %cst = arith.constant dense<0.000000e+00> : vector<64x1024xf32>
    %19 = tpu.matmul %17, %18, %cst {dimension_numbers = #tpu.dot_dimension_numbers<[1], [0], [0], [1], [0, 0, 1, 1], [], []>} : vector<64x36xf32>, vector<36x1024xf32>, vector<64x1024xf32> -> vector<64x1024xf32>
    %c0_6 = arith.constant 0 : index
    %c0_7 = arith.constant 0 : index
    %20 = vector.load %arg3[%c0_6, %c0_7] : memref<64x1xf32, #tpu.memory_space<vmem>>, vector<64x1xf32>
    %21 = vector.broadcast %20 : vector<64x1xf32> to vector<64x1024xf32>
    %22 = arith.addf %19, %21 : vector<64x1024xf32>
    %cst_8 = arith.constant 0.000000e+00 : f32
    %23 = vector.broadcast %cst_8 : f32 to vector<64x1024xf32>
    %24 = arith.maximumf %22, %23 : vector<64x1024xf32>
    %c1_i32_9 = arith.constant 1 : i32
    %25 = tpu.dynamic_rotate %24 by %c1_i32_9 dim 1 : vector<64x1024xf32>, i32 -> vector<64x1024xf32>
    %c1_i32_10 = arith.constant 1 : i32
    %26 = vector.broadcast %c1_i32_10 : i32 to vector<64x1024xi32>
    %27 = arith.cmpi sge, %16, %26 : vector<64x1024xi32>
    %cst_11 = arith.constant 0.000000e+00 : f32
    %28 = vector.broadcast %cst_11 : f32 to vector<64x1024xf32>
    %29 = arith.select %27, %25, %28 : vector<64x1024xi1>, vector<64x1024xf32>
    %c1023_i32 = arith.constant 1023 : i32
    %30 = tpu.dynamic_rotate %24 by %c1023_i32 dim 1 : vector<64x1024xf32>, i32 -> vector<64x1024xf32>
    %c63_i32 = arith.constant 63 : i32
    %31 = vector.broadcast %c63_i32 : i32 to vector<64x1024xi32>
    %32 = arith.cmpi slt, %16, %31 : vector<64x1024xi32>
    %cst_12 = arith.constant 0.000000e+00 : f32
    %33 = vector.broadcast %cst_12 : f32 to vector<64x1024xf32>
    %34 = arith.select %32, %30, %33 : vector<64x1024xi1>, vector<64x1024xf32>
    %35 = tpu.concatenate %29, %24, %34 in 0 : vector<64x1024xf32>, vector<64x1024xf32>, vector<64x1024xf32> -> vector<192x1024xf32>
    %c0_13 = arith.constant 0 : index
    %c0_14 = arith.constant 0 : index
    %36 = vector.load %arg4[%c0_13, %c0_14] : memref<64x192xf32, #tpu.memory_space<vmem>>, vector<64x192xf32>
    %cst_15 = arith.constant dense<0.000000e+00> : vector<64x1024xf32>
    %37 = tpu.matmul %36, %35, %cst_15 {dimension_numbers = #tpu.dot_dimension_numbers<[1], [0], [0], [1], [0, 0, 1, 1], [], []>} : vector<64x192xf32>, vector<192x1024xf32>, vector<64x1024xf32> -> vector<64x1024xf32>
    %c0_16 = arith.constant 0 : index
    %c0_17 = arith.constant 0 : index
    %38 = vector.load %arg5[%c0_16, %c0_17] : memref<64x1xf32, #tpu.memory_space<vmem>>, vector<64x1xf32>
    %39 = vector.broadcast %38 : vector<64x1xf32> to vector<64x1024xf32>
    %40 = arith.addf %37, %39 : vector<64x1024xf32>
    %cst_18 = arith.constant 0.000000e+00 : f32
    %41 = vector.broadcast %cst_18 : f32 to vector<64x1024xf32>
    %42 = arith.maximumf %40, %41 : vector<64x1024xf32>
    %c1_i32_19 = arith.constant 1 : i32
    %43 = tpu.dynamic_rotate %42 by %c1_i32_19 dim 1 : vector<64x1024xf32>, i32 -> vector<64x1024xf32>
    %c1_i32_20 = arith.constant 1 : i32
    %44 = vector.broadcast %c1_i32_20 : i32 to vector<64x1024xi32>
    %45 = arith.cmpi sge, %16, %44 : vector<64x1024xi32>
    %cst_21 = arith.constant 0.000000e+00 : f32
    %46 = vector.broadcast %cst_21 : f32 to vector<64x1024xf32>
    %47 = arith.select %45, %43, %46 : vector<64x1024xi1>, vector<64x1024xf32>
    %c1023_i32_22 = arith.constant 1023 : i32
    %48 = tpu.dynamic_rotate %42 by %c1023_i32_22 dim 1 : vector<64x1024xf32>, i32 -> vector<64x1024xf32>
    %c63_i32_23 = arith.constant 63 : i32
    %49 = vector.broadcast %c63_i32_23 : i32 to vector<64x1024xi32>
    %50 = arith.cmpi slt, %16, %49 : vector<64x1024xi32>
    %cst_24 = arith.constant 0.000000e+00 : f32
    %51 = vector.broadcast %cst_24 : f32 to vector<64x1024xf32>
    %52 = arith.select %50, %48, %51 : vector<64x1024xi1>, vector<64x1024xf32>
    %53 = tpu.concatenate %47, %42, %52 in 0 : vector<64x1024xf32>, vector<64x1024xf32>, vector<64x1024xf32> -> vector<192x1024xf32>
    %c0_25 = arith.constant 0 : index
    %c0_26 = arith.constant 0 : index
    %54 = vector.load %arg6[%c0_25, %c0_26] : memref<64x192xf32, #tpu.memory_space<vmem>>, vector<64x192xf32>
    %cst_27 = arith.constant dense<0.000000e+00> : vector<64x1024xf32>
    %55 = tpu.matmul %54, %53, %cst_27 {dimension_numbers = #tpu.dot_dimension_numbers<[1], [0], [0], [1], [0, 0, 1, 1], [], []>} : vector<64x192xf32>, vector<192x1024xf32>, vector<64x1024xf32> -> vector<64x1024xf32>
    %c0_28 = arith.constant 0 : index
    %c0_29 = arith.constant 0 : index
    %56 = vector.load %arg7[%c0_28, %c0_29] : memref<64x1xf32, #tpu.memory_space<vmem>>, vector<64x1xf32>
    %57 = vector.broadcast %56 : vector<64x1xf32> to vector<64x1024xf32>
    %58 = arith.addf %55, %57 : vector<64x1024xf32>
    %cst_30 = arith.constant 0.000000e+00 : f32
    %59 = vector.broadcast %cst_30 : f32 to vector<64x1024xf32>
    %60 = arith.maximumf %58, %59 : vector<64x1024xf32>
    %c0_31 = arith.constant 0 : index
    %c0_32 = arith.constant 0 : index
    %61 = vector.load %arg8[%c0_31, %c0_32] : memref<64x1024xf32, #tpu.memory_space<vmem>>, vector<64x1024xf32>
    tpu.vector_store %arg8[%c0_31, %c0_32], %60 {strides = array<i32>} : memref<64x1024xf32, #tpu.memory_space<vmem>>, vector<64x1024xf32>,
    %cst_33 = arith.constant dense<0.000000e+00> : vector<64xf32>
    %62 = vector.multi_reduction <add>, %60, %cst_33 [1] : vector<64x1024xf32> to vector<64xf32>
    %63 = vector.shape_cast %62 : vector<64xf32> to vector<64x1xf32>
    %64 = vector.shape_cast %63 : vector<64x1xf32> to vector<1x64x1xf32>
    %c0_34 = arith.constant 0 : index
    %c0_35 = arith.constant 0 : index
    %c0_36 = arith.constant 0 : index
    %65 = vector.load %arg9[%c0_34, %c0_35, %c0_36] : memref<1x64x1xf32, #tpu.memory_space<vmem>>, vector<1x64x1xf32>
    tpu.vector_store %arg9[%c0_34, %c0_35, %c0_36], %64 {strides = array<i32>} : memref<1x64x1xf32, #tpu.memory_space<vmem>>, vector<1x64x1xf32>,
    %66 = arith.mulf %60, %60 : vector<64x1024xf32>
    %cst_37 = arith.constant dense<0.000000e+00> : vector<64xf32>
    %67 = vector.multi_reduction <add>, %66, %cst_37 [1] : vector<64x1024xf32> to vector<64xf32>
    %68 = vector.shape_cast %67 : vector<64xf32> to vector<64x1xf32>
    %69 = vector.shape_cast %68 : vector<64x1xf32> to vector<1x64x1xf32>
    %c0_38 = arith.constant 0 : index
    %c0_39 = arith.constant 0 : index
    %c0_40 = arith.constant 0 : index
    %70 = vector.load %arg10[%c0_38, %c0_39, %c0_40] : memref<1x64x1xf32, #tpu.memory_space<vmem>>, vector<1x64x1xf32>
    tpu.vector_store %arg10[%c0_38, %c0_39, %c0_40], %69 {strides = array<i32>} : memref<1x64x1xf32, #tpu.memory_space<vmem>>, vector<1x64x1xf32>,
    return
  }
  func.func @transform_0(%arg0: i32) -> (i32, i32) {
    %c0_i32 = arith.constant 0 : i32
    %c0_i32_0 = arith.constant 0 : i32
    return %c0_i32, %arg0 : i32, i32
  }
  func.func @transform_1(%arg0: i32) -> (i32, i32) {
    %c0_i32 = arith.constant 0 : i32
    %c0_i32_0 = arith.constant 0 : i32
    %c0_i32_1 = arith.constant 0 : i32
    return %c0_i32, %c0_i32_0 : i32, i32
  }
  func.func @transform_2(%arg0: i32) -> (i32, i32) {
    %c0_i32 = arith.constant 0 : i32
    %c0_i32_0 = arith.constant 0 : i32
    %c0_i32_1 = arith.constant 0 : i32
    return %c0_i32, %c0_i32_0 : i32, i32
  }
  func.func @transform_3(%arg0: i32) -> (i32, i32) {
    %c0_i32 = arith.constant 0 : i32
    %c0_i32_0 = arith.constant 0 : i32
    %c0_i32_1 = arith.constant 0 : i32
    return %c0_i32, %c0_i32_0 : i32, i32
  }
  func.func @transform_4(%arg0: i32) -> (i32, i32) {
    %c0_i32 = arith.constant 0 : i32
    %c0_i32_0 = arith.constant 0 : i32
    %c0_i32_1 = arith.constant 0 : i32
    return %c0_i32, %c0_i32_0 : i32, i32
  }
  func.func @transform_5(%arg0: i32) -> (i32, i32) {
    %c0_i32 = arith.constant 0 : i32
    %c0_i32_0 = arith.constant 0 : i32
    %c0_i32_1 = arith.constant 0 : i32
    return %c0_i32, %c0_i32_0 : i32, i32
  }
  func.func @transform_6(%arg0: i32) -> (i32, i32) {
    %c0_i32 = arith.constant 0 : i32
    %c0_i32_0 = arith.constant 0 : i32
    %c0_i32_1 = arith.constant 0 : i32
    return %c0_i32, %c0_i32_0 : i32, i32
  }
  func.func @transform_7(%arg0: i32) -> (i32, i32) {
    %c0_i32 = arith.constant 0 : i32
    %c0_i32_0 = arith.constant 0 : i32
    return %c0_i32, %arg0 : i32, i32
  }
  func.func @transform_8(%arg0: i32) -> (i32, i32, i32) {
    %c0_i32 = arith.constant 0 : i32
    %c0_i32_0 = arith.constant 0 : i32
    %c0_i32_1 = arith.constant 0 : i32
    return %arg0, %c0_i32, %c0_i32_0 : i32, i32, i32
  }
  func.func @transform_9(%arg0: i32) -> (i32, i32, i32) {
    %c0_i32 = arith.constant 0 : i32
    %c0_i32_0 = arith.constant 0 : i32
    %c0_i32_1 = arith.constant 0 : i32
    return %arg0, %c0_i32, %c0_i32_0 : i32, i32, i32
  }
}

module attributes {stable_mosaic.version = 11 : i64} {
  func.func @_bn_apply_kernel(%arg0: i32, %arg1: memref<64x1024xf32, #tpu.memory_space<vmem>>, %arg2: memref<64x1xf32, #tpu.memory_space<vmem>>, %arg3: memref<64x1xf32, #tpu.memory_space<vmem>>, %arg4: memref<64x1024xf32, #tpu.memory_space<vmem>>) attributes {dimension_semantics = [#tpu.dimension_semantics<parallel>], iteration_bounds = array<i64: 2>, scalar_prefetch = 0 : i64, scratch_operands = 0 : i64, tpu.core_type = #tpu.core_type<tc>, window_params = [{transform_indices = @transform_0, window_bounds = array<i64: 64, 1024>}, {pipeline_mode = #tpu.pipeline_mode<synchronous>, transform_indices = @transform_1, window_bounds = array<i64: 64, 1>}, {pipeline_mode = #tpu.pipeline_mode<synchronous>, transform_indices = @transform_2, window_bounds = array<i64: 64, 1>}, {transform_indices = @transform_3, window_bounds = array<i64: 64, 1024>}]} {
    %c0 = arith.constant 0 : index
    %c0_0 = arith.constant 0 : index
    %0 = vector.load %arg1[%c0, %c0_0] : memref<64x1024xf32, #tpu.memory_space<vmem>>, vector<64x1024xf32>
    %c0_1 = arith.constant 0 : index
    %c0_2 = arith.constant 0 : index
    %1 = vector.load %arg2[%c0_1, %c0_2] : memref<64x1xf32, #tpu.memory_space<vmem>>, vector<64x1xf32>
    %2 = vector.broadcast %1 : vector<64x1xf32> to vector<64x1024xf32>
    %3 = arith.mulf %0, %2 : vector<64x1024xf32>
    %c0_3 = arith.constant 0 : index
    %c0_4 = arith.constant 0 : index
    %4 = vector.load %arg3[%c0_3, %c0_4] : memref<64x1xf32, #tpu.memory_space<vmem>>, vector<64x1xf32>
    %5 = vector.broadcast %4 : vector<64x1xf32> to vector<64x1024xf32>
    %6 = arith.addf %3, %5 : vector<64x1024xf32>
    %c0_5 = arith.constant 0 : index
    %c0_6 = arith.constant 0 : index
    %7 = vector.load %arg4[%c0_5, %c0_6] : memref<64x1024xf32, #tpu.memory_space<vmem>>, vector<64x1024xf32>
    tpu.vector_store %arg4[%c0_5, %c0_6], %6 {strides = array<i32>} : memref<64x1024xf32, #tpu.memory_space<vmem>>, vector<64x1024xf32>,
    return
  }
  func.func @transform_0(%arg0: i32) -> (i32, i32) {
    %c0_i32 = arith.constant 0 : i32
    %c0_i32_0 = arith.constant 0 : i32
    return %c0_i32, %arg0 : i32, i32
  }
  func.func @transform_1(%arg0: i32) -> (i32, i32) {
    %c0_i32 = arith.constant 0 : i32
    %c0_i32_0 = arith.constant 0 : i32
    %c0_i32_1 = arith.constant 0 : i32
    return %c0_i32, %c0_i32_0 : i32, i32
  }
  func.func @transform_2(%arg0: i32) -> (i32, i32) {
    %c0_i32 = arith.constant 0 : i32
    %c0_i32_0 = arith.constant 0 : i32
    %c0_i32_1 = arith.constant 0 : i32
    return %c0_i32, %c0_i32_0 : i32, i32
  }
  func.func @transform_3(%arg0: i32) -> (i32, i32) {
    %c0_i32 = arith.constant 0 : i32
    %c0_i32_0 = arith.constant 0 : i32
    return %c0_i32, %arg0 : i32, i32
  }
}

</mosaic_0001>

<llo_original>
// kernel: time_attention_forward.3
$region0: #{time_attention_forward.3}
  #allocation0 [shape = 'u32[]', space=smem, size = 0x4, offset = 0x4, fixed_abs, tag = 'smem constant byte address 0x4 - core index']
  #allocation1 [shape = 'u32[72,128]{1,0:T(1,128)}', space=vmem, size = 0x9000, scoped, tag = 'internal scratch']
  %s0 = inlined_call_operand.vmem [shape: f32[64,2048], index: 0, kind: input, shape index: {}]
  %s1 = inlined_call_operand.vmem [shape: f32[64,1], index: 1, kind: input, shape index: {}]
  %s2 = inlined_call_operand.vmem [shape: f32[64,1], index: 2, kind: input, shape index: {}]
  %s3 = inlined_call_operand.vmem [shape: f32[64,2048], index: 3, kind: output, shape index: {}]
  %s4 = sld [smem:[#allocation0]]
  $region87: #{time_attention_forward.3} parent=0
    _
  %s6 = ssub.s32 1, %s4
  %s7 = scalar_select 0, %s6, %s4
  $region1: #{time_attention_forward.3} parent=0
    #allocation2 [shape = 'u8[524288]{0}', space=vmem, size = 0x80000, scoped, tag = 'input window, operand 0']
    #allocation3 [shape = 'u8[524288]{0}', space=vmem, size = 0x80000, scoped, tag = 'output window, operand 0']
    loop: start=0, step=1, limit=4
    $region2: #{time_attention_forward.3} parent=1 // loop_pre_header
      _
    $region3: #{time_attention_forward.3} parent=1 // loop_header
      %s9 = sphi 0, %s13
      %p10 = scmp.ge.s32.totalorder %s9, 4
      %s19 = sphi 0, %s21
      %s22 = sphi 0, %s19
      %s23 = sphi 0, %s22
      %s39 = sphi 0, %s23
      %s43 = sphi 0, %s43
      %s45 = sphi 0, %s43
      %s46 = sphi 0, %s45
      %s60 = sphi 0, %s46
      %s64 = sphi 0, %s64
      %s66 = sphi 0, %s64
      %s67 = sphi 0, %s66
      %s81 = sphi 0, %s67
      %s87 = sphi 0, %s89
      %s90 = sphi 0, %s87
      %s91 = sphi 0, %s90
      %s107 = sphi 0, %s91
    $region4: #{time_attention_forward.3} parent=1 // loop_header_branch
      %12 = sbr.rel (%p10) target = $region8
    $region5: #{time_attention_forward.3} parent=1 // loop_body
      %s14 = ssub.s32 %s9, 1
      %s15 = ssub.s32 %s9, 2
      %s16 = sadd.s32 %s9, 1
      %s17 = ssub.s32 %s9, %s16
      %p18 = scmp.eq.s32.totalorder %s17, 0
      %s20 = sadd.s32 %s19, 1
      %s21 = scalar_select %p18, %s19, %s20
      %p24 = pneg %p18
      %p25 = scmp.eq.s32.totalorder %s9, 1
      %p26 = por %p24, %p25
      %p27 = scmp.ne.s32.totalorder %s19, %s22
      %p28 = scmp.eq.s32.totalorder %s9, 0
      %p29 = por %p27, %p28
      %p30 = scmp.ne.s32.totalorder %s19, %s22
      %p31 = scmp.eq.s32.totalorder %s14, 1
      %p32 = por %p30, %p31
      %p33 = scmp.ne.s32.totalorder %s22, %s23
      %p34 = scmp.eq.s32.totalorder %s14, 0
      %p35 = por %p33, %p34
      %p36 = scmp.ne.s32.totalorder %s22, %s23
      %p37 = scmp.eq.s32.totalorder %s15, 1
      %p38 = por %p36, %p37
      %p40 = scmp.ne.s32.totalorder %s23, %s39
      %p41 = scmp.eq.s32.totalorder %s15, 0
      %p42 = por %p40, %p41
      %s44 = sadd.s32 %s43, 1
      %p47 = scmp.eq.s32.totalorder %s9, 1
      %p48 = scmp.ne.s32.totalorder %s43, %s45
      %p49 = scmp.eq.s32.totalorder %s9, 0
      %p50 = por %p48, %p49
      %p51 = scmp.ne.s32.totalorder %s43, %s45
      %p52 = scmp.eq.s32.totalorder %s14, 1
      %p53 = por %p51, %p52
      %p54 = scmp.ne.s32.totalorder %s45, %s46
      %p55 = scmp.eq.s32.totalorder %s14, 0
      %p56 = por %p54, %p55
      %p57 = scmp.ne.s32.totalorder %s45, %s46
      %p58 = scmp.eq.s32.totalorder %s15, 1
      %p59 = por %p57, %p58
      %p61 = scmp.ne.s32.totalorder %s46, %s60
      %p62 = scmp.eq.s32.totalorder %s15, 0
      %p63 = por %p61, %p62
      %s65 = sadd.s32 %s64, 1
      %p68 = scmp.eq.s32.totalorder %s9, 1
      %p69 = scmp.ne.s32.totalorder %s64, %s66
      %p70 = scmp.eq.s32.totalorder %s9, 0
      %p71 = por %p69, %p70
      %p72 = scmp.ne.s32.totalorder %s64, %s66
      %p73 = scmp.eq.s32.totalorder %s14, 1
      %p74 = por %p72, %p73
      %p75 = scmp.ne.s32.totalorder %s66, %s67
      %p76 = scmp.eq.s32.totalorder %s14, 0
      %p77 = por %p75, %p76
      %p78 = scmp.ne.s32.totalorder %s66, %s67
      %p79 = scmp.eq.s32.totalorder %s15, 1
      %p80 = por %p78, %p79
      %p82 = scmp.ne.s32.totalorder %s67, %s81
      %p83 = scmp.eq.s32.totalorder %s15, 0
      %p84 = por %p82, %p83
      %s85 = ssub.s32 %s9, %s16
      %p86 = scmp.eq.s32.totalorder %s85, 0
      %s88 = sadd.s32 %s87, 1
      %s89 = scalar_select %p86, %s87, %s88
      %p92 = pneg %p86
      %p93 = scmp.eq.s32.totalorder %s9, 1
      %p94 = por %p92, %p93
      %p95 = scmp.ne.s32.totalorder %s87, %s90
      %p96 = scmp.eq.s32.totalorder %s9, 0
      %p97 = por %p95, %p96
      %p98 = scmp.ne.s32.totalorder %s87, %s90
      %p99 = scmp.eq.s32.totalorder %s14, 1
      %p100 = por %p98, %p99
      %p101 = scmp.ne.s32.totalorder %s90, %s91
      %p102 = scmp.eq.s32.totalorder %s14, 0
      %p103 = por %p101, %p102
      %p104 = scmp.ne.s32.totalorder %s90, %s91
      %p105 = scmp.eq.s32.totalorder %s15, 1
      %p106 = por %p104, %p105
      %p108 = scmp.ne.s32.totalorder %s91, %s107
      %p109 = scmp.eq.s32.totalorder %s15, 0
      %p110 = por %p108, %p109
      %p111 = scmp.le.s32.totalorder 1, %s9
      %p112 = scmp.lt.s32.totalorder %s9, 3
      %p113 = pnand %p111, %p112
      %p114 = pneg %p113
      // Predicated region
      $region9: #{time_attention_forward.3} parent=5 // pred_check
        _
      $region10: #{time_attention_forward.3} parent=5 // pred_check_branch
        %116 = sbr.rel (%p113) target = $region12
      $region11: #{time_attention_forward.3} parent=5 // pred_region
        %s117 = ssub.s32 %s9, 1
        // Predicated region
        $region13: #{time_attention_forward.3} parent=11 // pred_check
          %p118 = pneg %p56
        $region14: #{time_attention_forward.3} parent=11 // pred_check_branch
          %120 = sbr.rel (%p118) target = $region16
        $region15: #{time_attention_forward.3} parent=11 // pred_region
          _
        $region16: #{time_attention_forward.3} parent=11 // pred_fallthru
          _
        // Predicated region
        $region17: #{time_attention_forward.3} parent=11 // pred_check
          %p121 = pneg %p77
        $region18: #{time_attention_forward.3} parent=11 // pred_check_branch
          %123 = sbr.rel (%p121) target = $region20
        $region19: #{time_attention_forward.3} parent=11 // pred_region
          _
        $region20: #{time_attention_forward.3} parent=11 // pred_fallthru
          _
      $region12: #{time_attention_forward.3} parent=5 // pred_fallthru
        _
      %p124 = scmp.lt.s32.totalorder %s9, 2
      // Predicated region
      $region21: #{time_attention_forward.3} parent=5 // pred_check
        %p125 = pneg %p124
      $region22: #{time_attention_forward.3} parent=5 // pred_check_branch
        %127 = sbr.rel (%p125) target = $region24
      $region23: #{time_attention_forward.3} parent=5 // pred_region
        // Predicated region
        $region25: #{time_attention_forward.3} parent=23 // pred_check
          %p128 = pneg %p29
        $region26: #{time_attention_forward.3} parent=23 // pred_check_branch
          %130 = sbr.rel (%p128) target = $region28
        $region27: #{time_attention_forward.3} parent=23 // pred_region
          %s131 = sand.u32 %s19, 1
          %s132 = sand.u32 %s19, 1
          %s133 = smul.addr %s132, 512
          %s134 = scalar_lea.vmem [#allocation2], %s133
          %s135 = smul.u32 8, %s9
          %s136 = smul.addr %s135, 8
          %s137 = scalar_lea.vmem %s0, %s136
          // Predicated region
          $region29: #{time_attention_forward.3} parent=27 // pred_check
            _
          $region30: #{time_attention_forward.3} parent=27 // pred_check_branch
            %139 = sbr.rel (0) target = $region32
          $region31: #{time_attention_forward.3} parent=27 // pred_region
            // Predicated region
            $region33: #{time_attention_forward.3} parent=31 // pred_check
              _
            $region34: #{time_attention_forward.3} parent=31 // pred_check_branch
              %141 = sbr.rel (0) target = $region36
            $region35: #{time_attention_forward.3} parent=31 // pred_region
              loop: start=0, step=1, limit=1
              $region37: #{time_attention_forward.3} parent=35 // loop_pre_header
                _
              $region38: #{time_attention_forward.3} parent=35 // loop_header
                %s143 = sphi 0, %s147
                %p144 = scmp.ge.s32.totalorder %s143, 1
                %s148 = sphi %s137, %s137
                %s149 = sphi %s134, %s134
              $region39: #{time_attention_forward.3} parent=35 // loop_header_branch
                %146 = sbr.rel (%p144) target = $region43
              $region40: #{time_attention_forward.3} parent=35 // loop_body
                %v150 = vld [vmem:[%s148] sm:$0xff]
                %151 = vst [vmem:[%s149] sm:$0xff] %v150
                %v152 = vld [vmem:[%s148 + $0x8] sm:$0xff]
                %153 = vst [vmem:[%s149 + $0x8] sm:$0xff] %v152
                %v154 = vld [vmem:[%s148 + $0x10] sm:$0xff]
                %155 = vst [vmem:[%s149 + $0x10] sm:$0xff] %v154
                %v156 = vld [vmem:[%s148 + $0x18] sm:$0xff]
                %157 = vst [vmem:[%s149 + $0x18] sm:$0xff] %v156
                %v158 = vld [vmem:[%s148 + $0x20] sm:$0xff]
                %159 = vst [vmem:[%s149 + $0x20] sm:$0xff] %v158
                %v160 = vld [vmem:[%s148 + $0x28] sm:$0xff]
                %161 = vst [vmem:[%s149 + $0x28] sm:$0xff] %v160
                %v162 = vld [vmem:[%s148 + $0x30] sm:$0xff]
                %163 = vst [vmem:[%s149 + $0x30] sm:$0xff] %v162
                %v164 = vld [vmem:[%s148 + $0x38] sm:$0xff]
                %165 = vst [vmem:[%s149 + $0x38] sm:$0xff] %v164
                %v166 = vld [vmem:[%s148 + $0x80] sm:$0xff]
                %167 = vst [vmem:[%s149 + $0x40] sm:$0xff] %v166
                %v168 = vld [vmem:[%s148 + $0x88] sm:$0xff]
                %169 = vst [vmem:[%s149 + $0x48] sm:$0xff] %v168
                %v170 = vld [vmem:[%s148 + $0x90] sm:$0xff]
                %171 = vst [vmem:[%s149 + $0x50] sm:$0xff] %v170
                %v172 = vld [vmem:[%s148 + $0x98] sm:$0xff]
                %173 = vst [vmem:[%s149 + $0x58] sm:$0xff] %v172
                %v174 = vld [vmem:[%s148 + $0xa0] sm:$0xff]
                %175 = vst [vmem:[%s149 + $0x60] sm:$0xff] %v174
                %v176 = vld [vmem:[%s148 + $0xa8] sm:$0xff]
                %177 = vst [vmem:[%s149 + $0x68] sm:$0xff] %v176
                %v178 = vld [vmem:[%s148 + $0xb0] sm:$0xff]
                %179 = vst [vmem:[%s149 + $0x70] sm:$0xff] %v178
                %v180 = vld [vmem:[%s148 + $0xb8] sm:$0xff]
                %181 = vst [vmem:[%s149 + $0x78] sm:$0xff] %v180
                %v182 = vld [vmem:[%s148 + $0x100] sm:$0xff]
                %183 = vst [vmem:[%s149 + $0x80] sm:$0xff] %v182
                %v184 = vld [vmem:[%s148 + $0x108] sm:$0xff]
                %185 = vst [vmem:[%s149 + $0x88] sm:$0xff] %v184
                %v186 = vld [vmem:[%s148 + $0x110] sm:$0xff]
                %187 = vst [vmem:[%s149 + $0x90] sm:$0xff] %v186
                %v188 = vld [vmem:[%s148 + $0x118] sm:$0xff]
                %189 = vst [vmem:[%s149 + $0x98] sm:$0xff] %v188
                %v190 = vld [vmem:[%s148 + $0x120] sm:$0xff]
                %191 = vst [vmem:[%s149 + $0xa0] sm:$0xff] %v190
                %v192 = vld [vmem:[%s148 + $0x128] sm:$0xff]
                %193 = vst [vmem:[%s149 + $0xa8] sm:$0xff] %v192
                %v194 = vld [vmem:[%s148 + $0x130] sm:$0xff]
                %195 = vst [vmem:[%s149 + $0xb0] sm:$0xff] %v194
                %v196 = vld [vmem:[%s148 + $0x138] sm:$0xff]
                %197 = vst [vmem:[%s149 + $0xb8] sm:$0xff] %v196
                %v198 = vld [vmem:[%s148 + $0x180] sm:$0xff]
                %199 = vst [vmem:[%s149 + $0xc0] sm:$0xff] %v198
                %v200 = vld [vmem:[%s148 + $0x188] sm:$0xff]
                %201 = vst [vmem:[%s149 + $0xc8] sm:$0xff] %v200
                %v202 = vld [vmem:[%s148 + $0x190] sm:$0xff]
                %203 = vst [vmem:[%s149 + $0xd0] sm:$0xff] %v202
                %v204 = vld [vmem:[%s148 + $0x198] sm:$0xff]
                %205 = vst [vmem:[%s149 + $0xd8] sm:$0xff] %v204
                %v206 = vld [vmem:[%s148 + $0x1a0] sm:$0xff]
                %207 = vst [vmem:[%s149 + $0xe0] sm:$0xff] %v206
                %v208 = vld [vmem:[%s148 + $0x1a8] sm:$0xff]
                %209 = vst [vmem:[%s149 + $0xe8] sm:$0xff] %v208
                %v210 = vld [vmem:[%s148 + $0x1b0] sm:$0xff]
                %211 = vst [vmem:[%s149 + $0xf0] sm:$0xff] %v210
                %v212 = vld [vmem:[%s148 + $0x1b8] sm:$0xff]
                %213 = vst [vmem:[%s149 + $0xf8] sm:$0xff] %v212
                %v214 = vld [vmem:[%s148 + $0x200] sm:$0xff]
                %215 = vst [vmem:[%s149 + $0x100] sm:$0xff] %v214
                %v216 = vld [vmem:[%s148 + $0x208] sm:$0xff]
                %217 = vst [vmem:[%s149 + $0x108] sm:$0xff] %v216
                %v218 = vld [vmem:[%s148 + $0x210] sm:$0xff]
                %219 = vst [vmem:[%s149 + $0x110] sm:$0xff] %v218
                %v220 = vld [vmem:[%s148 + $0x218] sm:$0xff]
                %221 = vst [vmem:[%s149 + $0x118] sm:$0xff] %v220
                %v222 = vld [vmem:[%s148 + $0x220] sm:$0xff]
                %223 = vst [vmem:[%s149 + $0x120] sm:$0xff] %v222
                %v224 = vld [vmem:[%s148 + $0x228] sm:$0xff]
                %225 = vst [vmem:[%s149 + $0x128] sm:$0xff] %v224
                %v226 = vld [vmem:[%s148 + $0x230] sm:$0xff]
                %227 = vst [vmem:[%s149 + $0x130] sm:$0xff] %v226
                %v228 = vld [vmem:[%s148 + $0x238] sm:$0xff]
                %229 = vst [vmem:[%s149 + $0x138] sm:$0xff] %v228
                %v230 = vld [vmem:[%s148 + $0x280] sm:$0xff]
                %231 = vst [vmem:[%s149 + $0x140] sm:$0xff] %v230
                %v232 = vld [vmem:[%s148 + $0x288] sm:$0xff]
                %233 = vst [vmem:[%s149 + $0x148] sm:$0xff] %v232
                %v234 = vld [vmem:[%s148 + $0x290] sm:$0xff]
                %235 = vst [vmem:[%s149 + $0x150] sm:$0xff] %v234
                %v236 = vld [vmem:[%s148 + $0x298] sm:$0xff]
                %237 = vst [vmem:[%s149 + $0x158] sm:$0xff] %v236
                %v238 = vld [vmem:[%s148 + $0x2a0] sm:$0xff]
                %239 = vst [vmem:[%s149 + $0x160] sm:$0xff] %v238
                %v240 = vld [vmem:[%s148 + $0x2a8] sm:$0xff]
                %241 = vst [vmem:[%s149 + $0x168] sm:$0xff] %v240
                %v242 = vld [vmem:[%s148 + $0x2b0] sm:$0xff]
                %243 = vst [vmem:[%s149 + $0x170] sm:$0xff] %v242
                %v244 = vld [vmem:[%s148 + $0x2b8] sm:$0xff]
                %245 = vst [vmem:[%s149 + $0x178] sm:$0xff] %v244
                %v246 = vld [vmem:[%s148 + $0x300] sm:$0xff]
                %247 = vst [vmem:[%s149 + $0x180] sm:$0xff] %v246
                %v248 = vld [vmem:[%s148 + $0x308] sm:$0xff]
                %249 = vst [vmem:[%s149 + $0x188] sm:$0xff] %v248
                %v250 = vld [vmem:[%s148 + $0x310] sm:$0xff]
                %251 = vst [vmem:[%s149 + $0x190] sm:$0xff] %v250
                %v252 = vld [vmem:[%s148 + $0x318] sm:$0xff]
                %253 = vst [vmem:[%s149 + $0x198] sm:$0xff] %v252
                %v254 = vld [vmem:[%s148 + $0x320] sm:$0xff]
                %255 = vst [vmem:[%s149 + $0x1a0] sm:$0xff] %v254
                %v256 = vld [vmem:[%s148 + $0x328] sm:$0xff]
                %257 = vst [vmem:[%s149 + $0x1a8] sm:$0xff] %v256
                %v258 = vld [vmem:[%s148 + $0x330] sm:$0xff]
                %259 = vst [vmem:[%s149 + $0x1b0] sm:$0xff] %v258
                %v260 = vld [vmem:[%s148 + $0x338] sm:$0xff]
                %261 = vst [vmem:[%s149 + $0x1b8] sm:$0xff] %v260
                %v262 = vld [vmem:[%s148 + $0x380] sm:$0xff]
                %263 = vst [vmem:[%s149 + $0x1c0] sm:$0xff] %v262
                %v264 = vld [vmem:[%s148 + $0x388] sm:$0xff]
                %265 = vst [vmem:[%s149 + $0x1c8] sm:$0xff] %v264
                %v266 = vld [vmem:[%s148 + $0x390] sm:$0xff]
                %267 = vst [vmem:[%s149 + $0x1d0] sm:$0xff] %v266
                %v268 = vld [vmem:[%s148 + $0x398] sm:$0xff]
                %269 = vst [vmem:[%s149 + $0x1d8] sm:$0xff] %v268
                %v270 = vld [vmem:[%s148 + $0x3a0] sm:$0xff]
                %271 = vst [vmem:[%s149 + $0x1e0] sm:$0xff] %v270
                %v272 = vld [vmem:[%s148 + $0x3a8] sm:$0xff]
                %273 = vst [vmem:[%s149 + $0x1e8] sm:$0xff] %v272
                %v274 = vld [vmem:[%s148 + $0x3b0] sm:$0xff]
                %275 = vst [vmem:[%s149 + $0x1f0] sm:$0xff] %v274
                %v276 = vld [vmem:[%s148 + $0x3b8] sm:$0xff]
                %277 = vst [vmem:[%s149 + $0x1f8] sm:$0xff] %v276
              $region41: #{time_attention_forward.3} parent=35 // loop_footer
                %s147 = sadd.s32 1, %s143
              $region42: #{time_attention_forward.3} parent=35 // loop_footer_branch
                %142 = sbr.rel target = $region38
              $region43: #{time_attention_forward.3} parent=35 // loop_exit
                _
            $region36: #{time_attention_forward.3} parent=31 // pred_fallthru
              _
            // Predicated region
            $region44: #{time_attention_forward.3} parent=31 // pred_check
              _
            $region45: #{time_attention_forward.3} parent=31 // pred_check_branch
              %279 = sbr.rel target = $region47
            $region46: #{time_attention_forward.3} parent=31 // pred_region
              _
            $region47: #{time_attention_forward.3} parent=31 // pred_fallthru
              _
          $region32: #{time_attention_forward.3} parent=27 // pred_fallthru
            _
          %280 = vnop
        $region28: #{time_attention_forward.3} parent=23 // pred_fallthru
          _
      $region24: #{time_attention_forward.3} parent=5 // pred_fallthru
        _
      %p281 = scmp.le.s32.totalorder 1, %s9
      %p282 = scmp.lt.s32.totalorder %s9, 3
      %p283 = pnand %p281, %p282
      %p284 = pneg %p283
      // Predicated region
      $region48: #{time_attention_forward.3} parent=5 // pred_check
        _
      $region49: #{time_attention_forward.3} parent=5 // pred_check_branch
        %286 = sbr.rel (%p283) target = $region51
      $region50: #{time_attention_forward.3} parent=5 // pred_region
        %s287 = ssub.s32 %s9, 1
        %s288 = sand.u32 %s22, 1
        %s289 = sand.u32 %s22, 1
        %s290 = smul.addr %s289, 512
        %s291 = scalar_lea.vmem [#allocation2], %s290
        // Predicated region
        $region52: #{time_attention_forward.3} parent=50 // pred_check
          %p292 = pneg %p35
        $region53: #{time_attention_forward.3} parent=50 // pred_check_branch
          %294 = sbr.rel (%p292) target = $region55
        $region54: #{time_attention_forward.3} parent=50 // pred_region
          _
        $region55: #{time_attention_forward.3} parent=50 // pred_fallthru
          _
        %s295 = sand.u32 %s22, 1
        %s296 = sand.u32 %s22, 1
        %s297 = smul.addr %s296, 512
        %s298 = scalar_lea.vmem [#allocation2], %s297
        %p299 = pneg %p35
        %p300 = pneg %p32
        %p301 = pneg %p56
        %p302 = pneg %p53
        %p303 = pneg %p77
        %p304 = pneg %p74
        %p305 = pneg %p103
        %p306 = pneg %p100
        %s307 = sand.u32 %s90, 1
        %s308 = sand.u32 %s90, 1
        %s309 = smul.addr %s308, 512
        %s310 = scalar_lea.vmem [#allocation3], %s309
        %s311 = smul.u32 8, %s14
        %s312 = smul.u32 8, %s14
        %v313 = vld [vmem:[%s291] sm:$0xff]
        %v314 = vld [vmem:[%s291 + $0x8] sm:$0xff]
        %v315 = vld [vmem:[%s291 + $0x10] sm:$0xff]
        %v316 = vld [vmem:[%s291 + $0x18] sm:$0xff]
        %v317 = vld [vmem:[%s291 + $0x20] sm:$0xff]
        %v318 = vld [vmem:[%s291 + $0x28] sm:$0xff]
        %v319 = vld [vmem:[%s291 + $0x30] sm:$0xff]
        %v320 = vld [vmem:[%s291 + $0x38] sm:$0xff]
        %v321 = vld [vmem:[%s291 + $0x40] sm:$0xff]
        %v322 = vld [vmem:[%s291 + $0x48] sm:$0xff]
        %v323 = vld [vmem:[%s291 + $0x50] sm:$0xff]
        %v324 = vld [vmem:[%s291 + $0x58] sm:$0xff]
        %v325 = vld [vmem:[%s291 + $0x60] sm:$0xff]
        %v326 = vld [vmem:[%s291 + $0x68] sm:$0xff]
        %v327 = vld [vmem:[%s291 + $0x70] sm:$0xff]
        %v328 = vld [vmem:[%s291 + $0x78] sm:$0xff]
        %v329 = vld [vmem:[%s291 + $0x80] sm:$0xff]
        %v330 = vld [vmem:[%s291 + $0x88] sm:$0xff]
        %v331 = vld [vmem:[%s291 + $0x90] sm:$0xff]
        %v332 = vld [vmem:[%s291 + $0x98] sm:$0xff]
        %v333 = vld [vmem:[%s291 + $0xa0] sm:$0xff]
        %v334 = vld [vmem:[%s291 + $0xa8] sm:$0xff]
        %v335 = vld [vmem:[%s291 + $0xb0] sm:$0xff]
        %v336 = vld [vmem:[%s291 + $0xb8] sm:$0xff]
        %v337 = vld [vmem:[%s291 + $0xc0] sm:$0xff]
        %v338 = vld [vmem:[%s291 + $0xc8] sm:$0xff]
        %v339 = vld [vmem:[%s291 + $0xd0] sm:$0xff]
        %v340 = vld [vmem:[%s291 + $0xd8] sm:$0xff]
        %v341 = vld [vmem:[%s291 + $0xe0] sm:$0xff]
        %v342 = vld [vmem:[%s291 + $0xe8] sm:$0xff]
        %v343 = vld [vmem:[%s291 + $0xf0] sm:$0xff]
        %v344 = vld [vmem:[%s291 + $0xf8] sm:$0xff]
        %v345 = vld [vmem:[%s291 + $0x100] sm:$0xff]
        %v346 = vld [vmem:[%s291 + $0x108] sm:$0xff]
        %v347 = vld [vmem:[%s291 + $0x110] sm:$0xff]
        %v348 = vld [vmem:[%s291 + $0x118] sm:$0xff]
        %v349 = vld [vmem:[%s291 + $0x120] sm:$0xff]
        %v350 = vld [vmem:[%s291 + $0x128] sm:$0xff]
        %v351 = vld [vmem:[%s291 + $0x130] sm:$0xff]
        %v352 = vld [vmem:[%s291 + $0x138] sm:$0xff]
        %v353 = vld [vmem:[%s291 + $0x140] sm:$0xff]
        %v354 = vld [vmem:[%s291 + $0x148] sm:$0xff]
        %v355 = vld [vmem:[%s291 + $0x150] sm:$0xff]
        %v356 = vld [vmem:[%s291 + $0x158] sm:$0xff]
        %v357 = vld [vmem:[%s291 + $0x160] sm:$0xff]
        %v358 = vld [vmem:[%s291 + $0x168] sm:$0xff]
        %v359 = vld [vmem:[%s291 + $0x170] sm:$0xff]
        %v360 = vld [vmem:[%s291 + $0x178] sm:$0xff]
        %v361 = vld [vmem:[%s291 + $0x180] sm:$0xff]
        %v362 = vld [vmem:[%s291 + $0x188] sm:$0xff]
        %v363 = vld [vmem:[%s291 + $0x190] sm:$0xff]
        %v364 = vld [vmem:[%s291 + $0x198] sm:$0xff]
        %v365 = vld [vmem:[%s291 + $0x1a0] sm:$0xff]
        %v366 = vld [vmem:[%s291 + $0x1a8] sm:$0xff]
        %v367 = vld [vmem:[%s291 + $0x1b0] sm:$0xff]
        %v368 = vld [vmem:[%s291 + $0x1b8] sm:$0xff]
        %v369 = vld [vmem:[%s291 + $0x1c0] sm:$0xff]
        %v370 = vld [vmem:[%s291 + $0x1c8] sm:$0xff]
        %v371 = vld [vmem:[%s291 + $0x1d0] sm:$0xff]
        %v372 = vld [vmem:[%s291 + $0x1d8] sm:$0xff]
        %v373 = vld [vmem:[%s291 + $0x1e0] sm:$0xff]
        %v374 = vld [vmem:[%s291 + $0x1e8] sm:$0xff]
        %v375 = vld [vmem:[%s291 + $0x1f0] sm:$0xff]
        %v376 = vld [vmem:[%s291 + $0x1f8] sm:$0xff]
        %v377 = vld [vmem:[%s1] sm:$0xff]
        %v378 = vld [vmem:[%s1 + $0x8] sm:$0xff]
        %v379 = vld [vmem:[%s1 + $0x10] sm:$0xff]
        %v380 = vld [vmem:[%s1 + $0x18] sm:$0xff]
        %v381 = vld [vmem:[%s1 + $0x20] sm:$0xff]
        %v382 = vld [vmem:[%s1 + $0x28] sm:$0xff]
        %v383 = vld [vmem:[%s1 + $0x30] sm:$0xff]
        %v384 = vld [vmem:[%s1 + $0x38] sm:$0xff]
        %386 = vset.pattern.permute.xlu0 0
        %387 = vperm.xlu0 %386, %v377
        %v388 = vpop.permute.xlu0 %387
        %391 = vset.pattern.permute.xlu0 0
        %392 = vperm.xlu0 %391, %v378
        %v393 = vpop.permute.xlu0 %392
        %396 = vset.pattern.permute.xlu0 0
        %397 = vperm.xlu0 %396, %v379
        %v398 = vpop.permute.xlu0 %397
        %401 = vset.pattern.permute.xlu0 0
        %402 = vperm.xlu0 %401, %v380
        %v403 = vpop.permute.xlu0 %402
        %406 = vset.pattern.permute.xlu0 0
        %407 = vperm.xlu0 %406, %v381
        %v408 = vpop.permute.xlu0 %407
        %411 = vset.pattern.permute.xlu0 0
        %412 = vperm.xlu0 %411, %v382
        %v413 = vpop.permute.xlu0 %412
        %416 = vset.pattern.permute.xlu0 0
        %417 = vperm.xlu0 %416, %v383
        %v418 = vpop.permute.xlu0 %417
        %421 = vset.pattern.permute.xlu0 0
        %422 = vperm.xlu0 %421, %v384
        %v423 = vpop.permute.xlu0 %422
        %v425 = vmul.f32 %v313, %v388
        %v426 = vmul.f32 %v314, %v388
        %v427 = vmul.f32 %v315, %v388
        %v428 = vmul.f32 %v316, %v388
        %v429 = vmul.f32 %v317, %v388
        %v430 = vmul.f32 %v318, %v388
        %v431 = vmul.f32 %v319, %v388
        %v432 = vmul.f32 %v320, %v388
        %v433 = vmul.f32 %v321, %v393
        %v434 = vmul.f32 %v322, %v393
        %v435 = vmul.f32 %v323, %v393
        %v436 = vmul.f32 %v324, %v393
        %v437 = vmul.f32 %v325, %v393
        %v438 = vmul.f32 %v326, %v393
        %v439 = vmul.f32 %v327, %v393
        %v440 = vmul.f32 %v328, %v393
        %v441 = vmul.f32 %v329, %v398
        %v442 = vmul.f32 %v330, %v398
        %v443 = vmul.f32 %v331, %v398
        %v444 = vmul.f32 %v332, %v398
        %v445 = vmul.f32 %v333, %v398
        %v446 = vmul.f32 %v334, %v398
        %v447 = vmul.f32 %v335, %v398
        %v448 = vmul.f32 %v336, %v398
        %v449 = vmul.f32 %v337, %v403
        %v450 = vmul.f32 %v338, %v403
        %v451 = vmul.f32 %v339, %v403
        %v452 = vmul.f32 %v340, %v403
        %v453 = vmul.f32 %v341, %v403
        %v454 = vmul.f32 %v342, %v403
        %v455 = vmul.f32 %v343, %v403
        %v456 = vmul.f32 %v344, %v403
        %v457 = vmul.f32 %v345, %v408
        %v458 = vmul.f32 %v346, %v408
        %v459 = vmul.f32 %v347, %v408
        %v460 = vmul.f32 %v348, %v408
        %v461 = vmul.f32 %v349, %v408
        %v462 = vmul.f32 %v350, %v408
        %v463 = vmul.f32 %v351, %v408
        %v464 = vmul.f32 %v352, %v408
        %v465 = vmul.f32 %v353, %v413
        %v466 = vmul.f32 %v354, %v413
        %v467 = vmul.f32 %v355, %v413
        %v468 = vmul.f32 %v356, %v413
        %v469 = vmul.f32 %v357, %v413
        %v470 = vmul.f32 %v358, %v413
        %v471 = vmul.f32 %v359, %v413
        %v472 = vmul.f32 %v360, %v413
        %v473 = vmul.f32 %v361, %v418
        %v474 = vmul.f32 %v362, %v418
        %v475 = vmul.f32 %v363, %v418
        %v476 = vmul.f32 %v364, %v418
        %v477 = vmul.f32 %v365, %v418
        %v478 = vmul.f32 %v366, %v418
        %v479 = vmul.f32 %v367, %v418
        %v480 = vmul.f32 %v368, %v418
        %v481 = vmul.f32 %v369, %v423
        %v482 = vmul.f32 %v370, %v423
        %v483 = vmul.f32 %v371, %v423
        %v484 = vmul.f32 %v372, %v423
        %v485 = vmul.f32 %v373, %v423
        %v486 = vmul.f32 %v374, %v423
        %v487 = vmul.f32 %v375, %v423
        %v488 = vmul.f32 %v376, %v423
        %v489 = vld [vmem:[%s2] sm:$0xff]
        %v490 = vld [vmem:[%s2 + $0x8] sm:$0xff]
        %v491 = vld [vmem:[%s2 + $0x10] sm:$0xff]
        %v492 = vld [vmem:[%s2 + $0x18] sm:$0xff]
        %v493 = vld [vmem:[%s2 + $0x20] sm:$0xff]
        %v494 = vld [vmem:[%s2 + $0x28] sm:$0xff]
        %v495 = vld [vmem:[%s2 + $0x30] sm:$0xff]
        %v496 = vld [vmem:[%s2 + $0x38] sm:$0xff]
        %498 = vset.pattern.permute.xlu0 0
        %499 = vperm.xlu0 %498, %v489
        %v500 = vpop.permute.xlu0 %499
        %503 = vset.pattern.permute.xlu0 0
        %504 = vperm.xlu0 %503, %v490
        %v505 = vpop.permute.xlu0 %504
        %508 = vset.pattern.permute.xlu0 0
        %509 = vperm.xlu0 %508, %v491
        %v510 = vpop.permute.xlu0 %509
        %513 = vset.pattern.permute.xlu0 0
        %514 = vperm.xlu0 %513, %v492
        %v515 = vpop.permute.xlu0 %514
        %518 = vset.pattern.permute.xlu0 0
        %519 = vperm.xlu0 %518, %v493
        %v520 = vpop.permute.xlu0 %519
        %523 = vset.pattern.permute.xlu0 0
        %524 = vperm.xlu0 %523, %v494
        %v525 = vpop.permute.xlu0 %524
        %528 = vset.pattern.permute.xlu0 0
        %529 = vperm.xlu0 %528, %v495
        %v530 = vpop.permute.xlu0 %529
        %533 = vset.pattern.permute.xlu0 0
        %534 = vperm.xlu0 %533, %v496
        %v535 = vpop.permute.xlu0 %534
        %v537 = vadd.f32 %v425, %v500
        %v538 = vadd.f32 %v426, %v500
        %v539 = vadd.f32 %v427, %v500
        %v540 = vadd.f32 %v428, %v500
        %v541 = vadd.f32 %v429, %v500
        %v542 = vadd.f32 %v430, %v500
        %v543 = vadd.f32 %v431, %v500
        %v544 = vadd.f32 %v432, %v500
        %v545 = vadd.f32 %v433, %v505
        %v546 = vadd.f32 %v434, %v505
        %v547 = vadd.f32 %v435, %v505
        %v548 = vadd.f32 %v436, %v505
        %v549 = vadd.f32 %v437, %v505
        %v550 = vadd.f32 %v438, %v505
        %v551 = vadd.f32 %v439, %v505
        %v552 = vadd.f32 %v440, %v505
        %v553 = vadd.f32 %v441, %v510
        %v554 = vadd.f32 %v442, %v510
        %v555 = vadd.f32 %v443, %v510
        %v556 = vadd.f32 %v444, %v510
        %v557 = vadd.f32 %v445, %v510
        %v558 = vadd.f32 %v446, %v510
        %v559 = vadd.f32 %v447, %v510
        %v560 = vadd.f32 %v448, %v510
        %v561 = vadd.f32 %v449, %v515
        %v562 = vadd.f32 %v450, %v515
        %v563 = vadd.f32 %v451, %v515
        %v564 = vadd.f32 %v452, %v515
        %v565 = vadd.f32 %v453, %v515
        %v566 = vadd.f32 %v454, %v515
        %v567 = vadd.f32 %v455, %v515
        %v568 = vadd.f32 %v456, %v515
        %v569 = vadd.f32 %v457, %v520
        %v570 = vadd.f32 %v458, %v520
        %v571 = vadd.f32 %v459, %v520
        %v572 = vadd.f32 %v460, %v520
        %v573 = vadd.f32 %v461, %v520
        %v574 = vadd.f32 %v462, %v520
        %v575 = vadd.f32 %v463, %v520
        %v576 = vadd.f32 %v464, %v520
        %v577 = vadd.f32 %v465, %v525
        %v578 = vadd.f32 %v466, %v525
        %v579 = vadd.f32 %v467, %v525
        %v580 = vadd.f32 %v468, %v525
        %v581 = vadd.f32 %v469, %v525
        %v582 = vadd.f32 %v470, %v525
        %v583 = vadd.f32 %v471, %v525
        %v584 = vadd.f32 %v472, %v525
        %v585 = vadd.f32 %v473, %v530
        %v586 = vadd.f32 %v474, %v530
        %v587 = vadd.f32 %v475, %v530
        %v588 = vadd.f32 %v476, %v530
        %v589 = vadd.f32 %v477, %v530
        %v590 = vadd.f32 %v478, %v530
        %v591 = vadd.f32 %v479, %v530
        %v592 = vadd.f32 %v480, %v530
        %v593 = vadd.f32 %v481, %v535
        %v594 = vadd.f32 %v482, %v535
        %v595 = vadd.f32 %v483, %v535
        %v596 = vadd.f32 %v484, %v535
        %v597 = vadd.f32 %v485, %v535
        %v598 = vadd.f32 %v486, %v535
        %v599 = vadd.f32 %v487, %v535
        %v600 = vadd.f32 %v488, %v535
        %601 = vst [vmem:[%s310] sm:$0xff] %v537
        %602 = vst [vmem:[%s310 + $0x8] sm:$0xff] %v538
        %603 = vst [vmem:[%s310 + $0x10] sm:$0xff] %v539
        %604 = vst [vmem:[%s310 + $0x18] sm:$0xff] %v540
        %605 = vst [vmem:[%s310 + $0x20] sm:$0xff] %v541
        %606 = vst [vmem:[%s310 + $0x28] sm:$0xff] %v542
        %607 = vst [vmem:[%s310 + $0x30] sm:$0xff] %v543
        %608 = vst [vmem:[%s310 + $0x38] sm:$0xff] %v544
        %609 = vst [vmem:[%s310 + $0x40] sm:$0xff] %v545
        %610 = vst [vmem:[%s310 + $0x48] sm:$0xff] %v546
        %611 = vst [vmem:[%s310 + $0x50] sm:$0xff] %v547
        %612 = vst [vmem:[%s310 + $0x58] sm:$0xff] %v548
        %613 = vst [vmem:[%s310 + $0x60] sm:$0xff] %v549
        %614 = vst [vmem:[%s310 + $0x68] sm:$0xff] %v550
        %615 = vst [vmem:[%s310 + $0x70] sm:$0xff] %v551
        %616 = vst [vmem:[%s310 + $0x78] sm:$0xff] %v552
        %617 = vst [vmem:[%s310 + $0x80] sm:$0xff] %v553
        %618 = vst [vmem:[%s310 + $0x88] sm:$0xff] %v554
        %619 = vst [vmem:[%s310 + $0x90] sm:$0xff] %v555
        %620 = vst [vmem:[%s310 + $0x98] sm:$0xff] %v556
        %621 = vst [vmem:[%s310 + $0xa0] sm:$0xff] %v557
        %622 = vst [vmem:[%s310 + $0xa8] sm:$0xff] %v558
        %623 = vst [vmem:[%s310 + $0xb0] sm:$0xff] %v559
        %624 = vst [vmem:[%s310 + $0xb8] sm:$0xff] %v560
        %625 = vst [vmem:[%s310 + $0xc0] sm:$0xff] %v561
        %626 = vst [vmem:[%s310 + $0xc8] sm:$0xff] %v562
        %627 = vst [vmem:[%s310 + $0xd0] sm:$0xff] %v563
        %628 = vst [vmem:[%s310 + $0xd8] sm:$0xff] %v564
        %629 = vst [vmem:[%s310 + $0xe0] sm:$0xff] %v565
        %630 = vst [vmem:[%s310 + $0xe8] sm:$0xff] %v566
        %631 = vst [vmem:[%s310 + $0xf0] sm:$0xff] %v567
        %632 = vst [vmem:[%s310 + $0xf8] sm:$0xff] %v568
        %633 = vst [vmem:[%s310 + $0x100] sm:$0xff] %v569
        %634 = vst [vmem:[%s310 + $0x108] sm:$0xff] %v570
        %635 = vst [vmem:[%s310 + $0x110] sm:$0xff] %v571
        %636 = vst [vmem:[%s310 + $0x118] sm:$0xff] %v572
        %637 = vst [vmem:[%s310 + $0x120] sm:$0xff] %v573
        %638 = vst [vmem:[%s310 + $0x128] sm:$0xff] %v574
        %639 = vst [vmem:[%s310 + $0x130] sm:$0xff] %v575
        %640 = vst [vmem:[%s310 + $0x138] sm:$0xff] %v576
        %641 = vst [vmem:[%s310 + $0x140] sm:$0xff] %v577
        %642 = vst [vmem:[%s310 + $0x148] sm:$0xff] %v578
        %643 = vst [vmem:[%s310 + $0x150] sm:$0xff] %v579
        %644 = vst [vmem:[%s310 + $0x158] sm:$0xff] %v580
        %645 = vst [vmem:[%s310 + $0x160] sm:$0xff] %v581
        %646 = vst [vmem:[%s310 + $0x168] sm:$0xff] %v582
        %647 = vst [vmem:[%s310 + $0x170] sm:$0xff] %v583
        %648 = vst [vmem:[%s310 + $0x178] sm:$0xff] %v584
        %649 = vst [vmem:[%s310 + $0x180] sm:$0xff] %v585
        %650 = vst [vmem:[%s310 + $0x188] sm:$0xff] %v586
        %651 = vst [vmem:[%s310 + $0x190] sm:$0xff] %v587
        %652 = vst [vmem:[%s310 + $0x198] sm:$0xff] %v588
        %653 = vst [vmem:[%s310 + $0x1a0] sm:$0xff] %v589
        %654 = vst [vmem:[%s310 + $0x1a8] sm:$0xff] %v590
        %655 = vst [vmem:[%s310 + $0x1b0] sm:$0xff] %v591
        %656 = vst [vmem:[%s310 + $0x1b8] sm:$0xff] %v592
        %657 = vst [vmem:[%s310 + $0x1c0] sm:$0xff] %v593
        %658 = vst [vmem:[%s310 + $0x1c8] sm:$0xff] %v594
        %659 = vst [vmem:[%s310 + $0x1d0] sm:$0xff] %v595
        %660 = vst [vmem:[%s310 + $0x1d8] sm:$0xff] %v596
        %661 = vst [vmem:[%s310 + $0x1e0] sm:$0xff] %v597
        %662 = vst [vmem:[%s310 + $0x1e8] sm:$0xff] %v598
        %663 = vst [vmem:[%s310 + $0x1f0] sm:$0xff] %v599
        %664 = vst [vmem:[%s310 + $0x1f8] sm:$0xff] %v600
        %s665 = sand.u32 %s90, 1
        %s666 = sand.u32 %s90, 1
        %s667 = smul.addr %s666, 512
        %s668 = scalar_lea.vmem [#allocation3], %s667
        // Predicated region
        $region56: #{time_attention_forward.3} parent=50 // pred_check
          %p669 = pneg %p100
        $region57: #{time_attention_forward.3} parent=50 // pred_check_branch
          %671 = sbr.rel (%p669) target = $region59
        $region58: #{time_attention_forward.3} parent=50 // pred_region
          %s672 = smul.u32 8, %s14
          %s673 = smul.addr %s672, 8
          %s674 = scalar_lea.vmem %s3, %s673
          // Predicated region
          $region60: #{time_attention_forward.3} parent=58 // pred_check
            _
          $region61: #{time_attention_forward.3} parent=58 // pred_check_branch
            %676 = sbr.rel (0) target = $region63
          $region62: #{time_attention_forward.3} parent=58 // pred_region
            // Predicated region
            $region64: #{time_attention_forward.3} parent=62 // pred_check
              _
            $region65: #{time_attention_forward.3} parent=62 // pred_check_branch
              %678 = sbr.rel (0) target = $region67
            $region66: #{time_attention_forward.3} parent=62 // pred_region
              loop: start=0, step=1, limit=1
              $region68: #{time_attention_forward.3} parent=66 // loop_pre_header
                _
              $region69: #{time_attention_forward.3} parent=66 // loop_header
                %s680 = sphi 0, %s684
                %p681 = scmp.ge.s32.totalorder %s680, 1
                %s685 = sphi %s668, %s668
                %s686 = sphi %s674, %s674
              $region70: #{time_attention_forward.3} parent=66 // loop_header_branch
                %683 = sbr.rel (%p681) target = $region74
              $region71: #{time_attention_forward.3} parent=66 // loop_body
                %v687 = vld [vmem:[%s685] sm:$0xff]
                %688 = vst [vmem:[%s686] sm:$0xff] %v687
                %v689 = vld [vmem:[%s685 + $0x8] sm:$0xff]
                %690 = vst [vmem:[%s686 + $0x8] sm:$0xff] %v689
                %v691 = vld [vmem:[%s685 + $0x10] sm:$0xff]
                %692 = vst [vmem:[%s686 + $0x10] sm:$0xff] %v691
                %v693 = vld [vmem:[%s685 + $0x18] sm:$0xff]
                %694 = vst [vmem:[%s686 + $0x18] sm:$0xff] %v693
                %v695 = vld [vmem:[%s685 + $0x20] sm:$0xff]
                %696 = vst [vmem:[%s686 + $0x20] sm:$0xff] %v695
                %v697 = vld [vmem:[%s685 + $0x28] sm:$0xff]
                %698 = vst [vmem:[%s686 + $0x28] sm:$0xff] %v697
                %v699 = vld [vmem:[%s685 + $0x30] sm:$0xff]
                %700 = vst [vmem:[%s686 + $0x30] sm:$0xff] %v699
                %v701 = vld [vmem:[%s685 + $0x38] sm:$0xff]
                %702 = vst [vmem:[%s686 + $0x38] sm:$0xff] %v701
                %v703 = vld [vmem:[%s685 + $0x40] sm:$0xff]
                %704 = vst [vmem:[%s686 + $0x80] sm:$0xff] %v703
                %v705 = vld [vmem:[%s685 + $0x48] sm:$0xff]
                %706 = vst [vmem:[%s686 + $0x88] sm:$0xff] %v705
                %v707 = vld [vmem:[%s685 + $0x50] sm:$0xff]
                %708 = vst [vmem:[%s686 + $0x90] sm:$0xff] %v707
                %v709 = vld [vmem:[%s685 + $0x58] sm:$0xff]
                %710 = vst [vmem:[%s686 + $0x98] sm:$0xff] %v709
                %v711 = vld [vmem:[%s685 + $0x60] sm:$0xff]
                %712 = vst [vmem:[%s686 + $0xa0] sm:$0xff] %v711
                %v713 = vld [vmem:[%s685 + $0x68] sm:$0xff]
                %714 = vst [vmem:[%s686 + $0xa8] sm:$0xff] %v713
                %v715 = vld [vmem:[%s685 + $0x70] sm:$0xff]
                %716 = vst [vmem:[%s686 + $0xb0] sm:$0xff] %v715
                %v717 = vld [vmem:[%s685 + $0x78] sm:$0xff]
                %718 = vst [vmem:[%s686 + $0xb8] sm:$0xff] %v717
                %v719 = vld [vmem:[%s685 + $0x80] sm:$0xff]
                %720 = vst [vmem:[%s686 + $0x100] sm:$0xff] %v719
                %v721 = vld [vmem:[%s685 + $0x88] sm:$0xff]
                %722 = vst [vmem:[%s686 + $0x108] sm:$0xff] %v721
                %v723 = vld [vmem:[%s685 + $0x90] sm:$0xff]
                %724 = vst [vmem:[%s686 + $0x110] sm:$0xff] %v723
                %v725 = vld [vmem:[%s685 + $0x98] sm:$0xff]
                %726 = vst [vmem:[%s686 + $0x118] sm:$0xff] %v725
                %v727 = vld [vmem:[%s685 + $0xa0] sm:$0xff]
                %728 = vst [vmem:[%s686 + $0x120] sm:$0xff] %v727
                %v729 = vld [vmem:[%s685 + $0xa8] sm:$0xff]
                %730 = vst [vmem:[%s686 + $0x128] sm:$0xff] %v729
                %v731 = vld [vmem:[%s685 + $0xb0] sm:$0xff]
                %732 = vst [vmem:[%s686 + $0x130] sm:$0xff] %v731
                %v733 = vld [vmem:[%s685 + $0xb8] sm:$0xff]
                %734 = vst [vmem:[%s686 + $0x138] sm:$0xff] %v733
                %v735 = vld [vmem:[%s685 + $0xc0] sm:$0xff]
                %736 = vst [vmem:[%s686 + $0x180] sm:$0xff] %v735
                %v737 = vld [vmem:[%s685 + $0xc8] sm:$0xff]
                %738 = vst [vmem:[%s686 + $0x188] sm:$0xff] %v737
                %v739 = vld [vmem:[%s685 + $0xd0] sm:$0xff]
                %740 = vst [vmem:[%s686 + $0x190] sm:$0xff] %v739
                %v741 = vld [vmem:[%s685 + $0xd8] sm:$0xff]
                %742 = vst [vmem:[%s686 + $0x198] sm:$0xff] %v741
                %v743 = vld [vmem:[%s685 + $0xe0] sm:$0xff]
                %744 = vst [vmem:[%s686 + $0x1a0] sm:$0xff] %v743
                %v745 = vld [vmem:[%s685 + $0xe8] sm:$0xff]
                %746 = vst [vmem:[%s686 + $0x1a8] sm:$0xff] %v745
                %v747 = vld [vmem:[%s685 + $0xf0] sm:$0xff]
                %748 = vst [vmem:[%s686 + $0x1b0] sm:$0xff] %v747
                %v749 = vld [vmem:[%s685 + $0xf8] sm:$0xff]
                %750 = vst [vmem:[%s686 + $0x1b8] sm:$0xff] %v749
                %v751 = vld [vmem:[%s685 + $0x100] sm:$0xff]
                %752 = vst [vmem:[%s686 + $0x200] sm:$0xff] %v751
                %v753 = vld [vmem:[%s685 + $0x108] sm:$0xff]
                %754 = vst [vmem:[%s686 + $0x208] sm:$0xff] %v753
                %v755 = vld [vmem:[%s685 + $0x110] sm:$0xff]
                %756 = vst [vmem:[%s686 + $0x210] sm:$0xff] %v755
                %v757 = vld [vmem:[%s685 + $0x118] sm:$0xff]
                %758 = vst [vmem:[%s686 + $0x218] sm:$0xff] %v757
                %v759 = vld [vmem:[%s685 + $0x120] sm:$0xff]
                %760 = vst [vmem:[%s686 + $0x220] sm:$0xff] %v759
                %v761 = vld [vmem:[%s685 + $0x128] sm:$0xff]
                %762 = vst [vmem:[%s686 + $0x228] sm:$0xff] %v761
                %v763 = vld [vmem:[%s685 + $0x130] sm:$0xff]
                %764 = vst [vmem:[%s686 + $0x230] sm:$0xff] %v763
                %v765 = vld [vmem:[%s685 + $0x138] sm:$0xff]
                %766 = vst [vmem:[%s686 + $0x238] sm:$0xff] %v765
                %v767 = vld [vmem:[%s685 + $0x140] sm:$0xff]
                %768 = vst [vmem:[%s686 + $0x280] sm:$0xff] %v767
                %v769 = vld [vmem:[%s685 + $0x148] sm:$0xff]
                %770 = vst [vmem:[%s686 + $0x288] sm:$0xff] %v769
                %v771 = vld [vmem:[%s685 + $0x150] sm:$0xff]
                %772 = vst [vmem:[%s686 + $0x290] sm:$0xff] %v771
                %v773 = vld [vmem:[%s685 + $0x158] sm:$0xff]
                %774 = vst [vmem:[%s686 + $0x298] sm:$0xff] %v773
                %v775 = vld [vmem:[%s685 + $0x160] sm:$0xff]
                %776 = vst [vmem:[%s686 + $0x2a0] sm:$0xff] %v775
                %v777 = vld [vmem:[%s685 + $0x168] sm:$0xff]
                %778 = vst [vmem:[%s686 + $0x2a8] sm:$0xff] %v777
                %v779 = vld [vmem:[%s685 + $0x170] sm:$0xff]
                %780 = vst [vmem:[%s686 + $0x2b0] sm:$0xff] %v779
                %v781 = vld [vmem:[%s685 + $0x178] sm:$0xff]
                %782 = vst [vmem:[%s686 + $0x2b8] sm:$0xff] %v781
                %v783 = vld [vmem:[%s685 + $0x180] sm:$0xff]
                %784 = vst [vmem:[%s686 + $0x300] sm:$0xff] %v783
                %v785 = vld [vmem:[%s685 + $0x188] sm:$0xff]
                %786 = vst [vmem:[%s686 + $0x308] sm:$0xff] %v785
                %v787 = vld [vmem:[%s685 + $0x190] sm:$0xff]
                %788 = vst [vmem:[%s686 + $0x310] sm:$0xff] %v787
                %v789 = vld [vmem:[%s685 + $0x198] sm:$0xff]
                %790 = vst [vmem:[%s686 + $0x318] sm:$0xff] %v789
                %v791 = vld [vmem:[%s685 + $0x1a0] sm:$0xff]
                %792 = vst [vmem:[%s686 + $0x320] sm:$0xff] %v791
                %v793 = vld [vmem:[%s685 + $0x1a8] sm:$0xff]
                %794 = vst [vmem:[%s686 + $0x328] sm:$0xff] %v793
                %v795 = vld [vmem:[%s685 + $0x1b0] sm:$0xff]
                %796 = vst [vmem:[%s686 + $0x330] sm:$0xff] %v795
                %v797 = vld [vmem:[%s685 + $0x1b8] sm:$0xff]
                %798 = vst [vmem:[%s686 + $0x338] sm:$0xff] %v797
                %v799 = vld [vmem:[%s685 + $0x1c0] sm:$0xff]
                %800 = vst [vmem:[%s686 + $0x380] sm:$0xff] %v799
                %v801 = vld [vmem:[%s685 + $0x1c8] sm:$0xff]
                %802 = vst [vmem:[%s686 + $0x388] sm:$0xff] %v801
                %v803 = vld [vmem:[%s685 + $0x1d0] sm:$0xff]
                %804 = vst [vmem:[%s686 + $0x390] sm:$0xff] %v803
                %v805 = vld [vmem:[%s685 + $0x1d8] sm:$0xff]
                %806 = vst [vmem:[%s686 + $0x398] sm:$0xff] %v805
                %v807 = vld [vmem:[%s685 + $0x1e0] sm:$0xff]
                %808 = vst [vmem:[%s686 + $0x3a0] sm:$0xff] %v807
                %v809 = vld [vmem:[%s685 + $0x1e8] sm:$0xff]
                %810 = vst [vmem:[%s686 + $0x3a8] sm:$0xff] %v809
                %v811 = vld [vmem:[%s685 + $0x1f0] sm:$0xff]
                %812 = vst [vmem:[%s686 + $0x3b0] sm:$0xff] %v811
                %v813 = vld [vmem:[%s685 + $0x1f8] sm:$0xff]
                %814 = vst [vmem:[%s686 + $0x3b8] sm:$0xff] %v813
              $region72: #{time_attention_forward.3} parent=66 // loop_footer
                %s684 = sadd.s32 1, %s680
              $region73: #{time_attention_forward.3} parent=66 // loop_footer_branch
                %679 = sbr.rel target = $region69
              $region74: #{time_attention_forward.3} parent=66 // loop_exit
                _
            $region67: #{time_attention_forward.3} parent=62 // pred_fallthru
              _
            // Predicated region
            $region75: #{time_attention_forward.3} parent=62 // pred_check
              _
            $region76: #{time_attention_forward.3} parent=62 // pred_check_branch
              %816 = sbr.rel target = $region78
            $region77: #{time_attention_forward.3} parent=62 // pred_region
              _
            $region78: #{time_attention_forward.3} parent=62 // pred_fallthru
              _
          $region63: #{time_attention_forward.3} parent=58 // pred_fallthru
            _
          %817 = vnop
        $region59: #{time_attention_forward.3} parent=50 // pred_fallthru
          _
      $region51: #{time_attention_forward.3} parent=5 // pred_fallthru
        _
      %p818 = scmp.le.s32.totalorder 2, %s9
      // Predicated region
      $region79: #{time_attention_forward.3} parent=5 // pred_check
        %p819 = pneg %p818
      $region80: #{time_attention_forward.3} parent=5 // pred_check_branch
        %821 = sbr.rel (%p819) target = $region82
      $region81: #{time_attention_forward.3} parent=5 // pred_region
        %s822 = ssub.s32 %s9, 2
        // Predicated region
        $region83: #{time_attention_forward.3} parent=81 // pred_check
          %p823 = pneg %p106
        $region84: #{time_attention_forward.3} parent=81 // pred_check_branch
          %825 = sbr.rel (%p823) target = $region86
        $region85: #{time_attention_forward.3} parent=81 // pred_region
          %s826 = sand.u32 %s91, 1
          %s827 = sand.u32 %s91, 1
          %s828 = smul.addr %s827, 512
          %s829 = scalar_lea.vmem [#allocation3], %s828
        $region86: #{time_attention_forward.3} parent=81 // pred_fallthru
          _
      $region82: #{time_attention_forward.3} parent=5 // pred_fallthru
        _
    $region6: #{time_attention_forward.3} parent=1 // loop_footer
      %s13 = sadd.s32 1, %s9
    $region7: #{time_attention_forward.3} parent=1 // loop_footer_branch
      %8 = sbr.rel target = $region3
    $region8: #{time_attention_forward.3} parent=1 // loop_exit
      _

// kernel: time_attention_forward.2
$region0: #{time_attention_forward.2}
  #allocation0 [shape = 'u32[]', space=smem, size = 0x4, offset = 0x4, fixed_abs, tag = 'smem constant byte address 0x4 - core index']
  #allocation1 [shape = 'u32[72,128]{1,0:T(1,128)}', space=vmem, size = 0x9000, scoped, tag = 'internal scratch']
  %s0 = inlined_call_operand.vmem [shape: f32[36,2048], index: 0, kind: input, shape index: {}]
  %s1 = inlined_call_operand.vmem [shape: f32[64,36], index: 1, kind: input, shape index: {}]
  %s2 = inlined_call_operand.vmem [shape: f32[64,1], index: 2, kind: input, shape index: {}]
  %s3 = inlined_call_operand.vmem [shape: f32[64,192], index: 3, kind: input, shape index: {}]
  %s4 = inlined_call_operand.vmem [shape: f32[64,1], index: 4, kind: input, shape index: {}]
  %s5 = inlined_call_operand.vmem [shape: f32[64,192], index: 5, kind: input, shape index: {}]
  %s6 = inlined_call_operand.vmem [shape: f32[64,1], index: 6, kind: input, shape index: {}]
  %s7 = inlined_call_operand.vmem [shape: f32[64,2048], index: 7, kind: output, shape index: {0}]
  %s8 = inlined_call_operand.vmem [shape: f32[2,64,1], index: 8, kind: output, shape index: {1}]
  %s9 = inlined_call_operand.vmem [shape: f32[2,64,1], index: 9, kind: output, shape index: {2}]
  %10 = xla_tuple %s7, %s8, %s9
  %s11 = sld [smem:[#allocation0]]
  $region119: #{time_attention_forward.2} parent=0
    _
  %s13 = ssub.s32 1, %s11
  %s14 = scalar_select 0, %s13, %s11
  $region1: #{time_attention_forward.2} parent=0
    #allocation2 [shape = 'u8[327680]{0}', space=vmem, size = 0x50000, scoped, tag = 'input window, operand 0']
    #allocation3 [shape = 'u8[524288]{0}', space=vmem, size = 0x80000, scoped, tag = 'output window, operand 0']
    loop: start=0, step=1, limit=4
    $region2: #{time_attention_forward.2} parent=1 // loop_pre_header
      _
    $region3: #{time_attention_forward.2} parent=1 // loop_header
      %s16 = sphi 0, %s20
      %p17 = scmp.ge.s32.totalorder %s16, 4
      %s26 = sphi 0, %s28
      %s29 = sphi 0, %s26
      %s30 = sphi 0, %s29
      %s46 = sphi 0, %s30
      %s50 = sphi 0, %s50
      %s52 = sphi 0, %s50
      %s53 = sphi 0, %s52
      %s67 = sphi 0, %s53
      %s71 = sphi 0, %s71
      %s73 = sphi 0, %s71
      %s74 = sphi 0, %s73
      %s88 = sphi 0, %s74
      %s92 = sphi 0, %s92
      %s94 = sphi 0, %s92
      %s95 = sphi 0, %s94
      %s109 = sphi 0, %s95
      %s113 = sphi 0, %s113
      %s115 = sphi 0, %s113
      %s116 = sphi 0, %s115
      %s130 = sphi 0, %s116
      %s134 = sphi 0, %s134
      %s136 = sphi 0, %s134
      %s137 = sphi 0, %s136
      %s151 = sphi 0, %s137
      %s155 = sphi 0, %s155
      %s157 = sphi 0, %s155
      %s158 = sphi 0, %s157
      %s172 = sphi 0, %s158
      %s178 = sphi 0, %s180
      %s181 = sphi 0, %s178
      %s182 = sphi 0, %s181
      %s198 = sphi 0, %s182
      %s204 = sphi 0, %s206
      %s207 = sphi 0, %s204
      %s208 = sphi 0, %s207
      %s224 = sphi 0, %s208
      %s230 = sphi 0, %s232
      %s233 = sphi 0, %s230
      %s234 = sphi 0, %s233
      %s250 = sphi 0, %s234
    $region4: #{time_attention_forward.2} parent=1 // loop_header_branch
      %19 = sbr.rel (%p17) target = $region8
    $region5: #{time_attention_forward.2} parent=1 // loop_body
      %s21 = ssub.s32 %s16, 1
      %s22 = ssub.s32 %s16, 2
      %s23 = sadd.s32 %s16, 1
      %s24 = ssub.s32 %s16, %s23
      %p25 = scmp.eq.s32.totalorder %s24, 0
      %s27 = sadd.s32 %s26, 1
      %s28 = scalar_select %p25, %s26, %s27
      %p31 = pneg %p25
      %p32 = scmp.eq.s32.totalorder %s16, 1
      %p33 = por %p31, %p32
      %p34 = scmp.ne.s32.totalorder %s26, %s29
      %p35 = scmp.eq.s32.totalorder %s16, 0
      %p36 = por %p34, %p35
      %p37 = scmp.ne.s32.totalorder %s26, %s29
      %p38 = scmp.eq.s32.totalorder %s21, 1
      %p39 = por %p37, %p38
      %p40 = scmp.ne.s32.totalorder %s29, %s30
      %p41 = scmp.eq.s32.totalorder %s21, 0
      %p42 = por %p40, %p41
      %p43 = scmp.ne.s32.totalorder %s29, %s30
      %p44 = scmp.eq.s32.totalorder %s22, 1
      %p45 = por %p43, %p44
      %p47 = scmp.ne.s32.totalorder %s30, %s46
      %p48 = scmp.eq.s32.totalorder %s22, 0
      %p49 = por %p47, %p48
      %s51 = sadd.s32 %s50, 1
      %p54 = scmp.eq.s32.totalorder %s16, 1
      %p55 = scmp.ne.s32.totalorder %s50, %s52
      %p56 = scmp.eq.s32.totalorder %s16, 0
      %p57 = por %p55, %p56
      %p58 = scmp.ne.s32.totalorder %s50, %s52
      %p59 = scmp.eq.s32.totalorder %s21, 1
      %p60 = por %p58, %p59
      %p61 = scmp.ne.s32.totalorder %s52, %s53
      %p62 = scmp.eq.s32.totalorder %s21, 0
      %p63 = por %p61, %p62
      %p64 = scmp.ne.s32.totalorder %s52, %s53
      %p65 = scmp.eq.s32.totalorder %s22, 1
      %p66 = por %p64, %p65
      %p68 = scmp.ne.s32.totalorder %s53, %s67
      %p69 = scmp.eq.s32.totalorder %s22, 0
      %p70 = por %p68, %p69
      %s72 = sadd.s32 %s71, 1
      %p75 = scmp.eq.s32.totalorder %s16, 1
      %p76 = scmp.ne.s32.totalorder %s71, %s73
      %p77 = scmp.eq.s32.totalorder %s16, 0
      %p78 = por %p76, %p77
      %p79 = scmp.ne.s32.totalorder %s71, %s73
      %p80 = scmp.eq.s32.totalorder %s21, 1
      %p81 = por %p79, %p80
      %p82 = scmp.ne.s32.totalorder %s73, %s74
      %p83 = scmp.eq.s32.totalorder %s21, 0
      %p84 = por %p82, %p83
      %p85 = scmp.ne.s32.totalorder %s73, %s74
      %p86 = scmp.eq.s32.totalorder %s22, 1
      %p87 = por %p85, %p86
      %p89 = scmp.ne.s32.totalorder %s74, %s88
      %p90 = scmp.eq.s32.totalorder %s22, 0
      %p91 = por %p89, %p90
      %s93 = sadd.s32 %s92, 1
      %p96 = scmp.eq.s32.totalorder %s16, 1
      %p97 = scmp.ne.s32.totalorder %s92, %s94
      %p98 = scmp.eq.s32.totalorder %s16, 0
      %p99 = por %p97, %p98
      %p100 = scmp.ne.s32.totalorder %s92, %s94
      %p101 = scmp.eq.s32.totalorder %s21, 1
      %p102 = por %p100, %p101
      %p103 = scmp.ne.s32.totalorder %s94, %s95
      %p104 = scmp.eq.s32.totalorder %s21, 0
      %p105 = por %p103, %p104
      %p106 = scmp.ne.s32.totalorder %s94, %s95
      %p107 = scmp.eq.s32.totalorder %s22, 1
      %p108 = por %p106, %p107
      %p110 = scmp.ne.s32.totalorder %s95, %s109
      %p111 = scmp.eq.s32.totalorder %s22, 0
      %p112 = por %p110, %p111
      %s114 = sadd.s32 %s113, 1
      %p117 = scmp.eq.s32.totalorder %s16, 1
      %p118 = scmp.ne.s32.totalorder %s113, %s115
      %p119 = scmp.eq.s32.totalorder %s16, 0
      %p120 = por %p118, %p119
      %p121 = scmp.ne.s32.totalorder %s113, %s115
      %p122 = scmp.eq.s32.totalorder %s21, 1
      %p123 = por %p121, %p122
      %p124 = scmp.ne.s32.totalorder %s115, %s116
      %p125 = scmp.eq.s32.totalorder %s21, 0
      %p126 = por %p124, %p125
      %p127 = scmp.ne.s32.totalorder %s115, %s116
      %p128 = scmp.eq.s32.totalorder %s22, 1
      %p129 = por %p127, %p128
      %p131 = scmp.ne.s32.totalorder %s116, %s130
      %p132 = scmp.eq.s32.totalorder %s22, 0
      %p133 = por %p131, %p132
      %s135 = sadd.s32 %s134, 1
      %p138 = scmp.eq.s32.totalorder %s16, 1
      %p139 = scmp.ne.s32.totalorder %s134, %s136
      %p140 = scmp.eq.s32.totalorder %s16, 0
      %p141 = por %p139, %p140
      %p142 = scmp.ne.s32.totalorder %s134, %s136
      %p143 = scmp.eq.s32.totalorder %s21, 1
      %p144 = por %p142, %p143
      %p145 = scmp.ne.s32.totalorder %s136, %s137
      %p146 = scmp.eq.s32.totalorder %s21, 0
      %p147 = por %p145, %p146
      %p148 = scmp.ne.s32.totalorder %s136, %s137
      %p149 = scmp.eq.s32.totalorder %s22, 1
      %p150 = por %p148, %p149
      %p152 = scmp.ne.s32.totalorder %s137, %s151
      %p153 = scmp.eq.s32.totalorder %s22, 0
      %p154 = por %p152, %p153
      %s156 = sadd.s32 %s155, 1
      %p159 = scmp.eq.s32.totalorder %s16, 1
      %p160 = scmp.ne.s32.totalorder %s155, %s157
      %p161 = scmp.eq.s32.totalorder %s16, 0
      %p162 = por %p160, %p161
      %p163 = scmp.ne.s32.totalorder %s155, %s157
      %p164 = scmp.eq.s32.totalorder %s21, 1
      %p165 = por %p163, %p164
      %p166 = scmp.ne.s32.totalorder %s157, %s158
      %p167 = scmp.eq.s32.totalorder %s21, 0
      %p168 = por %p166, %p167
      %p169 = scmp.ne.s32.totalorder %s157, %s158
      %p170 = scmp.eq.s32.totalorder %s22, 1
      %p171 = por %p169, %p170
      %p173 = scmp.ne.s32.totalorder %s158, %s172
      %p174 = scmp.eq.s32.totalorder %s22, 0
      %p175 = por %p173, %p174
      %s176 = ssub.s32 %s16, %s23
      %p177 = scmp.eq.s32.totalorder %s176, 0
      %s179 = sadd.s32 %s178, 1
      %s180 = scalar_select %p177, %s178, %s179
      %p183 = pneg %p177
      %p184 = scmp.eq.s32.totalorder %s16, 1
      %p185 = por %p183, %p184
      %p186 = scmp.ne.s32.totalorder %s178, %s181
      %p187 = scmp.eq.s32.totalorder %s16, 0
      %p188 = por %p186, %p187
      %p189 = scmp.ne.s32.totalorder %s178, %s181
      %p190 = scmp.eq.s32.totalorder %s21, 1
      %p191 = por %p189, %p190
      %p192 = scmp.ne.s32.totalorder %s181, %s182
      %p193 = scmp.eq.s32.totalorder %s21, 0
      %p194 = por %p192, %p193
      %p195 = scmp.ne.s32.totalorder %s181, %s182
      %p196 = scmp.eq.s32.totalorder %s22, 1
      %p197 = por %p195, %p196
      %p199 = scmp.ne.s32.totalorder %s182, %s198
      %p200 = scmp.eq.s32.totalorder %s22, 0
      %p201 = por %p199, %p200
      %s202 = ssub.s32 %s16, %s23
      %p203 = scmp.eq.s32.totalorder %s202, 0
      %s205 = sadd.s32 %s204, 1
      %s206 = scalar_select %p203, %s204, %s205
      %p209 = pneg %p203
      %p210 = scmp.eq.s32.totalorder %s16, 1
      %p211 = por %p209, %p210
      %p212 = scmp.ne.s32.totalorder %s204, %s207
      %p213 = scmp.eq.s32.totalorder %s16, 0
      %p214 = por %p212, %p213
      %p215 = scmp.ne.s32.totalorder %s204, %s207
      %p216 = scmp.eq.s32.totalorder %s21, 1
      %p217 = por %p215, %p216
      %p218 = scmp.ne.s32.totalorder %s207, %s208
      %p219 = scmp.eq.s32.totalorder %s21, 0
      %p220 = por %p218, %p219
      %p221 = scmp.ne.s32.totalorder %s207, %s208
      %p222 = scmp.eq.s32.totalorder %s22, 1
      %p223 = por %p221, %p222
      %p225 = scmp.ne.s32.totalorder %s208, %s224
      %p226 = scmp.eq.s32.totalorder %s22, 0
      %p227 = por %p225, %p226
      %s228 = ssub.s32 %s16, %s23
      %p229 = scmp.eq.s32.totalorder %s228, 0
      %s231 = sadd.s32 %s230, 1
      %s232 = scalar_select %p229, %s230, %s231
      %p235 = pneg %p229
      %p236 = scmp.eq.s32.totalorder %s16, 1
      %p237 = por %p235, %p236
      %p238 = scmp.ne.s32.totalorder %s230, %s233
      %p239 = scmp.eq.s32.totalorder %s16, 0
      %p240 = por %p238, %p239
      %p241 = scmp.ne.s32.totalorder %s230, %s233
      %p242 = scmp.eq.s32.totalorder %s21, 1
      %p243 = por %p241, %p242
      %p244 = scmp.ne.s32.totalorder %s233, %s234
      %p245 = scmp.eq.s32.totalorder %s21, 0
      %p246 = por %p244, %p245
      %p247 = scmp.ne.s32.totalorder %s233, %s234
      %p248 = scmp.eq.s32.totalorder %s22, 1
      %p249 = por %p247, %p248
      %p251 = scmp.ne.s32.totalorder %s234, %s250
      %p252 = scmp.eq.s32.totalorder %s22, 0
      %p253 = por %p251, %p252
      %p254 = scmp.le.s32.totalorder 1, %s16
      %p255 = scmp.lt.s32.totalorder %s16, 3
      %p256 = pnand %p254, %p255
      %p257 = pneg %p256
      // Predicated region
      $region9: #{time_attention_forward.2} parent=5 // pred_check
        _
      $region10: #{time_attention_forward.2} parent=5 // pred_check_branch
        %259 = sbr.rel (%p256) target = $region12
      $region11: #{time_attention_forward.2} parent=5 // pred_region
        %s260 = ssub.s32 %s16, 1
        // Predicated region
        $region13: #{time_attention_forward.2} parent=11 // pred_check
          %p261 = pneg %p63
        $region14: #{time_attention_forward.2} parent=11 // pred_check_branch
          %263 = sbr.rel (%p261) target = $region16
        $region15: #{time_attention_forward.2} parent=11 // pred_region
          _
        $region16: #{time_attention_forward.2} parent=11 // pred_fallthru
          _
        // Predicated region
        $region17: #{time_attention_forward.2} parent=11 // pred_check
          %p264 = pneg %p84
        $region18: #{time_attention_forward.2} parent=11 // pred_check_branch
          %266 = sbr.rel (%p264) target = $region20
        $region19: #{time_attention_forward.2} parent=11 // pred_region
          _
        $region20: #{time_attention_forward.2} parent=11 // pred_fallthru
          _
        // Predicated region
        $region21: #{time_attention_forward.2} parent=11 // pred_check
          %p267 = pneg %p105
        $region22: #{time_attention_forward.2} parent=11 // pred_check_branch
          %269 = sbr.rel (%p267) target = $region24
        $region23: #{time_attention_forward.2} parent=11 // pred_region
          _
        $region24: #{time_attention_forward.2} parent=11 // pred_fallthru
          _
        // Predicated region
        $region25: #{time_attention_forward.2} parent=11 // pred_check
          %p270 = pneg %p126
        $region26: #{time_attention_forward.2} parent=11 // pred_check_branch
          %272 = sbr.rel (%p270) target = $region28
        $region27: #{time_attention_forward.2} parent=11 // pred_region
          _
        $region28: #{time_attention_forward.2} parent=11 // pred_fallthru
          _
        // Predicated region
        $region29: #{time_attention_forward.2} parent=11 // pred_check
          %p273 = pneg %p147
        $region30: #{time_attention_forward.2} parent=11 // pred_check_branch
          %275 = sbr.rel (%p273) target = $region32
        $region31: #{time_attention_forward.2} parent=11 // pred_region
          _
        $region32: #{time_attention_forward.2} parent=11 // pred_fallthru
          _
        // Predicated region
        $region33: #{time_attention_forward.2} parent=11 // pred_check
          %p276 = pneg %p168
        $region34: #{time_attention_forward.2} parent=11 // pred_check_branch
          %278 = sbr.rel (%p276) target = $region36
        $region35: #{time_attention_forward.2} parent=11 // pred_region
          _
        $region36: #{time_attention_forward.2} parent=11 // pred_fallthru
          _
      $region12: #{time_attention_forward.2} parent=5 // pred_fallthru
        _
      %p279 = scmp.lt.s32.totalorder %s16, 2
      // Predicated region
      $region37: #{time_attention_forward.2} parent=5 // pred_check
        %p280 = pneg %p279
      $region38: #{time_attention_forward.2} parent=5 // pred_check_branch
        %282 = sbr.rel (%p280) target = $region40
      $region39: #{time_attention_forward.2} parent=5 // pred_region
        // Predicated region
        $region41: #{time_attention_forward.2} parent=39 // pred_check
          %p283 = pneg %p36
        $region42: #{time_attention_forward.2} parent=39 // pred_check_branch
          %285 = sbr.rel (%p283) target = $region44
        $region43: #{time_attention_forward.2} parent=39 // pred_region
          %s286 = sand.u32 %s26, 1
          %s287 = sand.u32 %s26, 1
          %s288 = smul.addr %s287, 320
          %s289 = scalar_lea.vmem [#allocation2], %s288
          %s290 = smul.u32 8, %s16
          %s291 = smul.addr %s290, 8
          %s292 = scalar_lea.vmem %s0, %s291
          // Predicated region
          $region45: #{time_attention_forward.2} parent=43 // pred_check
            _
          $region46: #{time_attention_forward.2} parent=43 // pred_check_branch
            %294 = sbr.rel (0) target = $region48
          $region47: #{time_attention_forward.2} parent=43 // pred_region
            // Predicated region
            $region49: #{time_attention_forward.2} parent=47 // pred_check
              _
            $region50: #{time_attention_forward.2} parent=47 // pred_check_branch
              %296 = sbr.rel (0) target = $region52
            $region51: #{time_attention_forward.2} parent=47 // pred_region
              loop: start=0, step=1, limit=1
              $region53: #{time_attention_forward.2} parent=51 // loop_pre_header
                _
              $region54: #{time_attention_forward.2} parent=51 // loop_header
                %s298 = sphi 0, %s302
                %p299 = scmp.ge.s32.totalorder %s298, 1
                %s303 = sphi %s292, %s292
                %s304 = sphi %s289, %s289
              $region55: #{time_attention_forward.2} parent=51 // loop_header_branch
                %301 = sbr.rel (%p299) target = $region59
              $region56: #{time_attention_forward.2} parent=51 // loop_body
                %v305 = vld [vmem:[%s303] sm:$0xff]
                %306 = vst [vmem:[%s304] sm:$0xff] %v305
                %v307 = vld [vmem:[%s303 + $0x8] sm:$0xff]
                %308 = vst [vmem:[%s304 + $0x8] sm:$0xff] %v307
                %v309 = vld [vmem:[%s303 + $0x10] sm:$0xff]
                %310 = vst [vmem:[%s304 + $0x10] sm:$0xff] %v309
                %v311 = vld [vmem:[%s303 + $0x18] sm:$0xff]
                %312 = vst [vmem:[%s304 + $0x18] sm:$0xff] %v311
                %v313 = vld [vmem:[%s303 + $0x20] sm:$0xff]
                %314 = vst [vmem:[%s304 + $0x20] sm:$0xff] %v313
                %v315 = vld [vmem:[%s303 + $0x28] sm:$0xff]
                %316 = vst [vmem:[%s304 + $0x28] sm:$0xff] %v315
                %v317 = vld [vmem:[%s303 + $0x30] sm:$0xff]
                %318 = vst [vmem:[%s304 + $0x30] sm:$0xff] %v317
                %v319 = vld [vmem:[%s303 + $0x38] sm:$0xff]
                %320 = vst [vmem:[%s304 + $0x38] sm:$0xff] %v319
                %v321 = vld [vmem:[%s303 + $0x80] sm:$0xff]
                %322 = vst [vmem:[%s304 + $0x40] sm:$0xff] %v321
                %v323 = vld [vmem:[%s303 + $0x88] sm:$0xff]
                %324 = vst [vmem:[%s304 + $0x48] sm:$0xff] %v323
                %v325 = vld [vmem:[%s303 + $0x90] sm:$0xff]
                %326 = vst [vmem:[%s304 + $0x50] sm:$0xff] %v325
                %v327 = vld [vmem:[%s303 + $0x98] sm:$0xff]
                %328 = vst [vmem:[%s304 + $0x58] sm:$0xff] %v327
                %v329 = vld [vmem:[%s303 + $0xa0] sm:$0xff]
                %330 = vst [vmem:[%s304 + $0x60] sm:$0xff] %v329
                %v331 = vld [vmem:[%s303 + $0xa8] sm:$0xff]
                %332 = vst [vmem:[%s304 + $0x68] sm:$0xff] %v331
                %v333 = vld [vmem:[%s303 + $0xb0] sm:$0xff]
                %334 = vst [vmem:[%s304 + $0x70] sm:$0xff] %v333
                %v335 = vld [vmem:[%s303 + $0xb8] sm:$0xff]
                %336 = vst [vmem:[%s304 + $0x78] sm:$0xff] %v335
                %v337 = vld [vmem:[%s303 + $0x100] sm:$0xff]
                %338 = vst [vmem:[%s304 + $0x80] sm:$0xff] %v337
                %v339 = vld [vmem:[%s303 + $0x108] sm:$0xff]
                %340 = vst [vmem:[%s304 + $0x88] sm:$0xff] %v339
                %v341 = vld [vmem:[%s303 + $0x110] sm:$0xff]
                %342 = vst [vmem:[%s304 + $0x90] sm:$0xff] %v341
                %v343 = vld [vmem:[%s303 + $0x118] sm:$0xff]
                %344 = vst [vmem:[%s304 + $0x98] sm:$0xff] %v343
                %v345 = vld [vmem:[%s303 + $0x120] sm:$0xff]
                %346 = vst [vmem:[%s304 + $0xa0] sm:$0xff] %v345
                %v347 = vld [vmem:[%s303 + $0x128] sm:$0xff]
                %348 = vst [vmem:[%s304 + $0xa8] sm:$0xff] %v347
                %v349 = vld [vmem:[%s303 + $0x130] sm:$0xff]
                %350 = vst [vmem:[%s304 + $0xb0] sm:$0xff] %v349
                %v351 = vld [vmem:[%s303 + $0x138] sm:$0xff]
                %352 = vst [vmem:[%s304 + $0xb8] sm:$0xff] %v351
                %v353 = vld [vmem:[%s303 + $0x180] sm:$0xff]
                %354 = vst [vmem:[%s304 + $0xc0] sm:$0xff] %v353
                %v355 = vld [vmem:[%s303 + $0x188] sm:$0xff]
                %356 = vst [vmem:[%s304 + $0xc8] sm:$0xff] %v355
                %v357 = vld [vmem:[%s303 + $0x190] sm:$0xff]
                %358 = vst [vmem:[%s304 + $0xd0] sm:$0xff] %v357
                %v359 = vld [vmem:[%s303 + $0x198] sm:$0xff]
                %360 = vst [vmem:[%s304 + $0xd8] sm:$0xff] %v359
                %v361 = vld [vmem:[%s303 + $0x1a0] sm:$0xff]
                %362 = vst [vmem:[%s304 + $0xe0] sm:$0xff] %v361
                %v363 = vld [vmem:[%s303 + $0x1a8] sm:$0xff]
                %364 = vst [vmem:[%s304 + $0xe8] sm:$0xff] %v363
                %v365 = vld [vmem:[%s303 + $0x1b0] sm:$0xff]
                %366 = vst [vmem:[%s304 + $0xf0] sm:$0xff] %v365
                %v367 = vld [vmem:[%s303 + $0x1b8] sm:$0xff]
                %368 = vst [vmem:[%s304 + $0xf8] sm:$0xff] %v367
                %v369 = vld [vmem:[%s303 + $0x200] sm:$0xff]
                %370 = vst [vmem:[%s304 + $0x100] sm:$0xff] %v369
                %v371 = vld [vmem:[%s303 + $0x208] sm:$0xff]
                %372 = vst [vmem:[%s304 + $0x108] sm:$0xff] %v371
                %v373 = vld [vmem:[%s303 + $0x210] sm:$0xff]
                %374 = vst [vmem:[%s304 + $0x110] sm:$0xff] %v373
                %v375 = vld [vmem:[%s303 + $0x218] sm:$0xff]
                %376 = vst [vmem:[%s304 + $0x118] sm:$0xff] %v375
                %v377 = vld [vmem:[%s303 + $0x220] sm:$0xff]
                %378 = vst [vmem:[%s304 + $0x120] sm:$0xff] %v377
                %v379 = vld [vmem:[%s303 + $0x228] sm:$0xff]
                %380 = vst [vmem:[%s304 + $0x128] sm:$0xff] %v379
                %v381 = vld [vmem:[%s303 + $0x230] sm:$0xff]
                %382 = vst [vmem:[%s304 + $0x130] sm:$0xff] %v381
                %v383 = vld [vmem:[%s303 + $0x238] sm:$0xff]
                %384 = vst [vmem:[%s304 + $0x138] sm:$0xff] %v383
              $region57: #{time_attention_forward.2} parent=51 // loop_footer
                %s302 = sadd.s32 1, %s298
              $region58: #{time_attention_forward.2} parent=51 // loop_footer_branch
                %297 = sbr.rel target = $region54
              $region59: #{time_attention_forward.2} parent=51 // loop_exit
                _
            $region52: #{time_attention_forward.2} parent=47 // pred_fallthru
              _
            // Predicated region
            $region60: #{time_attention_forward.2} parent=47 // pred_check
              _
            $region61: #{time_attention_forward.2} parent=47 // pred_check_branch
              %386 = sbr.rel target = $region63
            $region62: #{time_attention_forward.2} parent=47 // pred_region
              _
            $region63: #{time_attention_forward.2} parent=47 // pred_fallthru
              _
          $region48: #{time_attention_forward.2} parent=43 // pred_fallthru
            _
          %387 = vnop
        $region44: #{time_attention_forward.2} parent=39 // pred_fallthru
          _
      $region40: #{time_attention_forward.2} parent=5 // pred_fallthru
        _
      %p388 = scmp.le.s32.totalorder 1, %s16
      %p389 = scmp.lt.s32.totalorder %s16, 3
      %p390 = pnand %p388, %p389
      %p391 = pneg %p390
      // Predicated region
      $region64: #{time_attention_forward.2} parent=5 // pred_check
        _
      $region65: #{time_attention_forward.2} parent=5 // pred_check_branch
        %393 = sbr.rel (%p390) target = $region67
      $region66: #{time_attention_forward.2} parent=5 // pred_region
        %s394 = ssub.s32 %s16, 1
        %s395 = sand.u32 %s29, 1
        %s396 = sand.u32 %s29, 1
        %s397 = smul.addr %s396, 320
        %s398 = scalar_lea.vmem [#allocation2], %s397
        // Predicated region
        $region68: #{time_attention_forward.2} parent=66 // pred_check
          %p399 = pneg %p42
        $region69: #{time_attention_forward.2} parent=66 // pred_check_branch
          %401 = sbr.rel (%p399) target = $region71
        $region70: #{time_attention_forward.2} parent=66 // pred_region
          _
        $region71: #{time_attention_forward.2} parent=66 // pred_fallthru
          _
        %s402 = sand.u32 %s29, 1
        %s403 = sand.u32 %s29, 1
        %s404 = smul.addr %s403, 320
        %s405 = scalar_lea.vmem [#allocation2], %s404
        %p406 = pneg %p42
        %p407 = pneg %p39
        %p408 = pneg %p63
        %p409 = pneg %p60
        %p410 = pneg %p84
        %p411 = pneg %p81
        %p412 = pneg %p105
        %p413 = pneg %p102
        %p414 = pneg %p126
        %p415 = pneg %p123
        %p416 = pneg %p147
        %p417 = pneg %p144
        %p418 = pneg %p168
        %p419 = pneg %p165
        %p420 = pneg %p194
        %p421 = pneg %p191
        %s422 = sand.u32 %s181, 1
        %s423 = sand.u32 %s181, 1
        %s424 = smul.addr %s423, 512
        %s425 = scalar_lea.vmem [#allocation3], %s424
        %p426 = pneg %p220
        %p427 = pneg %p217
        %p428 = scmp.lt.s32.totalorder %s21, 1
        %s429 = scalar_select %p428, %s21, 1
        %s430 = smul.addr %s429, 8
        %s431 = smul.addr %s430, 8
        %s432 = scalar_lea.vmem %s8, %s431
        %p433 = pneg %p246
        %p434 = pneg %p243
        %p435 = scmp.lt.s32.totalorder %s21, 1
        %s436 = scalar_select %p435, %s21, 1
        %s437 = smul.addr %s436, 8
        %s438 = smul.addr %s437, 8
        %s439 = scalar_lea.vmem %s9, %s438
        %s440 = smul.u32 8, %s21
        %s441 = smul.u32 8, %s21
        %p442 = scmp.lt.s32.totalorder %s21, 1
        %s443 = scalar_select %p442, %s21, 1
        %s444 = smul.addr %s443, 8
        %s445 = smul.addr %s444, 8
        %s446 = scalar_lea.vmem %s8, %s445
        %p447 = scmp.lt.s32.totalorder %s21, 1
        %s448 = scalar_select %p447, %s21, 1
        %s449 = smul.addr %s448, 8
        %s450 = smul.addr %s449, 8
        %s451 = scalar_lea.vmem %s9, %s450
        %v452 = vlaneseq
        %v453 = vand.u32 %v452, 127
        %v454 = vadd.s32 %v453, 128
        %v455 = vadd.s32 %v453, 256
        %v456 = vadd.s32 %v453, 384
        %v457 = vadd.s32 %v453, 512
        %v458 = vadd.s32 %v453, 640
        %v459 = vadd.s32 %v453, 768
        %v460 = vadd.s32 %v453, 896
        %vm461 = vcmp.lt.s32.totalorder %v453, 0
        %v462 = vsub.s32 0, %v453
        %v463 = vsel %vm461, %v462, %v453
        %v464 = vshrl.u32 %v463, 6
        %v465 = vand.u32 %v463, 63
        %v466 = vsub.s32 0, %v465
        %v467 = vsel %vm461, %v466, %v465
        %vm468 = vcmp.lt.s32.totalorder %v454, 0
        %v469 = vsub.s32 0, %v454
        %v470 = vsel %vm468, %v469, %v454
        %v471 = vshrl.u32 %v470, 6
        %v472 = vand.u32 %v470, 63
        %v473 = vsub.s32 0, %v472
        %v474 = vsel %vm468, %v473, %v472
        %vm475 = vcmp.lt.s32.totalorder %v455, 0
        %v476 = vsub.s32 0, %v455
        %v477 = vsel %vm475, %v476, %v455
        %v478 = vshrl.u32 %v477, 6
        %v479 = vand.u32 %v477, 63
        %v480 = vsub.s32 0, %v479
        %v481 = vsel %vm475, %v480, %v479
        %vm482 = vcmp.lt.s32.totalorder %v456, 0
        %v483 = vsub.s32 0, %v456
        %v484 = vsel %vm482, %v483, %v456
        %v485 = vshrl.u32 %v484, 6
        %v486 = vand.u32 %v484, 63
        %v487 = vsub.s32 0, %v486
        %v488 = vsel %vm482, %v487, %v486
        %vm489 = vcmp.lt.s32.totalorder %v457, 0
        %v490 = vsub.s32 0, %v457
        %v491 = vsel %vm489, %v490, %v457
        %v492 = vshrl.u32 %v491, 6
        %v493 = vand.u32 %v491, 63
        %v494 = vsub.s32 0, %v493
        %v495 = vsel %vm489, %v494, %v493
        %vm496 = vcmp.lt.s32.totalorder %v458, 0
        %v497 = vsub.s32 0, %v458
        %v498 = vsel %vm496, %v497, %v458
        %v499 = vshrl.u32 %v498, 6
        %v500 = vand.u32 %v498, 63
        %v501 = vsub.s32 0, %v500
        %v502 = vsel %vm496, %v501, %v500
        %vm503 = vcmp.lt.s32.totalorder %v459, 0
        %v504 = vsub.s32 0, %v459
        %v505 = vsel %vm503, %v504, %v459
        %v506 = vshrl.u32 %v505, 6
        %v507 = vand.u32 %v505, 63
        %v508 = vsub.s32 0, %v507
        %v509 = vsel %vm503, %v508, %v507
        %vm510 = vcmp.lt.s32.totalorder %v460, 0
        %v511 = vsub.s32 0, %v460
        %v512 = vsel %vm510, %v511, %v460
        %v513 = vshrl.u32 %v512, 6
        %v514 = vand.u32 %v512, 63
        %v515 = vsub.s32 0, %v514
        %v516 = vsel %vm510, %v515, %v514
        %vm517 = vcmp.ne.s32.totalorder %v467, 0
        %vm518 = vcmp.ne.s32.totalorder %v474, 0
        %vm519 = vcmp.ne.s32.totalorder %v481, 0
        %vm520 = vcmp.ne.s32.totalorder %v488, 0
        %vm521 = vcmp.ne.s32.totalorder %v495, 0
        %vm522 = vcmp.ne.s32.totalorder %v502, 0
        %vm523 = vcmp.ne.s32.totalorder %v509, 0
        %vm524 = vcmp.ne.s32.totalorder %v516, 0
        %vm525 = vcmp.lt.s32.totalorder %v467, 0
        %vm526 = vcmp.lt.s32.totalorder %v474, 0
        %vm527 = vcmp.lt.s32.totalorder %v481, 0
        %vm528 = vcmp.lt.s32.totalorder %v488, 0
        %vm529 = vcmp.lt.s32.totalorder %v495, 0
        %vm530 = vcmp.lt.s32.totalorder %v502, 0
        %vm531 = vcmp.lt.s32.totalorder %v509, 0
        %vm532 = vcmp.lt.s32.totalorder %v516, 0
        %vm533 = vmand %vm525, %vm517
        %vm534 = vmand %vm526, %vm518
        %vm535 = vmand %vm527, %vm519
        %vm536 = vmand %vm528, %vm520
        %vm537 = vmand %vm529, %vm521
        %vm538 = vmand %vm530, %vm522
        %vm539 = vmand %vm531, %vm523
        %vm540 = vmand %vm532, %vm524
        %v541 = vadd.s32 %v467, 64
        %v542 = vadd.s32 %v474, 64
        %v543 = vadd.s32 %v481, 64
        %v544 = vadd.s32 %v488, 64
        %v545 = vadd.s32 %v495, 64
        %v546 = vadd.s32 %v502, 64
        %v547 = vadd.s32 %v509, 64
        %v548 = vadd.s32 %v516, 64
        %v549 = vsel %vm533, %v541, %v467
        %v550 = vsel %vm534, %v542, %v474
        %v551 = vsel %vm535, %v543, %v481
        %v552 = vsel %vm536, %v544, %v488
        %v553 = vsel %vm537, %v545, %v495
        %v554 = vsel %vm538, %v546, %v502
        %v555 = vsel %vm539, %v547, %v509
        %v556 = vsel %vm540, %v548, %v516
        %v557 = vld [vmem:[%s1] sm:$0xff]
        %v558 = vld [vmem:[%s1 + $0x8] sm:$0xff]
        %v559 = vld [vmem:[%s1 + $0x10] sm:$0xff]
        %v560 = vld [vmem:[%s1 + $0x18] sm:$0xff]
        %v561 = vld [vmem:[%s1 + $0x20] sm:$0xff]
        %v562 = vld [vmem:[%s1 + $0x28] sm:$0xff]
        %v563 = vld [vmem:[%s1 + $0x30] sm:$0xff]
        %v564 = vld [vmem:[%s1 + $0x38] sm:$0xff]
        %v565 = vld [vmem:[%s398] sm:$0xff]
        %v566 = vld [vmem:[%s398 + $0x8] sm:$0xff]
        %v567 = vld [vmem:[%s398 + $0x10] sm:$0xff]
        %v568 = vld [vmem:[%s398 + $0x18] sm:$0xff]
        %v569 = vld [vmem:[%s398 + $0x20] sm:$0xff]
        %v570 = vld [vmem:[%s398 + $0x28] sm:$0xff]
        %v571 = vld [vmem:[%s398 + $0x30] sm:$0xff]
        %v572 = vld [vmem:[%s398 + $0x38] sm:$0xff]
        %v573 = vld [vmem:[%s398 + $0x40] sm:$0xff]
        %v574 = vld [vmem:[%s398 + $0x48] sm:$0xff]
        %v575 = vld [vmem:[%s398 + $0x50] sm:$0xff]
        %v576 = vld [vmem:[%s398 + $0x58] sm:$0xff]
        %v577 = vld [vmem:[%s398 + $0x60] sm:$0xff]
        %v578 = vld [vmem:[%s398 + $0x68] sm:$0xff]
        %v579 = vld [vmem:[%s398 + $0x70] sm:$0xff]
        %v580 = vld [vmem:[%s398 + $0x78] sm:$0xff]
        %v581 = vld [vmem:[%s398 + $0x80] sm:$0xff]
        %v582 = vld [vmem:[%s398 + $0x88] sm:$0xff]
        %v583 = vld [vmem:[%s398 + $0x90] sm:$0xff]
        %v584 = vld [vmem:[%s398 + $0x98] sm:$0xff]
        %v585 = vld [vmem:[%s398 + $0xa0] sm:$0xff]
        %v586 = vld [vmem:[%s398 + $0xa8] sm:$0xff]
        %v587 = vld [vmem:[%s398 + $0xb0] sm:$0xff]
        %v588 = vld [vmem:[%s398 + $0xb8] sm:$0xff]
        %v589 = vld [vmem:[%s398 + $0xc0] sm:$0xff]
        %v590 = vld [vmem:[%s398 + $0xc8] sm:$0xff]
        %v591 = vld [vmem:[%s398 + $0xd0] sm:$0xff]
        %v592 = vld [vmem:[%s398 + $0xd8] sm:$0xff]
        %v593 = vld [vmem:[%s398 + $0xe0] sm:$0xff]
        %v594 = vld [vmem:[%s398 + $0xe8] sm:$0xff]
        %v595 = vld [vmem:[%s398 + $0xf0] sm:$0xff]
        %v596 = vld [vmem:[%s398 + $0xf8] sm:$0xff]
        %v597 = vld [vmem:[%s398 + $0x100] sm:$0xf]
        %v598 = vld [vmem:[%s398 + $0x108] sm:$0xf]
        %v599 = vld [vmem:[%s398 + $0x110] sm:$0xf]
        %v600 = vld [vmem:[%s398 + $0x118] sm:$0xf]
        %v601 = vld [vmem:[%s398 + $0x120] sm:$0xf]
        %v602 = vld [vmem:[%s398 + $0x128] sm:$0xf]
        %v603 = vld [vmem:[%s398 + $0x130] sm:$0xf]
        %v604 = vld [vmem:[%s398 + $0x138] sm:$0xf]
        %v605 = vld [vmem:[%s2] sm:$0xff]
        %v606 = vld [vmem:[%s2 + $0x8] sm:$0xff]
        %v607 = vld [vmem:[%s2 + $0x10] sm:$0xff]
        %v608 = vld [vmem:[%s2 + $0x18] sm:$0xff]
        %v609 = vld [vmem:[%s2 + $0x20] sm:$0xff]
        %v610 = vld [vmem:[%s2 + $0x28] sm:$0xff]
        %v611 = vld [vmem:[%s2 + $0x30] sm:$0xff]
        %v612 = vld [vmem:[%s2 + $0x38] sm:$0xff]
        %614 = vset.pattern.permute.xlu0 0
        %615 = vperm.xlu0 %614, %v605
        %v616 = vpop.permute.xlu0 %615
        %619 = vset.pattern.permute.xlu0 0
        %620 = vperm.xlu0 %619, %v606
        %v621 = vpop.permute.xlu0 %620
        %624 = vset.pattern.permute.xlu0 0
        %625 = vperm.xlu0 %624, %v607
        %v626 = vpop.permute.xlu0 %625
        %629 = vset.pattern.permute.xlu0 0
        %630 = vperm.xlu0 %629, %v608
        %v631 = vpop.permute.xlu0 %630
        %634 = vset.pattern.permute.xlu0 0
        %635 = vperm.xlu0 %634, %v609
        %v636 = vpop.permute.xlu0 %635
        %639 = vset.pattern.permute.xlu0 0
        %640 = vperm.xlu0 %639, %v610
        %v641 = vpop.permute.xlu0 %640
        %644 = vset.pattern.permute.xlu0 0
        %645 = vperm.xlu0 %644, %v611
        %v646 = vpop.permute.xlu0 %645
        %649 = vset.pattern.permute.xlu0 0
        %650 = vperm.xlu0 %649, %v612
        %v651 = vpop.permute.xlu0 %650
        %vm653 = vcmask 293888
        %v655 = vsel %vm653, %v557, 0
        %v658 = vsel %vm653, %v558, 0
        %v661 = vsel %vm653, %v559, 0
        %v664 = vsel %vm653, %v560, 0
        %v667 = vsel %vm653, %v561, 0
        %v670 = vsel %vm653, %v562, 0
        %v673 = vsel %vm653, %v563, 0
        %v676 = vsel %vm653, %v564, 0
        %vm678 = vcmask 1043456
        %v680 = vsel %vm678, %v597, 0
        %v683 = vsel %vm678, %v598, 0
        %v686 = vsel %vm678, %v599, 0
        %v689 = vsel %vm678, %v600, 0
        %v692 = vsel %vm678, %v601, 0
        %v695 = vsel %vm678, %v602, 0
        %v698 = vsel %vm678, %v603, 0
        %v701 = vsel %vm678, %v604, 0
        %703 = vmatpush.msra.mxu0 0.0
        %704 = vmatpush.msra.mxu0 0.0
        %705 = vmatpush.msra.mxu0 0.0
        %706 = vmatpush.msra.mxu0 0.0
        %707 = vmatpush.msra.mxu0 0.0
        %708 = vmatpush.msra.mxu0 0.0
        %709 = vmatpush.msra.mxu0 0.0
        %710 = vmatpush.msra.mxu0 0.0
        %711 = vmatpush.msra.mxu0 0.0
        %712 = vmatpush.msra.mxu0 0.0
        %713 = vmatpush.msra.mxu0 0.0
        %714 = vmatpush.msra.mxu0 %v680
        %715 = vmatpush.msra.mxu0 %v589
        %716 = vmatpush.msra.mxu0 %v581
        %717 = vmatpush.msra.mxu0 %v573
        %718 = vmatpush.msra.mxu0 %v565
        %719 = vmatmul.f32.gmra.mxu0 %v655
        %v720 = vpop.f32.mrf.mxu0
        %v721 = vadd.f32 %v616, %v720
        %722 = vmatmul.f32.gmra.mxu0 %v658
        %v723 = vpop.f32.mrf.mxu0
        %v724 = vadd.f32 %v621, %v723
        %725 = vmatmul.f32.gmra.mxu0 %v661
        %v726 = vpop.f32.mrf.mxu0
        %v727 = vadd.f32 %v626, %v726
        %728 = vmatmul.f32.gmra.mxu0 %v664
        %v729 = vpop.f32.mrf.mxu0
        %v730 = vadd.f32 %v631, %v729
        %731 = vmatmul.f32.gmra.mxu0 %v667
        %v732 = vpop.f32.mrf.mxu0
        %v733 = vadd.f32 %v636, %v732
        %734 = vmatmul.f32.gmra.mxu0 %v670
        %v735 = vpop.f32.mrf.mxu0
        %v736 = vadd.f32 %v641, %v735
        %737 = vmatmul.f32.gmra.mxu0 %v673
        %v738 = vpop.f32.mrf.mxu0
        %v739 = vadd.f32 %v646, %v738
        %740 = vmatmul.f32.gmra.mxu0 %v676
        %v741 = vpop.f32.mrf.mxu0
        %v742 = vadd.f32 %v651, %v741
        %743 = vdwg.mxu0
        %744 = vmatpush.msra.mxu0 0.0
        %745 = vmatpush.msra.mxu0 0.0
        %746 = vmatpush.msra.mxu0 0.0
        %747 = vmatpush.msra.mxu0 0.0
        %748 = vmatpush.msra.mxu0 0.0
        %749 = vmatpush.msra.mxu0 0.0
        %750 = vmatpush.msra.mxu0 0.0
        %751 = vmatpush.msra.mxu0 0.0
        %752 = vmatpush.msra.mxu0 0.0
        %753 = vmatpush.msra.mxu0 0.0
        %754 = vmatpush.msra.mxu0 0.0
        %755 = vmatpush.msra.mxu0 %v683
        %756 = vmatpush.msra.mxu0 %v590
        %757 = vmatpush.msra.mxu0 %v582
        %758 = vmatpush.msra.mxu0 %v574
        %759 = vmatpush.msra.mxu0 %v566
        %760 = vmatmul.f32.gmra.mxu0 %v655
        %v761 = vpop.f32.mrf.mxu0
        %v762 = vadd.f32 %v616, %v761
        %763 = vmatmul.f32.gmra.mxu0 %v658
        %v764 = vpop.f32.mrf.mxu0
        %v765 = vadd.f32 %v621, %v764
        %766 = vmatmul.f32.gmra.mxu0 %v661
        %v767 = vpop.f32.mrf.mxu0
        %v768 = vadd.f32 %v626, %v767
        %769 = vmatmul.f32.gmra.mxu0 %v664
        %v770 = vpop.f32.mrf.mxu0
        %v771 = vadd.f32 %v631, %v770
        %772 = vmatmul.f32.gmra.mxu0 %v667
        %v773 = vpop.f32.mrf.mxu0
        %v774 = vadd.f32 %v636, %v773
        %775 = vmatmul.f32.gmra.mxu0 %v670
        %v776 = vpop.f32.mrf.mxu0
        %v777 = vadd.f32 %v641, %v776
        %778 = vmatmul.f32.gmra.mxu0 %v673
        %v779 = vpop.f32.mrf.mxu0
        %v780 = vadd.f32 %v646, %v779
        %781 = vmatmul.f32.gmra.mxu0 %v676
        %v782 = vpop.f32.mrf.mxu0
        %v783 = vadd.f32 %v651, %v782
        %784 = vdwg.mxu0
        %785 = vmatpush.msra.mxu0 0.0
        %786 = vmatpush.msra.mxu0 0.0
        %787 = vmatpush.msra.mxu0 0.0
        %788 = vmatpush.msra.mxu0 0.0
        %789 = vmatpush.msra.mxu0 0.0
        %790 = vmatpush.msra.mxu0 0.0
        %791 = vmatpush.msra.mxu0 0.0
        %792 = vmatpush.msra.mxu0 0.0
        %793 = vmatpush.msra.mxu0 0.0
        %794 = vmatpush.msra.mxu0 0.0
        %795 = vmatpush.msra.mxu0 0.0
        %796 = vmatpush.msra.mxu0 %v686
        %797 = vmatpush.msra.mxu0 %v591
        %798 = vmatpush.msra.mxu0 %v583
        %799 = vmatpush.msra.mxu0 %v575
        %800 = vmatpush.msra.mxu0 %v567
        %801 = vmatmul.f32.gmra.mxu0 %v655
        %v802 = vpop.f32.mrf.mxu0
        %v803 = vadd.f32 %v616, %v802
        %804 = vmatmul.f32.gmra.mxu0 %v658
        %v805 = vpop.f32.mrf.mxu0
        %v806 = vadd.f32 %v621, %v805
        %807 = vmatmul.f32.gmra.mxu0 %v661
        %v808 = vpop.f32.mrf.mxu0
        %v809 = vadd.f32 %v626, %v808
        %810 = vmatmul.f32.gmra.mxu0 %v664
        %v811 = vpop.f32.mrf.mxu0
        %v812 = vadd.f32 %v631, %v811
        %813 = vmatmul.f32.gmra.mxu0 %v667
        %v814 = vpop.f32.mrf.mxu0
        %v815 = vadd.f32 %v636, %v814
        %816 = vmatmul.f32.gmra.mxu0 %v670
        %v817 = vpop.f32.mrf.mxu0
        %v818 = vadd.f32 %v641, %v817
        %819 = vmatmul.f32.gmra.mxu0 %v673
        %v820 = vpop.f32.mrf.mxu0
        %v821 = vadd.f32 %v646, %v820
        %822 = vmatmul.f32.gmra.mxu0 %v676
        %v823 = vpop.f32.mrf.mxu0
        %v824 = vadd.f32 %v651, %v823
        %825 = vdwg.mxu0
        %826 = vmatpush.msra.mxu0 0.0
        %827 = vmatpush.msra.mxu0 0.0
        %828 = vmatpush.msra.mxu0 0.0
        %829 = vmatpush.msra.mxu0 0.0
        %830 = vmatpush.msra.mxu0 0.0
        %831 = vmatpush.msra.mxu0 0.0
        %832 = vmatpush.msra.mxu0 0.0
        %833 = vmatpush.msra.mxu0 0.0
        %834 = vmatpush.msra.mxu0 0.0
        %835 = vmatpush.msra.mxu0 0.0
        %836 = vmatpush.msra.mxu0 0.0
        %837 = vmatpush.msra.mxu0 %v689
        %838 = vmatpush.msra.mxu0 %v592
        %839 = vmatpush.msra.mxu0 %v584
        %840 = vmatpush.msra.mxu0 %v576
        %841 = vmatpush.msra.mxu0 %v568
        %842 = vmatmul.f32.gmra.mxu0 %v655
        %v843 = vpop.f32.mrf.mxu0
        %v844 = vadd.f32 %v616, %v843
        %845 = vmatmul.f32.gmra.mxu0 %v658
        %v846 = vpop.f32.mrf.mxu0
        %v847 = vadd.f32 %v621, %v846
        %848 = vmatmul.f32.gmra.mxu0 %v661
        %v849 = vpop.f32.mrf.mxu0
        %v850 = vadd.f32 %v626, %v849
        %851 = vmatmul.f32.gmra.mxu0 %v664
        %v852 = vpop.f32.mrf.mxu0
        %v853 = vadd.f32 %v631, %v852
        %854 = vmatmul.f32.gmra.mxu0 %v667
        %v855 = vpop.f32.mrf.mxu0
        %v856 = vadd.f32 %v636, %v855
        %857 = vmatmul.f32.gmra.mxu0 %v670
        %v858 = vpop.f32.mrf.mxu0
        %v859 = vadd.f32 %v641, %v858
        %860 = vmatmul.f32.gmra.mxu0 %v673
        %v861 = vpop.f32.mrf.mxu0
        %v862 = vadd.f32 %v646, %v861
        %863 = vmatmul.f32.gmra.mxu0 %v676
        %v864 = vpop.f32.mrf.mxu0
        %v865 = vadd.f32 %v651, %v864
        %866 = vdwg.mxu0
        %867 = vmatpush.msra.mxu0 0.0
        %868 = vmatpush.msra.mxu0 0.0
        %869 = vmatpush.msra.mxu0 0.0
        %870 = vmatpush.msra.mxu0 0.0
        %871 = vmatpush.msra.mxu0 0.0
        %872 = vmatpush.msra.mxu0 0.0
        %873 = vmatpush.msra.mxu0 0.0
        %874 = vmatpush.msra.mxu0 0.0
        %875 = vmatpush.msra.mxu0 0.0
        %876 = vmatpush.msra.mxu0 0.0
        %877 = vmatpush.msra.mxu0 0.0
        %878 = vmatpush.msra.mxu0 %v692
        %879 = vmatpush.msra.mxu0 %v593
        %880 = vmatpush.msra.mxu0 %v585
        %881 = vmatpush.msra.mxu0 %v577
        %882 = vmatpush.msra.mxu0 %v569
        %883 = vmatmul.f32.gmra.mxu0 %v655
        %v884 = vpop.f32.mrf.mxu0
        %v885 = vadd.f32 %v616, %v884
        %886 = vmatmul.f32.gmra.mxu0 %v658
        %v887 = vpop.f32.mrf.mxu0
        %v888 = vadd.f32 %v621, %v887
        %889 = vmatmul.f32.gmra.mxu0 %v661
        %v890 = vpop.f32.mrf.mxu0
        %v891 = vadd.f32 %v626, %v890
        %892 = vmatmul.f32.gmra.mxu0 %v664
        %v893 = vpop.f32.mrf.mxu0
        %v894 = vadd.f32 %v631, %v893
        %895 = vmatmul.f32.gmra.mxu0 %v667
        %v896 = vpop.f32.mrf.mxu0
        %v897 = vadd.f32 %v636, %v896
        %898 = vmatmul.f32.gmra.mxu0 %v670
        %v899 = vpop.f32.mrf.mxu0
        %v900 = vadd.f32 %v641, %v899
        %901 = vmatmul.f32.gmra.mxu0 %v673
        %v902 = vpop.f32.mrf.mxu0
        %v903 = vadd.f32 %v646, %v902
        %904 = vmatmul.f32.gmra.mxu0 %v676
        %v905 = vpop.f32.mrf.mxu0
        %v906 = vadd.f32 %v651, %v905
        %907 = vdwg.mxu0
        %908 = vmatpush.msra.mxu0 0.0
        %909 = vmatpush.msra.mxu0 0.0
        %910 = vmatpush.msra.mxu0 0.0
        %911 = vmatpush.msra.mxu0 0.0
        %912 = vmatpush.msra.mxu0 0.0
        %913 = vmatpush.msra.mxu0 0.0
        %914 = vmatpush.msra.mxu0 0.0
        %915 = vmatpush.msra.mxu0 0.0
        %916 = vmatpush.msra.mxu0 0.0
        %917 = vmatpush.msra.mxu0 0.0
        %918 = vmatpush.msra.mxu0 0.0
        %919 = vmatpush.msra.mxu0 %v695
        %920 = vmatpush.msra.mxu0 %v594
        %921 = vmatpush.msra.mxu0 %v586
        %922 = vmatpush.msra.mxu0 %v578
        %923 = vmatpush.msra.mxu0 %v570
        %924 = vmatmul.f32.gmra.mxu0 %v655
        %v925 = vpop.f32.mrf.mxu0
        %v926 = vadd.f32 %v616, %v925
        %927 = vmatmul.f32.gmra.mxu0 %v658
        %v928 = vpop.f32.mrf.mxu0
        %v929 = vadd.f32 %v621, %v928
        %930 = vmatmul.f32.gmra.mxu0 %v661
        %v931 = vpop.f32.mrf.mxu0
        %v932 = vadd.f32 %v626, %v931
        %933 = vmatmul.f32.gmra.mxu0 %v664
        %v934 = vpop.f32.mrf.mxu0
        %v935 = vadd.f32 %v631, %v934
        %936 = vmatmul.f32.gmra.mxu0 %v667
        %v937 = vpop.f32.mrf.mxu0
        %v938 = vadd.f32 %v636, %v937
        %939 = vmatmul.f32.gmra.mxu0 %v670
        %v940 = vpop.f32.mrf.mxu0
        %v941 = vadd.f32 %v641, %v940
        %942 = vmatmul.f32.gmra.mxu0 %v673
        %v943 = vpop.f32.mrf.mxu0
        %v944 = vadd.f32 %v646, %v943
        %945 = vmatmul.f32.gmra.mxu0 %v676
        %v946 = vpop.f32.mrf.mxu0
        %v947 = vadd.f32 %v651, %v946
        %948 = vdwg.mxu0
        %949 = vmatpush.msra.mxu0 0.0
        %950 = vmatpush.msra.mxu0 0.0
        %951 = vmatpush.msra.mxu0 0.0
        %952 = vmatpush.msra.mxu0 0.0
        %953 = vmatpush.msra.mxu0 0.0
        %954 = vmatpush.msra.mxu0 0.0
        %955 = vmatpush.msra.mxu0 0.0
        %956 = vmatpush.msra.mxu0 0.0
        %957 = vmatpush.msra.mxu0 0.0
        %958 = vmatpush.msra.mxu0 0.0
        %959 = vmatpush.msra.mxu0 0.0
        %960 = vmatpush.msra.mxu0 %v698
        %961 = vmatpush.msra.mxu0 %v595
        %962 = vmatpush.msra.mxu0 %v587
        %963 = vmatpush.msra.mxu0 %v579
        %964 = vmatpush.msra.mxu0 %v571
        %965 = vmatmul.f32.gmra.mxu0 %v655
        %v966 = vpop.f32.mrf.mxu0
        %v967 = vadd.f32 %v616, %v966
        %968 = vmatmul.f32.gmra.mxu0 %v658
        %v969 = vpop.f32.mrf.mxu0
        %v970 = vadd.f32 %v621, %v969
        %971 = vmatmul.f32.gmra.mxu0 %v661
        %v972 = vpop.f32.mrf.mxu0
        %v973 = vadd.f32 %v626, %v972
        %974 = vmatmul.f32.gmra.mxu0 %v664
        %v975 = vpop.f32.mrf.mxu0
        %v976 = vadd.f32 %v631, %v975
        %977 = vmatmul.f32.gmra.mxu0 %v667
        %v978 = vpop.f32.mrf.mxu0
        %v979 = vadd.f32 %v636, %v978
        %980 = vmatmul.f32.gmra.mxu0 %v670
        %v981 = vpop.f32.mrf.mxu0
        %v982 = vadd.f32 %v641, %v981
        %983 = vmatmul.f32.gmra.mxu0 %v673
        %v984 = vpop.f32.mrf.mxu0
        %v985 = vadd.f32 %v646, %v984
        %986 = vmatmul.f32.gmra.mxu0 %v676
        %v987 = vpop.f32.mrf.mxu0
        %v988 = vadd.f32 %v651, %v987
        %989 = vdwg.mxu0
        %990 = vmatpush.msra.mxu0 0.0
        %991 = vmatpush.msra.mxu0 0.0
        %992 = vmatpush.msra.mxu0 0.0
        %993 = vmatpush.msra.mxu0 0.0
        %994 = vmatpush.msra.mxu0 0.0
        %995 = vmatpush.msra.mxu0 0.0
        %996 = vmatpush.msra.mxu0 0.0
        %997 = vmatpush.msra.mxu0 0.0
        %998 = vmatpush.msra.mxu0 0.0
        %999 = vmatpush.msra.mxu0 0.0
        %1000 = vmatpush.msra.mxu0 0.0
        %1001 = vmatpush.msra.mxu0 %v701
        %1002 = vmatpush.msra.mxu0 %v596
        %1003 = vmatpush.msra.mxu0 %v588
        %1004 = vmatpush.msra.mxu0 %v580
        %1005 = vmatpush.msra.mxu0 %v572
        %1006 = vmatmul.f32.gmra.mxu0 %v655
        %v1007 = vpop.f32.mrf.mxu0
        %v1008 = vadd.f32 %v616, %v1007
        %1009 = vmatmul.f32.gmra.mxu0 %v658
        %v1010 = vpop.f32.mrf.mxu0
        %v1011 = vadd.f32 %v621, %v1010
        %1012 = vmatmul.f32.gmra.mxu0 %v661
        %v1013 = vpop.f32.mrf.mxu0
        %v1014 = vadd.f32 %v626, %v1013
        %1015 = vmatmul.f32.gmra.mxu0 %v664
        %v1016 = vpop.f32.mrf.mxu0
        %v1017 = vadd.f32 %v631, %v1016
        %1018 = vmatmul.f32.gmra.mxu0 %v667
        %v1019 = vpop.f32.mrf.mxu0
        %v1020 = vadd.f32 %v636, %v1019
        %1021 = vmatmul.f32.gmra.mxu0 %v670
        %v1022 = vpop.f32.mrf.mxu0
        %v1023 = vadd.f32 %v641, %v1022
        %1024 = vmatmul.f32.gmra.mxu0 %v673
        %v1025 = vpop.f32.mrf.mxu0
        %v1026 = vadd.f32 %v646, %v1025
        %1027 = vmatmul.f32.gmra.mxu0 %v676
        %v1028 = vpop.f32.mrf.mxu0
        %v1029 = vadd.f32 %v651, %v1028
        %1030 = vdwg.mxu0
        %v1031 = vmax.f32 %v721, 0.0
        %v1032 = vmax.f32 %v762, 0.0
        %v1033 = vmax.f32 %v803, 0.0
        %v1034 = vmax.f32 %v844, 0.0
        %v1035 = vmax.f32 %v885, 0.0
        %v1036 = vmax.f32 %v926, 0.0
        %v1037 = vmax.f32 %v967, 0.0
        %v1038 = vmax.f32 %v1008, 0.0
        %v1039 = vmax.f32 %v724, 0.0
        %v1040 = vmax.f32 %v765, 0.0
        %v1041 = vmax.f32 %v806, 0.0
        %v1042 = vmax.f32 %v847, 0.0
        %v1043 = vmax.f32 %v888, 0.0
        %v1044 = vmax.f32 %v929, 0.0
        %v1045 = vmax.f32 %v970, 0.0
        %v1046 = vmax.f32 %v1011, 0.0
        %v1047 = vmax.f32 %v727, 0.0
        %v1048 = vmax.f32 %v768, 0.0
        %v1049 = vmax.f32 %v809, 0.0
        %v1050 = vmax.f32 %v850, 0.0
        %v1051 = vmax.f32 %v891, 0.0
        %v1052 = vmax.f32 %v932, 0.0
        %v1053 = vmax.f32 %v973, 0.0
        %v1054 = vmax.f32 %v1014, 0.0
        %v1055 = vmax.f32 %v730, 0.0
        %v1056 = vmax.f32 %v771, 0.0
        %v1057 = vmax.f32 %v812, 0.0
        %v1058 = vmax.f32 %v853, 0.0
        %v1059 = vmax.f32 %v894, 0.0
        %v1060 = vmax.f32 %v935, 0.0
        %v1061 = vmax.f32 %v976, 0.0
        %v1062 = vmax.f32 %v1017, 0.0
        %v1063 = vmax.f32 %v733, 0.0
        %v1064 = vmax.f32 %v774, 0.0
        %v1065 = vmax.f32 %v815, 0.0
        %v1066 = vmax.f32 %v856, 0.0
        %v1067 = vmax.f32 %v897, 0.0
        %v1068 = vmax.f32 %v938, 0.0
        %v1069 = vmax.f32 %v979, 0.0
        %v1070 = vmax.f32 %v1020, 0.0
        %v1071 = vmax.f32 %v736, 0.0
        %v1072 = vmax.f32 %v777, 0.0
        %v1073 = vmax.f32 %v818, 0.0
        %v1074 = vmax.f32 %v859, 0.0
        %v1075 = vmax.f32 %v900, 0.0
        %v1076 = vmax.f32 %v941, 0.0
        %v1077 = vmax.f32 %v982, 0.0
        %v1078 = vmax.f32 %v1023, 0.0
        %v1079 = vmax.f32 %v739, 0.0
        %v1080 = vmax.f32 %v780, 0.0
        %v1081 = vmax.f32 %v821, 0.0
        %v1082 = vmax.f32 %v862, 0.0
        %v1083 = vmax.f32 %v903, 0.0
        %v1084 = vmax.f32 %v944, 0.0
        %v1085 = vmax.f32 %v985, 0.0
        %v1086 = vmax.f32 %v1026, 0.0
        %v1087 = vmax.f32 %v742, 0.0
        %v1088 = vmax.f32 %v783, 0.0
        %v1089 = vmax.f32 %v824, 0.0
        %v1090 = vmax.f32 %v865, 0.0
        %v1091 = vmax.f32 %v906, 0.0
        %v1092 = vmax.f32 %v947, 0.0
        %v1093 = vmax.f32 %v988, 0.0
        %v1094 = vmax.f32 %v1029, 0.0
        %1095 = vrot.lane.b32.xlu0 %v1031, 1
        %v1096 = vpop.permute.xlu0 %1095
        %1097 = vrot.lane.b32.xlu0 %v1039, 1
        %v1098 = vpop.permute.xlu0 %1097
        %1099 = vrot.lane.b32.xlu0 %v1047, 1
        %v1100 = vpop.permute.xlu0 %1099
        %1101 = vrot.lane.b32.xlu0 %v1055, 1
        %v1102 = vpop.permute.xlu0 %1101
        %1103 = vrot.lane.b32.xlu0 %v1063, 1
        %v1104 = vpop.permute.xlu0 %1103
        %1105 = vrot.lane.b32.xlu0 %v1071, 1
        %v1106 = vpop.permute.xlu0 %1105
        %1107 = vrot.lane.b32.xlu0 %v1079, 1
        %v1108 = vpop.permute.xlu0 %1107
        %1109 = vrot.lane.b32.xlu0 %v1087, 1
        %v1110 = vpop.permute.xlu0 %1109
        %1111 = vrot.lane.b32.xlu0 %v1032, 1
        %v1112 = vpop.permute.xlu0 %1111
        %1113 = vrot.lane.b32.xlu0 %v1040, 1
        %v1114 = vpop.permute.xlu0 %1113
        %1115 = vrot.lane.b32.xlu0 %v1048, 1
        %v1116 = vpop.permute.xlu0 %1115
        %1117 = vrot.lane.b32.xlu0 %v1056, 1
        %v1118 = vpop.permute.xlu0 %1117
        %1119 = vrot.lane.b32.xlu0 %v1064, 1
        %v1120 = vpop.permute.xlu0 %1119
        %1121 = vrot.lane.b32.xlu0 %v1072, 1
        %v1122 = vpop.permute.xlu0 %1121
        %1123 = vrot.lane.b32.xlu0 %v1080, 1
        %v1124 = vpop.permute.xlu0 %1123
        %1125 = vrot.lane.b32.xlu0 %v1088, 1
        %v1126 = vpop.permute.xlu0 %1125
        %1127 = vrot.lane.b32.xlu0 %v1033, 1
        %v1128 = vpop.permute.xlu0 %1127
        %1129 = vrot.lane.b32.xlu0 %v1041, 1
        %v1130 = vpop.permute.xlu0 %1129
        %1131 = vrot.lane.b32.xlu0 %v1049, 1
        %v1132 = vpop.permute.xlu0 %1131
        %1133 = vrot.lane.b32.xlu0 %v1057, 1
        %v1134 = vpop.permute.xlu0 %1133
        %1135 = vrot.lane.b32.xlu0 %v1065, 1
        %v1136 = vpop.permute.xlu0 %1135
        %1137 = vrot.lane.b32.xlu0 %v1073, 1
        %v1138 = vpop.permute.xlu0 %1137
        %1139 = vrot.lane.b32.xlu0 %v1081, 1
        %v1140 = vpop.permute.xlu0 %1139
        %1141 = vrot.lane.b32.xlu0 %v1089, 1
        %v1142 = vpop.permute.xlu0 %1141
        %1143 = vrot.lane.b32.xlu0 %v1034, 1
        %v1144 = vpop.permute.xlu0 %1143
        %1145 = vrot.lane.b32.xlu0 %v1042, 1
        %v1146 = vpop.permute.xlu0 %1145
        %1147 = vrot.lane.b32.xlu0 %v1050, 1
        %v1148 = vpop.permute.xlu0 %1147
        %1149 = vrot.lane.b32.xlu0 %v1058, 1
        %v1150 = vpop.permute.xlu0 %1149
        %1151 = vrot.lane.b32.xlu0 %v1066, 1
        %v1152 = vpop.permute.xlu0 %1151
        %1153 = vrot.lane.b32.xlu0 %v1074, 1
        %v1154 = vpop.permute.xlu0 %1153
        %1155 = vrot.lane.b32.xlu0 %v1082, 1
        %v1156 = vpop.permute.xlu0 %1155
        %1157 = vrot.lane.b32.xlu0 %v1090, 1
        %v1158 = vpop.permute.xlu0 %1157
        %1159 = vrot.lane.b32.xlu0 %v1035, 1
        %v1160 = vpop.permute.xlu0 %1159
        %1161 = vrot.lane.b32.xlu0 %v1043, 1
        %v1162 = vpop.permute.xlu0 %1161
        %1163 = vrot.lane.b32.xlu0 %v1051, 1
        %v1164 = vpop.permute.xlu0 %1163
        %1165 = vrot.lane.b32.xlu0 %v1059, 1
        %v1166 = vpop.permute.xlu0 %1165
        %1167 = vrot.lane.b32.xlu0 %v1067, 1
        %v1168 = vpop.permute.xlu0 %1167
        %1169 = vrot.lane.b32.xlu0 %v1075, 1
        %v1170 = vpop.permute.xlu0 %1169
        %1171 = vrot.lane.b32.xlu0 %v1083, 1
        %v1172 = vpop.permute.xlu0 %1171
        %1173 = vrot.lane.b32.xlu0 %v1091, 1
        %v1174 = vpop.permute.xlu0 %1173
        %1175 = vrot.lane.b32.xlu0 %v1036, 1
        %v1176 = vpop.permute.xlu0 %1175
        %1177 = vrot.lane.b32.xlu0 %v1044, 1
        %v1178 = vpop.permute.xlu0 %1177
        %1179 = vrot.lane.b32.xlu0 %v1052, 1
        %v1180 = vpop.permute.xlu0 %1179
        %1181 = vrot.lane.b32.xlu0 %v1060, 1
        %v1182 = vpop.permute.xlu0 %1181
        %1183 = vrot.lane.b32.xlu0 %v1068, 1
        %v1184 = vpop.permute.xlu0 %1183
        %1185 = vrot.lane.b32.xlu0 %v1076, 1
        %v1186 = vpop.permute.xlu0 %1185
        %1187 = vrot.lane.b32.xlu0 %v1084, 1
        %v1188 = vpop.permute.xlu0 %1187
        %1189 = vrot.lane.b32.xlu0 %v1092, 1
        %v1190 = vpop.permute.xlu0 %1189
        %1191 = vrot.lane.b32.xlu0 %v1037, 1
        %v1192 = vpop.permute.xlu0 %1191
        %1193 = vrot.lane.b32.xlu0 %v1045, 1
        %v1194 = vpop.permute.xlu0 %1193
        %1195 = vrot.lane.b32.xlu0 %v1053, 1
        %v1196 = vpop.permute.xlu0 %1195
        %1197 = vrot.lane.b32.xlu0 %v1061, 1
        %v1198 = vpop.permute.xlu0 %1197
        %1199 = vrot.lane.b32.xlu0 %v1069, 1
        %v1200 = vpop.permute.xlu0 %1199
        %1201 = vrot.lane.b32.xlu0 %v1077, 1
        %v1202 = vpop.permute.xlu0 %1201
        %1203 = vrot.lane.b32.xlu0 %v1085, 1
        %v1204 = vpop.permute.xlu0 %1203
        %1205 = vrot.lane.b32.xlu0 %v1093, 1
        %v1206 = vpop.permute.xlu0 %1205
        %1207 = vrot.lane.b32.xlu0 %v1038, 1
        %v1208 = vpop.permute.xlu0 %1207
        %1209 = vrot.lane.b32.xlu0 %v1046, 1
        %v1210 = vpop.permute.xlu0 %1209
        %1211 = vrot.lane.b32.xlu0 %v1054, 1
        %v1212 = vpop.permute.xlu0 %1211
        %1213 = vrot.lane.b32.xlu0 %v1062, 1
        %v1214 = vpop.permute.xlu0 %1213
        %1215 = vrot.lane.b32.xlu0 %v1070, 1
        %v1216 = vpop.permute.xlu0 %1215
        %1217 = vrot.lane.b32.xlu0 %v1078, 1
        %v1218 = vpop.permute.xlu0 %1217
        %1219 = vrot.lane.b32.xlu0 %v1086, 1
        %v1220 = vpop.permute.xlu0 %1219
        %1221 = vrot.lane.b32.xlu0 %v1094, 1
        %v1222 = vpop.permute.xlu0 %1221
        %vm1223 = vcmp.lt.s32.totalorder %v453, 1
        %v1224 = vsel %vm1223, %v1192, %v1208
        %v1225 = vsel %vm1223, %v1194, %v1210
        %v1226 = vsel %vm1223, %v1196, %v1212
        %v1227 = vsel %vm1223, %v1198, %v1214
        %v1228 = vsel %vm1223, %v1200, %v1216
        %v1229 = vsel %vm1223, %v1202, %v1218
        %v1230 = vsel %vm1223, %v1204, %v1220
        %v1231 = vsel %vm1223, %v1206, %v1222
        %v1232 = vsel %vm1223, %v1176, %v1192
        %v1233 = vsel %vm1223, %v1178, %v1194
        %v1234 = vsel %vm1223, %v1180, %v1196
        %v1235 = vsel %vm1223, %v1182, %v1198
        %v1236 = vsel %vm1223, %v1184, %v1200
        %v1237 = vsel %vm1223, %v1186, %v1202
        %v1238 = vsel %vm1223, %v1188, %v1204
        %v1239 = vsel %vm1223, %v1190, %v1206
        %v1240 = vsel %vm1223, %v1160, %v1176
        %v1241 = vsel %vm1223, %v1162, %v1178
        %v1242 = vsel %vm1223, %v1164, %v1180
        %v1243 = vsel %vm1223, %v1166, %v1182
        %v1244 = vsel %vm1223, %v1168, %v1184
        %v1245 = vsel %vm1223, %v1170, %v1186
        %v1246 = vsel %vm1223, %v1172, %v1188
        %v1247 = vsel %vm1223, %v1174, %v1190
        %v1248 = vsel %vm1223, %v1144, %v1160
        %v1249 = vsel %vm1223, %v1146, %v1162
        %v1250 = vsel %vm1223, %v1148, %v1164
        %v1251 = vsel %vm1223, %v1150, %v1166
        %v1252 = vsel %vm1223, %v1152, %v1168
        %v1253 = vsel %vm1223, %v1154, %v1170
        %v1254 = vsel %vm1223, %v1156, %v1172
        %v1255 = vsel %vm1223, %v1158, %v1174
        %v1256 = vsel %vm1223, %v1128, %v1144
        %v1257 = vsel %vm1223, %v1130, %v1146
        %v1258 = vsel %vm1223, %v1132, %v1148
        %v1259 = vsel %vm1223, %v1134, %v1150
        %v1260 = vsel %vm1223, %v1136, %v1152
        %v1261 = vsel %vm1223, %v1138, %v1154
        %v1262 = vsel %vm1223, %v1140, %v1156
        %v1263 = vsel %vm1223, %v1142, %v1158
        %v1264 = vsel %vm1223, %v1112, %v1128
        %v1265 = vsel %vm1223, %v1114, %v1130
        %v1266 = vsel %vm1223, %v1116, %v1132
        %v1267 = vsel %vm1223, %v1118, %v1134
        %v1268 = vsel %vm1223, %v1120, %v1136
        %v1269 = vsel %vm1223, %v1122, %v1138
        %v1270 = vsel %vm1223, %v1124, %v1140
        %v1271 = vsel %vm1223, %v1126, %v1142
        %v1272 = vsel %vm1223, %v1096, %v1112
        %v1273 = vsel %vm1223, %v1098, %v1114
        %v1274 = vsel %vm1223, %v1100, %v1116
        %v1275 = vsel %vm1223, %v1102, %v1118
        %v1276 = vsel %vm1223, %v1104, %v1120
        %v1277 = vsel %vm1223, %v1106, %v1122
        %v1278 = vsel %vm1223, %v1108, %v1124
        %v1279 = vsel %vm1223, %v1110, %v1126
        %v1280 = vsel %vm1223, %v1208, %v1096
        %v1281 = vsel %vm1223, %v1210, %v1098
        %v1282 = vsel %vm1223, %v1212, %v1100
        %v1283 = vsel %vm1223, %v1214, %v1102
        %v1284 = vsel %vm1223, %v1216, %v1104
        %v1285 = vsel %vm1223, %v1218, %v1106
        %v1286 = vsel %vm1223, %v1220, %v1108
        %v1287 = vsel %vm1223, %v1222, %v1110
        %vm1288 = vcmp.ge.s32.totalorder %v549, 1
        %vm1289 = vcmp.ge.s32.totalorder %v550, 1
        %vm1290 = vcmp.ge.s32.totalorder %v551, 1
        %vm1291 = vcmp.ge.s32.totalorder %v552, 1
        %vm1292 = vcmp.ge.s32.totalorder %v553, 1
        %vm1293 = vcmp.ge.s32.totalorder %v554, 1
        %vm1294 = vcmp.ge.s32.totalorder %v555, 1
        %vm1295 = vcmp.ge.s32.totalorder %v556, 1
        %v1296 = vsel %vm1288, %v1280, 0.0
        %v1297 = vsel %vm1289, %v1272, 0.0
        %v1298 = vsel %vm1290, %v1264, 0.0
        %v1299 = vsel %vm1291, %v1256, 0.0
        %v1300 = vsel %vm1292, %v1248, 0.0
        %v1301 = vsel %vm1293, %v1240, 0.0
        %v1302 = vsel %vm1294, %v1232, 0.0
        %v1303 = vsel %vm1295, %v1224, 0.0
        %v1304 = vsel %vm1288, %v1281, 0.0
        %v1305 = vsel %vm1289, %v1273, 0.0
        %v1306 = vsel %vm1290, %v1265, 0.0
        %v1307 = vsel %vm1291, %v1257, 0.0
        %v1308 = vsel %vm1292, %v1249, 0.0
        %v1309 = vsel %vm1293, %v1241, 0.0
        %v1310 = vsel %vm1294, %v1233, 0.0
        %v1311 = vsel %vm1295, %v1225, 0.0
        %v1312 = vsel %vm1288, %v1282, 0.0
        %v1313 = vsel %vm1289, %v1274, 0.0
        %v1314 = vsel %vm1290, %v1266, 0.0
        %v1315 = vsel %vm1291, %v1258, 0.0
        %v1316 = vsel %vm1292, %v1250, 0.0
        %v1317 = vsel %vm1293, %v1242, 0.0
        %v1318 = vsel %vm1294, %v1234, 0.0
        %v1319 = vsel %vm1295, %v1226, 0.0
        %v1320 = vsel %vm1288, %v1283, 0.0
        %v1321 = vsel %vm1289, %v1275, 0.0
        %v1322 = vsel %vm1290, %v1267, 0.0
        %v1323 = vsel %vm1291, %v1259, 0.0
        %v1324 = vsel %vm1292, %v1251, 0.0
        %v1325 = vsel %vm1293, %v1243, 0.0
        %v1326 = vsel %vm1294, %v1235, 0.0
        %v1327 = vsel %vm1295, %v1227, 0.0
        %v1328 = vsel %vm1288, %v1284, 0.0
        %v1329 = vsel %vm1289, %v1276, 0.0
        %v1330 = vsel %vm1290, %v1268, 0.0
        %v1331 = vsel %vm1291, %v1260, 0.0
        %v1332 = vsel %vm1292, %v1252, 0.0
        %v1333 = vsel %vm1293, %v1244, 0.0
        %v1334 = vsel %vm1294, %v1236, 0.0
        %v1335 = vsel %vm1295, %v1228, 0.0
        %v1336 = vsel %vm1288, %v1285, 0.0
        %v1337 = vsel %vm1289, %v1277, 0.0
        %v1338 = vsel %vm1290, %v1269, 0.0
        %v1339 = vsel %vm1291, %v1261, 0.0
        %v1340 = vsel %vm1292, %v1253, 0.0
        %v1341 = vsel %vm1293, %v1245, 0.0
        %v1342 = vsel %vm1294, %v1237, 0.0
        %v1343 = vsel %vm1295, %v1229, 0.0
        %v1344 = vsel %vm1288, %v1286, 0.0
        %v1345 = vsel %vm1289, %v1278, 0.0
        %v1346 = vsel %vm1290, %v1270, 0.0
        %v1347 = vsel %vm1291, %v1262, 0.0
        %v1348 = vsel %vm1292, %v1254, 0.0
        %v1349 = vsel %vm1293, %v1246, 0.0
        %v1350 = vsel %vm1294, %v1238, 0.0
        %v1351 = vsel %vm1295, %v1230, 0.0
        %v1352 = vsel %vm1288, %v1287, 0.0
        %v1353 = vsel %vm1289, %v1279, 0.0
        %v1354 = vsel %vm1290, %v1271, 0.0
        %v1355 = vsel %vm1291, %v1263, 0.0
        %v1356 = vsel %vm1292, %v1255, 0.0
        %v1357 = vsel %vm1293, %v1247, 0.0
        %v1358 = vsel %vm1294, %v1239, 0.0
        %v1359 = vsel %vm1295, %v1231, 0.0
        %1360 = vrot.lane.b32.xlu0 %v1031, 127
        %v1361 = vpop.permute.xlu0 %1360
        %1362 = vrot.lane.b32.xlu0 %v1039, 127
        %v1363 = vpop.permute.xlu0 %1362
        %1364 = vrot.lane.b32.xlu0 %v1047, 127
        %v1365 = vpop.permute.xlu0 %1364
        %1366 = vrot.lane.b32.xlu0 %v1055, 127
        %v1367 = vpop.permute.xlu0 %1366
        %1368 = vrot.lane.b32.xlu0 %v1063, 127
        %v1369 = vpop.permute.xlu0 %1368
        %1370 = vrot.lane.b32.xlu0 %v1071, 127
        %v1371 = vpop.permute.xlu0 %1370
        %1372 = vrot.lane.b32.xlu0 %v1079, 127
        %v1373 = vpop.permute.xlu0 %1372
        %1374 = vrot.lane.b32.xlu0 %v1087, 127
        %v1375 = vpop.permute.xlu0 %1374
        %1376 = vrot.lane.b32.xlu0 %v1032, 127
        %v1377 = vpop.permute.xlu0 %1376
        %1378 = vrot.lane.b32.xlu0 %v1040, 127
        %v1379 = vpop.permute.xlu0 %1378
        %1380 = vrot.lane.b32.xlu0 %v1048, 127
        %v1381 = vpop.permute.xlu0 %1380
        %1382 = vrot.lane.b32.xlu0 %v1056, 127
        %v1383 = vpop.permute.xlu0 %1382
        %1384 = vrot.lane.b32.xlu0 %v1064, 127
        %v1385 = vpop.permute.xlu0 %1384
        %1386 = vrot.lane.b32.xlu0 %v1072, 127
        %v1387 = vpop.permute.xlu0 %1386
        %1388 = vrot.lane.b32.xlu0 %v1080, 127
        %v1389 = vpop.permute.xlu0 %1388
        %1390 = vrot.lane.b32.xlu0 %v1088, 127
        %v1391 = vpop.permute.xlu0 %1390
        %1392 = vrot.lane.b32.xlu0 %v1033, 127
        %v1393 = vpop.permute.xlu0 %1392
        %1394 = vrot.lane.b32.xlu0 %v1041, 127
        %v1395 = vpop.permute.xlu0 %1394
        %1396 = vrot.lane.b32.xlu0 %v1049, 127
        %v1397 = vpop.permute.xlu0 %1396
        %1398 = vrot.lane.b32.xlu0 %v1057, 127
        %v1399 = vpop.permute.xlu0 %1398
        %1400 = vrot.lane.b32.xlu0 %v1065, 127
        %v1401 = vpop.permute.xlu0 %1400
        %1402 = vrot.lane.b32.xlu0 %v1073, 127
        %v1403 = vpop.permute.xlu0 %1402
        %1404 = vrot.lane.b32.xlu0 %v1081, 127
        %v1405 = vpop.permute.xlu0 %1404
        %1406 = vrot.lane.b32.xlu0 %v1089, 127
        %v1407 = vpop.permute.xlu0 %1406
        %1408 = vrot.lane.b32.xlu0 %v1034, 127
        %v1409 = vpop.permute.xlu0 %1408
        %1410 = vrot.lane.b32.xlu0 %v1042, 127
        %v1411 = vpop.permute.xlu0 %1410
        %1412 = vrot.lane.b32.xlu0 %v1050, 127
        %v1413 = vpop.permute.xlu0 %1412
        %1414 = vrot.lane.b32.xlu0 %v1058, 127
        %v1415 = vpop.permute.xlu0 %1414
        %1416 = vrot.lane.b32.xlu0 %v1066, 127
        %v1417 = vpop.permute.xlu0 %1416
        %1418 = vrot.lane.b32.xlu0 %v1074, 127
        %v1419 = vpop.permute.xlu0 %1418
        %1420 = vrot.lane.b32.xlu0 %v1082, 127
        %v1421 = vpop.permute.xlu0 %1420
        %1422 = vrot.lane.b32.xlu0 %v1090, 127
        %v1423 = vpop.permute.xlu0 %1422
        %1424 = vrot.lane.b32.xlu0 %v1035, 127
        %v1425 = vpop.permute.xlu0 %1424
        %1426 = vrot.lane.b32.xlu0 %v1043, 127
        %v1427 = vpop.permute.xlu0 %1426
        %1428 = vrot.lane.b32.xlu0 %v1051, 127
        %v1429 = vpop.permute.xlu0 %1428
        %1430 = vrot.lane.b32.xlu0 %v1059, 127
        %v1431 = vpop.permute.xlu0 %1430
        %1432 = vrot.lane.b32.xlu0 %v1067, 127
        %v1433 = vpop.permute.xlu0 %1432
        %1434 = vrot.lane.b32.xlu0 %v1075, 127
        %v1435 = vpop.permute.xlu0 %1434
        %1436 = vrot.lane.b32.xlu0 %v1083, 127
        %v1437 = vpop.permute.xlu0 %1436
        %1438 = vrot.lane.b32.xlu0 %v1091, 127
        %v1439 = vpop.permute.xlu0 %1438
        %1440 = vrot.lane.b32.xlu0 %v1036, 127
        %v1441 = vpop.permute.xlu0 %1440
        %1442 = vrot.lane.b32.xlu0 %v1044, 127
        %v1443 = vpop.permute.xlu0 %1442
        %1444 = vrot.lane.b32.xlu0 %v1052, 127
        %v1445 = vpop.permute.xlu0 %1444
        %1446 = vrot.lane.b32.xlu0 %v1060, 127
        %v1447 = vpop.permute.xlu0 %1446
        %1448 = vrot.lane.b32.xlu0 %v1068, 127
        %v1449 = vpop.permute.xlu0 %1448
        %1450 = vrot.lane.b32.xlu0 %v1076, 127
        %v1451 = vpop.permute.xlu0 %1450
        %1452 = vrot.lane.b32.xlu0 %v1084, 127
        %v1453 = vpop.permute.xlu0 %1452
        %1454 = vrot.lane.b32.xlu0 %v1092, 127
        %v1455 = vpop.permute.xlu0 %1454
        %1456 = vrot.lane.b32.xlu0 %v1037, 127
        %v1457 = vpop.permute.xlu0 %1456
        %1458 = vrot.lane.b32.xlu0 %v1045, 127
        %v1459 = vpop.permute.xlu0 %1458
        %1460 = vrot.lane.b32.xlu0 %v1053, 127
        %v1461 = vpop.permute.xlu0 %1460
        %1462 = vrot.lane.b32.xlu0 %v1061, 127
        %v1463 = vpop.permute.xlu0 %1462
        %1464 = vrot.lane.b32.xlu0 %v1069, 127
        %v1465 = vpop.permute.xlu0 %1464
        %1466 = vrot.lane.b32.xlu0 %v1077, 127
        %v1467 = vpop.permute.xlu0 %1466
        %1468 = vrot.lane.b32.xlu0 %v1085, 127
        %v1469 = vpop.permute.xlu0 %1468
        %1470 = vrot.lane.b32.xlu0 %v1093, 127
        %v1471 = vpop.permute.xlu0 %1470
        %1472 = vrot.lane.b32.xlu0 %v1038, 127
        %v1473 = vpop.permute.xlu0 %1472
        %1474 = vrot.lane.b32.xlu0 %v1046, 127
        %v1475 = vpop.permute.xlu0 %1474
        %1476 = vrot.lane.b32.xlu0 %v1054, 127
        %v1477 = vpop.permute.xlu0 %1476
        %1478 = vrot.lane.b32.xlu0 %v1062, 127
        %v1479 = vpop.permute.xlu0 %1478
        %1480 = vrot.lane.b32.xlu0 %v1070, 127
        %v1481 = vpop.permute.xlu0 %1480
        %1482 = vrot.lane.b32.xlu0 %v1078, 127
        %v1483 = vpop.permute.xlu0 %1482
        %1484 = vrot.lane.b32.xlu0 %v1086, 127
        %v1485 = vpop.permute.xlu0 %1484
        %1486 = vrot.lane.b32.xlu0 %v1094, 127
        %v1487 = vpop.permute.xlu0 %1486
        %vm1488 = vcmp.lt.s32.totalorder %v453, 127
        %v1489 = vsel %vm1488, %v1457, %v1473
        %v1490 = vsel %vm1488, %v1459, %v1475
        %v1491 = vsel %vm1488, %v1461, %v1477
        %v1492 = vsel %vm1488, %v1463, %v1479
        %v1493 = vsel %vm1488, %v1465, %v1481
        %v1494 = vsel %vm1488, %v1467, %v1483
        %v1495 = vsel %vm1488, %v1469, %v1485
        %v1496 = vsel %vm1488, %v1471, %v1487
        %v1497 = vsel %vm1488, %v1441, %v1457
        %v1498 = vsel %vm1488, %v1443, %v1459
        %v1499 = vsel %vm1488, %v1445, %v1461
        %v1500 = vsel %vm1488, %v1447, %v1463
        %v1501 = vsel %vm1488, %v1449, %v1465
        %v1502 = vsel %vm1488, %v1451, %v1467
        %v1503 = vsel %vm1488, %v1453, %v1469
        %v1504 = vsel %vm1488, %v1455, %v1471
        %v1505 = vsel %vm1488, %v1425, %v1441
        %v1506 = vsel %vm1488, %v1427, %v1443
        %v1507 = vsel %vm1488, %v1429, %v1445
        %v1508 = vsel %vm1488, %v1431, %v1447
        %v1509 = vsel %vm1488, %v1433, %v1449
        %v1510 = vsel %vm1488, %v1435, %v1451
        %v1511 = vsel %vm1488, %v1437, %v1453
        %v1512 = vsel %vm1488, %v1439, %v1455
        %v1513 = vsel %vm1488, %v1409, %v1425
        %v1514 = vsel %vm1488, %v1411, %v1427
        %v1515 = vsel %vm1488, %v1413, %v1429
        %v1516 = vsel %vm1488, %v1415, %v1431
        %v1517 = vsel %vm1488, %v1417, %v1433
        %v1518 = vsel %vm1488, %v1419, %v1435
        %v1519 = vsel %vm1488, %v1421, %v1437
        %v1520 = vsel %vm1488, %v1423, %v1439
        %v1521 = vsel %vm1488, %v1393, %v1409
        %v1522 = vsel %vm1488, %v1395, %v1411
        %v1523 = vsel %vm1488, %v1397, %v1413
        %v1524 = vsel %vm1488, %v1399, %v1415
        %v1525 = vsel %vm1488, %v1401, %v1417
        %v1526 = vsel %vm1488, %v1403, %v1419
        %v1527 = vsel %vm1488, %v1405, %v1421
        %v1528 = vsel %vm1488, %v1407, %v1423
        %v1529 = vsel %vm1488, %v1377, %v1393
        %v1530 = vsel %vm1488, %v1379, %v1395
        %v1531 = vsel %vm1488, %v1381, %v1397
        %v1532 = vsel %vm1488, %v1383, %v1399
        %v1533 = vsel %vm1488, %v1385, %v1401
        %v1534 = vsel %vm1488, %v1387, %v1403
        %v1535 = vsel %vm1488, %v1389, %v1405
        %v1536 = vsel %vm1488, %v1391, %v1407
        %v1537 = vsel %vm1488, %v1361, %v1377
        %v1538 = vsel %vm1488, %v1363, %v1379
        %v1539 = vsel %vm1488, %v1365, %v1381
        %v1540 = vsel %vm1488, %v1367, %v1383
        %v1541 = vsel %vm1488, %v1369, %v1385
        %v1542 = vsel %vm1488, %v1371, %v1387
        %v1543 = vsel %vm1488, %v1373, %v1389
        %v1544 = vsel %vm1488, %v1375, %v1391
        %v1545 = vsel %vm1488, %v1473, %v1361
        %v1546 = vsel %vm1488, %v1475, %v1363
        %v1547 = vsel %vm1488, %v1477, %v1365
        %v1548 = vsel %vm1488, %v1479, %v1367
        %v1549 = vsel %vm1488, %v1481, %v1369
        %v1550 = vsel %vm1488, %v1483, %v1371
        %v1551 = vsel %vm1488, %v1485, %v1373
        %v1552 = vsel %vm1488, %v1487, %v1375
        %vm1553 = vcmp.lt.s32.totalorder %v549, 63
        %vm1554 = vcmp.lt.s32.totalorder %v550, 63
        %vm1555 = vcmp.lt.s32.totalorder %v551, 63
        %vm1556 = vcmp.lt.s32.totalorder %v552, 63
        %vm1557 = vcmp.lt.s32.totalorder %v553, 63
        %vm1558 = vcmp.lt.s32.totalorder %v554, 63
        %vm1559 = vcmp.lt.s32.totalorder %v555, 63
        %vm1560 = vcmp.lt.s32.totalorder %v556, 63
        %v1561 = vsel %vm1553, %v1537, 0.0
        %v1562 = vsel %vm1554, %v1529, 0.0
        %v1563 = vsel %vm1555, %v1521, 0.0
        %v1564 = vsel %vm1556, %v1513, 0.0
        %v1565 = vsel %vm1557, %v1505, 0.0
        %v1566 = vsel %vm1558, %v1497, 0.0
        %v1567 = vsel %vm1559, %v1489, 0.0
        %v1568 = vsel %vm1560, %v1545, 0.0
        %v1569 = vsel %vm1553, %v1538, 0.0
        %v1570 = vsel %vm1554, %v1530, 0.0
        %v1571 = vsel %vm1555, %v1522, 0.0
        %v1572 = vsel %vm1556, %v1514, 0.0
        %v1573 = vsel %vm1557, %v1506, 0.0
        %v1574 = vsel %vm1558, %v1498, 0.0
        %v1575 = vsel %vm1559, %v1490, 0.0
        %v1576 = vsel %vm1560, %v1546, 0.0
        %v1577 = vsel %vm1553, %v1539, 0.0
        %v1578 = vsel %vm1554, %v1531, 0.0
        %v1579 = vsel %vm1555, %v1523, 0.0
        %v1580 = vsel %vm1556, %v1515, 0.0
        %v1581 = vsel %vm1557, %v1507, 0.0
        %v1582 = vsel %vm1558, %v1499, 0.0
        %v1583 = vsel %vm1559, %v1491, 0.0
        %v1584 = vsel %vm1560, %v1547, 0.0
        %v1585 = vsel %vm1553, %v1540, 0.0
        %v1586 = vsel %vm1554, %v1532, 0.0
        %v1587 = vsel %vm1555, %v1524, 0.0
        %v1588 = vsel %vm1556, %v1516, 0.0
        %v1589 = vsel %vm1557, %v1508, 0.0
        %v1590 = vsel %vm1558, %v1500, 0.0
        %v1591 = vsel %vm1559, %v1492, 0.0
        %v1592 = vsel %vm1560, %v1548, 0.0
        %v1593 = vsel %vm1553, %v1541, 0.0
        %v1594 = vsel %vm1554, %v1533, 0.0
        %v1595 = vsel %vm1555, %v1525, 0.0
        %v1596 = vsel %vm1556, %v1517, 0.0
        %v1597 = vsel %vm1557, %v1509, 0.0
        %v1598 = vsel %vm1558, %v1501, 0.0
        %v1599 = vsel %vm1559, %v1493, 0.0
        %v1600 = vsel %vm1560, %v1549, 0.0
        %v1601 = vsel %vm1553, %v1542, 0.0
        %v1602 = vsel %vm1554, %v1534, 0.0
        %v1603 = vsel %vm1555, %v1526, 0.0
        %v1604 = vsel %vm1556, %v1518, 0.0
        %v1605 = vsel %vm1557, %v1510, 0.0
        %v1606 = vsel %vm1558, %v1502, 0.0
        %v1607 = vsel %vm1559, %v1494, 0.0
        %v1608 = vsel %vm1560, %v1550, 0.0
        %v1609 = vsel %vm1553, %v1543, 0.0
        %v1610 = vsel %vm1554, %v1535, 0.0
        %v1611 = vsel %vm1555, %v1527, 0.0
        %v1612 = vsel %vm1556, %v1519, 0.0
        %v1613 = vsel %vm1557, %v1511, 0.0
        %v1614 = vsel %vm1558, %v1503, 0.0
        %v1615 = vsel %vm1559, %v1495, 0.0
        %v1616 = vsel %vm1560, %v1551, 0.0
        %v1617 = vsel %vm1553, %v1544, 0.0
        %v1618 = vsel %vm1554, %v1536, 0.0
        %v1619 = vsel %vm1555, %v1528, 0.0
        %v1620 = vsel %vm1556, %v1520, 0.0
        %v1621 = vsel %vm1557, %v1512, 0.0
        %v1622 = vsel %vm1558, %v1504, 0.0
        %v1623 = vsel %vm1559, %v1496, 0.0
        %v1624 = vsel %vm1560, %v1552, 0.0
        %v1625 = vld [vmem:[%s3] sm:$0xff]
        %v1626 = vld [vmem:[%s3 + $0x8] sm:$0xff]
        %v1627 = vld [vmem:[%s3 + $0x10] sm:$0xff]
        %v1628 = vld [vmem:[%s3 + $0x18] sm:$0xff]
        %v1629 = vld [vmem:[%s3 + $0x20] sm:$0xff]
        %v1630 = vld [vmem:[%s3 + $0x28] sm:$0xff]
        %v1631 = vld [vmem:[%s3 + $0x30] sm:$0xff]
        %v1632 = vld [vmem:[%s3 + $0x38] sm:$0xff]
        %v1633 = vld [vmem:[%s3 + $0x40] sm:$0xff]
        %v1634 = vld [vmem:[%s3 + $0x48] sm:$0xff]
        %v1635 = vld [vmem:[%s3 + $0x50] sm:$0xff]
        %v1636 = vld [vmem:[%s3 + $0x58] sm:$0xff]
        %v1637 = vld [vmem:[%s3 + $0x60] sm:$0xff]
        %v1638 = vld [vmem:[%s3 + $0x68] sm:$0xff]
        %v1639 = vld [vmem:[%s3 + $0x70] sm:$0xff]
        %v1640 = vld [vmem:[%s3 + $0x78] sm:$0xff]
        %v1641 = vld [vmem:[%s4] sm:$0xff]
        %v1642 = vld [vmem:[%s4 + $0x8] sm:$0xff]
        %v1643 = vld [vmem:[%s4 + $0x10] sm:$0xff]
        %v1644 = vld [vmem:[%s4 + $0x18] sm:$0xff]
        %v1645 = vld [vmem:[%s4 + $0x20] sm:$0xff]
        %v1646 = vld [vmem:[%s4 + $0x28] sm:$0xff]
        %v1647 = vld [vmem:[%s4 + $0x30] sm:$0xff]
        %v1648 = vld [vmem:[%s4 + $0x38] sm:$0xff]
        %1650 = vset.pattern.permute.xlu0 0
        %1651 = vperm.xlu0 %1650, %v1641
        %v1652 = vpop.permute.xlu0 %1651
        %1655 = vset.pattern.permute.xlu0 0
        %1656 = vperm.xlu0 %1655, %v1642
        %v1657 = vpop.permute.xlu0 %1656
        %1660 = vset.pattern.permute.xlu0 0
        %1661 = vperm.xlu0 %1660, %v1643
        %v1662 = vpop.permute.xlu0 %1661
        %1665 = vset.pattern.permute.xlu0 0
        %1666 = vperm.xlu0 %1665, %v1644
        %v1667 = vpop.permute.xlu0 %1666
        %1670 = vset.pattern.permute.xlu0 0
        %1671 = vperm.xlu0 %1670, %v1645
        %v1672 = vpop.permute.xlu0 %1671
        %1675 = vset.pattern.permute.xlu0 0
        %1676 = vperm.xlu0 %1675, %v1646
        %v1677 = vpop.permute.xlu0 %1676
        %1680 = vset.pattern.permute.xlu0 0
        %1681 = vperm.xlu0 %1680, %v1647
        %v1682 = vpop.permute.xlu0 %1681
        %1685 = vset.pattern.permute.xlu0 0
        %1686 = vperm.xlu0 %1685, %v1648
        %v1687 = vpop.permute.xlu0 %1686
        %vm1689 = vcmask 523264
        %v1691 = vsel %vm1689, %v1626, 0
        %v1694 = vsel %vm1689, %v1628, 0
        %v1697 = vsel %vm1689, %v1630, 0
        %v1700 = vsel %vm1689, %v1632, 0
        %v1703 = vsel %vm1689, %v1634, 0
        %v1706 = vsel %vm1689, %v1636, 0
        %v1709 = vsel %vm1689, %v1638, 0
        %v1712 = vsel %vm1689, %v1640, 0
        %1714 = vmatpush.msra.mxu0 %v1087
        %1715 = vmatpush.msra.mxu0 %v1079
        %1716 = vmatpush.msra.mxu0 %v1071
        %1717 = vmatpush.msra.mxu0 %v1063
        %1718 = vmatpush.msra.mxu0 %v1055
        %1719 = vmatpush.msra.mxu0 %v1047
        %1720 = vmatpush.msra.mxu0 %v1039
        %1721 = vmatpush.msra.mxu0 %v1031
        %1722 = vmatpush.msra.mxu0 %v1352
        %1723 = vmatpush.msra.mxu0 %v1344
        %1724 = vmatpush.msra.mxu0 %v1336
        %1725 = vmatpush.msra.mxu0 %v1328
        %1726 = vmatpush.msra.mxu0 %v1320
        %1727 = vmatpush.msra.mxu0 %v1312
        %1728 = vmatpush.msra.mxu0 %v1304
        %1729 = vmatpush.msra.mxu0 %v1296
        %1730 = vmatmul.f32.gmra.mxu0 %v1625
        %v1731 = vpop.f32.mrf.mxu0
        %v1732 = vadd.f32 %v1652, %v1731
        %1733 = vmatmul.f32.gmra.mxu0 %v1627
        %v1734 = vpop.f32.mrf.mxu0
        %v1735 = vadd.f32 %v1657, %v1734
        %1736 = vmatmul.f32.gmra.mxu0 %v1629
        %v1737 = vpop.f32.mrf.mxu0
        %v1738 = vadd.f32 %v1662, %v1737
        %1739 = vmatmul.f32.gmra.mxu0 %v1631
        %v1740 = vpop.f32.mrf.mxu0
        %v1741 = vadd.f32 %v1667, %v1740
        %1742 = vmatmul.f32.gmra.mxu0 %v1633
        %v1743 = vpop.f32.mrf.mxu0
        %v1744 = vadd.f32 %v1672, %v1743
        %1745 = vmatmul.f32.gmra.mxu0 %v1635
        %v1746 = vpop.f32.mrf.mxu0
        %v1747 = vadd.f32 %v1677, %v1746
        %1748 = vmatmul.f32.gmra.mxu0 %v1637
        %v1749 = vpop.f32.mrf.mxu0
        %v1750 = vadd.f32 %v1682, %v1749
        %1751 = vmatmul.f32.gmra.mxu0 %v1639
        %v1752 = vpop.f32.mrf.mxu0
        %v1753 = vadd.f32 %v1687, %v1752
        %1754 = vdwg.mxu0
        %1755 = vmatpush.msra.mxu0 0.0
        %1756 = vmatpush.msra.mxu0 0.0
        %1757 = vmatpush.msra.mxu0 0.0
        %1758 = vmatpush.msra.mxu0 0.0
        %1759 = vmatpush.msra.mxu0 0.0
        %1760 = vmatpush.msra.mxu0 0.0
        %1761 = vmatpush.msra.mxu0 0.0
        %1762 = vmatpush.msra.mxu0 0.0
        %1763 = vmatpush.msra.mxu0 %v1617
        %1764 = vmatpush.msra.mxu0 %v1609
        %1765 = vmatpush.msra.mxu0 %v1601
        %1766 = vmatpush.msra.mxu0 %v1593
        %1767 = vmatpush.msra.mxu0 %v1585
        %1768 = vmatpush.msra.mxu0 %v1577
        %1769 = vmatpush.msra.mxu0 %v1569
        %1770 = vmatpush.msra.mxu0 %v1561
        %1771 = vmatmul.f32.gmra.mxu0 %v1691
        %v1772 = vpop.f32.mrf.mxu0
        %v1773 = vadd.f32 %v1732, %v1772
        %1774 = vmatmul.f32.gmra.mxu0 %v1694
        %v1775 = vpop.f32.mrf.mxu0
        %v1776 = vadd.f32 %v1735, %v1775
        %1777 = vmatmul.f32.gmra.mxu0 %v1697
        %v1778 = vpop.f32.mrf.mxu0
        %v1779 = vadd.f32 %v1738, %v1778
        %1780 = vmatmul.f32.gmra.mxu0 %v1700
        %v1781 = vpop.f32.mrf.mxu0
        %v1782 = vadd.f32 %v1741, %v1781
        %1783 = vmatmul.f32.gmra.mxu0 %v1703
        %v1784 = vpop.f32.mrf.mxu0
        %v1785 = vadd.f32 %v1744, %v1784
        %1786 = vmatmul.f32.gmra.mxu0 %v1706
        %v1787 = vpop.f32.mrf.mxu0
        %v1788 = vadd.f32 %v1747, %v1787
        %1789 = vmatmul.f32.gmra.mxu0 %v1709
        %v1790 = vpop.f32.mrf.mxu0
        %v1791 = vadd.f32 %v1750, %v1790
        %1792 = vmatmul.f32.gmra.mxu0 %v1712
        %v1793 = vpop.f32.mrf.mxu0
        %v1794 = vadd.f32 %v1753, %v1793
        %1795 = vdwg.mxu0
        %1796 = vmatpush.msra.mxu0 %v1088
        %1797 = vmatpush.msra.mxu0 %v1080
        %1798 = vmatpush.msra.mxu0 %v1072
        %1799 = vmatpush.msra.mxu0 %v1064
        %1800 = vmatpush.msra.mxu0 %v1056
        %1801 = vmatpush.msra.mxu0 %v1048
        %1802 = vmatpush.msra.mxu0 %v1040
        %1803 = vmatpush.msra.mxu0 %v1032
        %1804 = vmatpush.msra.mxu0 %v1353
        %1805 = vmatpush.msra.mxu0 %v1345
        %1806 = vmatpush.msra.mxu0 %v1337
        %1807 = vmatpush.msra.mxu0 %v1329
        %1808 = vmatpush.msra.mxu0 %v1321
        %1809 = vmatpush.msra.mxu0 %v1313
        %1810 = vmatpush.msra.mxu0 %v1305
        %1811 = vmatpush.msra.mxu0 %v1297
        %1812 = vmatmul.f32.gmra.mxu0 %v1625
        %v1813 = vpop.f32.mrf.mxu0
        %v1814 = vadd.f32 %v1652, %v1813
        %1815 = vmatmul.f32.gmra.mxu0 %v1627
        %v1816 = vpop.f32.mrf.mxu0
        %v1817 = vadd.f32 %v1657, %v1816
        %1818 = vmatmul.f32.gmra.mxu0 %v1629
        %v1819 = vpop.f32.mrf.mxu0
        %v1820 = vadd.f32 %v1662, %v1819
        %1821 = vmatmul.f32.gmra.mxu0 %v1631
        %v1822 = vpop.f32.mrf.mxu0
        %v1823 = vadd.f32 %v1667, %v1822
        %1824 = vmatmul.f32.gmra.mxu0 %v1633
        %v1825 = vpop.f32.mrf.mxu0
        %v1826 = vadd.f32 %v1672, %v1825
        %1827 = vmatmul.f32.gmra.mxu0 %v1635
        %v1828 = vpop.f32.mrf.mxu0
        %v1829 = vadd.f32 %v1677, %v1828
        %1830 = vmatmul.f32.gmra.mxu0 %v1637
        %v1831 = vpop.f32.mrf.mxu0
        %v1832 = vadd.f32 %v1682, %v1831
        %1833 = vmatmul.f32.gmra.mxu0 %v1639
        %v1834 = vpop.f32.mrf.mxu0
        %v1835 = vadd.f32 %v1687, %v1834
        %1836 = vdwg.mxu0
        %1837 = vmatpush.msra.mxu0 0.0
        %1838 = vmatpush.msra.mxu0 0.0
        %1839 = vmatpush.msra.mxu0 0.0
        %1840 = vmatpush.msra.mxu0 0.0
        %1841 = vmatpush.msra.mxu0 0.0
        %1842 = vmatpush.msra.mxu0 0.0
        %1843 = vmatpush.msra.mxu0 0.0
        %1844 = vmatpush.msra.mxu0 0.0
        %1845 = vmatpush.msra.mxu0 %v1618
        %1846 = vmatpush.msra.mxu0 %v1610
        %1847 = vmatpush.msra.mxu0 %v1602
        %1848 = vmatpush.msra.mxu0 %v1594
        %1849 = vmatpush.msra.mxu0 %v1586
        %1850 = vmatpush.msra.mxu0 %v1578
        %1851 = vmatpush.msra.mxu0 %v1570
        %1852 = vmatpush.msra.mxu0 %v1562
        %1853 = vmatmul.f32.gmra.mxu0 %v1691
        %v1854 = vpop.f32.mrf.mxu0
        %v1855 = vadd.f32 %v1814, %v1854
        %1856 = vmatmul.f32.gmra.mxu0 %v1694
        %v1857 = vpop.f32.mrf.mxu0
        %v1858 = vadd.f32 %v1817, %v1857
        %1859 = vmatmul.f32.gmra.mxu0 %v1697
        %v1860 = vpop.f32.mrf.mxu0
        %v1861 = vadd.f32 %v1820, %v1860
        %1862 = vmatmul.f32.gmra.mxu0 %v1700
        %v1863 = vpop.f32.mrf.mxu0
        %v1864 = vadd.f32 %v1823, %v1863
        %1865 = vmatmul.f32.gmra.mxu0 %v1703
        %v1866 = vpop.f32.mrf.mxu0
        %v1867 = vadd.f32 %v1826, %v1866
        %1868 = vmatmul.f32.gmra.mxu0 %v1706
        %v1869 = vpop.f32.mrf.mxu0
        %v1870 = vadd.f32 %v1829, %v1869
        %1871 = vmatmul.f32.gmra.mxu0 %v1709
        %v1872 = vpop.f32.mrf.mxu0
        %v1873 = vadd.f32 %v1832, %v1872
        %1874 = vmatmul.f32.gmra.mxu0 %v1712
        %v1875 = vpop.f32.mrf.mxu0
        %v1876 = vadd.f32 %v1835, %v1875
        %1877 = vdwg.mxu0
        %1878 = vmatpush.msra.mxu0 %v1089
        %1879 = vmatpush.msra.mxu0 %v1081
        %1880 = vmatpush.msra.mxu0 %v1073
        %1881 = vmatpush.msra.mxu0 %v1065
        %1882 = vmatpush.msra.mxu0 %v1057
        %1883 = vmatpush.msra.mxu0 %v1049
        %1884 = vmatpush.msra.mxu0 %v1041
        %1885 = vmatpush.msra.mxu0 %v1033
        %1886 = vmatpush.msra.mxu0 %v1354
        %1887 = vmatpush.msra.mxu0 %v1346
        %1888 = vmatpush.msra.mxu0 %v1338
        %1889 = vmatpush.msra.mxu0 %v1330
        %1890 = vmatpush.msra.mxu0 %v1322
        %1891 = vmatpush.msra.mxu0 %v1314
        %1892 = vmatpush.msra.mxu0 %v1306
        %1893 = vmatpush.msra.mxu0 %v1298
        %1894 = vmatmul.f32.gmra.mxu0 %v1625
        %v1895 = vpop.f32.mrf.mxu0
        %v1896 = vadd.f32 %v1652, %v1895
        %1897 = vmatmul.f32.gmra.mxu0 %v1627
        %v1898 = vpop.f32.mrf.mxu0
        %v1899 = vadd.f32 %v1657, %v1898
        %1900 = vmatmul.f32.gmra.mxu0 %v1629
        %v1901 = vpop.f32.mrf.mxu0
        %v1902 = vadd.f32 %v1662, %v1901
        %1903 = vmatmul.f32.gmra.mxu0 %v1631
        %v1904 = vpop.f32.mrf.mxu0
        %v1905 = vadd.f32 %v1667, %v1904
        %1906 = vmatmul.f32.gmra.mxu0 %v1633
        %v1907 = vpop.f32.mrf.mxu0
        %v1908 = vadd.f32 %v1672, %v1907
        %1909 = vmatmul.f32.gmra.mxu0 %v1635
        %v1910 = vpop.f32.mrf.mxu0
        %v1911 = vadd.f32 %v1677, %v1910
        %1912 = vmatmul.f32.gmra.mxu0 %v1637
        %v1913 = vpop.f32.mrf.mxu0
        %v1914 = vadd.f32 %v1682, %v1913
        %1915 = vmatmul.f32.gmra.mxu0 %v1639
        %v1916 = vpop.f32.mrf.mxu0
        %v1917 = vadd.f32 %v1687, %v1916
        %1918 = vdwg.mxu0
        %1919 = vmatpush.msra.mxu0 0.0
        %1920 = vmatpush.msra.mxu0 0.0
        %1921 = vmatpush.msra.mxu0 0.0
        %1922 = vmatpush.msra.mxu0 0.0
        %1923 = vmatpush.msra.mxu0 0.0
        %1924 = vmatpush.msra.mxu0 0.0
        %1925 = vmatpush.msra.mxu0 0.0
        %1926 = vmatpush.msra.mxu0 0.0
        %1927 = vmatpush.msra.mxu0 %v1619
        %1928 = vmatpush.msra.mxu0 %v1611
        %1929 = vmatpush.msra.mxu0 %v1603
        %1930 = vmatpush.msra.mxu0 %v1595
        %1931 = vmatpush.msra.mxu0 %v1587
        %1932 = vmatpush.msra.mxu0 %v1579
        %1933 = vmatpush.msra.mxu0 %v1571
        %1934 = vmatpush.msra.mxu0 %v1563
        %1935 = vmatmul.f32.gmra.mxu0 %v1691
        %v1936 = vpop.f32.mrf.mxu0
        %v1937 = vadd.f32 %v1896, %v1936
        %1938 = vmatmul.f32.gmra.mxu0 %v1694
        %v1939 = vpop.f32.mrf.mxu0
        %v1940 = vadd.f32 %v1899, %v1939
        %1941 = vmatmul.f32.gmra.mxu0 %v1697
        %v1942 = vpop.f32.mrf.mxu0
        %v1943 = vadd.f32 %v1902, %v1942
        %1944 = vmatmul.f32.gmra.mxu0 %v1700
        %v1945 = vpop.f32.mrf.mxu0
        %v1946 = vadd.f32 %v1905, %v1945
        %1947 = vmatmul.f32.gmra.mxu0 %v1703
        %v1948 = vpop.f32.mrf.mxu0
        %v1949 = vadd.f32 %v1908, %v1948
        %1950 = vmatmul.f32.gmra.mxu0 %v1706
        %v1951 = vpop.f32.mrf.mxu0
        %v1952 = vadd.f32 %v1911, %v1951
        %1953 = vmatmul.f32.gmra.mxu0 %v1709
        %v1954 = vpop.f32.mrf.mxu0
        %v1955 = vadd.f32 %v1914, %v1954
        %1956 = vmatmul.f32.gmra.mxu0 %v1712
        %v1957 = vpop.f32.mrf.mxu0
        %v1958 = vadd.f32 %v1917, %v1957
        %1959 = vdwg.mxu0
        %1960 = vmatpush.msra.mxu0 %v1090
        %1961 = vmatpush.msra.mxu0 %v1082
        %1962 = vmatpush.msra.mxu0 %v1074
        %1963 = vmatpush.msra.mxu0 %v1066
        %1964 = vmatpush.msra.mxu0 %v1058
        %1965 = vmatpush.msra.mxu0 %v1050
        %1966 = vmatpush.msra.mxu0 %v1042
        %1967 = vmatpush.msra.mxu0 %v1034
        %1968 = vmatpush.msra.mxu0 %v1355
        %1969 = vmatpush.msra.mxu0 %v1347
        %1970 = vmatpush.msra.mxu0 %v1339
        %1971 = vmatpush.msra.mxu0 %v1331
        %1972 = vmatpush.msra.mxu0 %v1323
        %1973 = vmatpush.msra.mxu0 %v1315
        %1974 = vmatpush.msra.mxu0 %v1307
        %1975 = vmatpush.msra.mxu0 %v1299
        %1976 = vmatmul.f32.gmra.mxu0 %v1625
        %v1977 = vpop.f32.mrf.mxu0
        %v1978 = vadd.f32 %v1652, %v1977
        %1979 = vmatmul.f32.gmra.mxu0 %v1627
        %v1980 = vpop.f32.mrf.mxu0
        %v1981 = vadd.f32 %v1657, %v1980
        %1982 = vmatmul.f32.gmra.mxu0 %v1629
        %v1983 = vpop.f32.mrf.mxu0
        %v1984 = vadd.f32 %v1662, %v1983
        %1985 = vmatmul.f32.gmra.mxu0 %v1631
        %v1986 = vpop.f32.mrf.mxu0
        %v1987 = vadd.f32 %v1667, %v1986
        %1988 = vmatmul.f32.gmra.mxu0 %v1633
        %v1989 = vpop.f32.mrf.mxu0
        %v1990 = vadd.f32 %v1672, %v1989
        %1991 = vmatmul.f32.gmra.mxu0 %v1635
        %v1992 = vpop.f32.mrf.mxu0
        %v1993 = vadd.f32 %v1677, %v1992
        %1994 = vmatmul.f32.gmra.mxu0 %v1637
        %v1995 = vpop.f32.mrf.mxu0
        %v1996 = vadd.f32 %v1682, %v1995
        %1997 = vmatmul.f32.gmra.mxu0 %v1639
        %v1998 = vpop.f32.mrf.mxu0
        %v1999 = vadd.f32 %v1687, %v1998
        %2000 = vdwg.mxu0
        %2001 = vmatpush.msra.mxu0 0.0
        %2002 = vmatpush.msra.mxu0 0.0
        %2003 = vmatpush.msra.mxu0 0.0
        %2004 = vmatpush.msra.mxu0 0.0
        %2005 = vmatpush.msra.mxu0 0.0
        %2006 = vmatpush.msra.mxu0 0.0
        %2007 = vmatpush.msra.mxu0 0.0
        %2008 = vmatpush.msra.mxu0 0.0
        %2009 = vmatpush.msra.mxu0 %v1620
        %2010 = vmatpush.msra.mxu0 %v1612
        %2011 = vmatpush.msra.mxu0 %v1604
        %2012 = vmatpush.msra.mxu0 %v1596
        %2013 = vmatpush.msra.mxu0 %v1588
        %2014 = vmatpush.msra.mxu0 %v1580
        %2015 = vmatpush.msra.mxu0 %v1572
        %2016 = vmatpush.msra.mxu0 %v1564
        %2017 = vmatmul.f32.gmra.mxu0 %v1691
        %v2018 = vpop.f32.mrf.mxu0
        %v2019 = vadd.f32 %v1978, %v2018
        %2020 = vmatmul.f32.gmra.mxu0 %v1694
        %v2021 = vpop.f32.mrf.mxu0
        %v2022 = vadd.f32 %v1981, %v2021
        %2023 = vmatmul.f32.gmra.mxu0 %v1697
        %v2024 = vpop.f32.mrf.mxu0
        %v2025 = vadd.f32 %v1984, %v2024
        %2026 = vmatmul.f32.gmra.mxu0 %v1700
        %v2027 = vpop.f32.mrf.mxu0
        %v2028 = vadd.f32 %v1987, %v2027
        %2029 = vmatmul.f32.gmra.mxu0 %v1703
        %v2030 = vpop.f32.mrf.mxu0
        %v2031 = vadd.f32 %v1990, %v2030
        %2032 = vmatmul.f32.gmra.mxu0 %v1706
        %v2033 = vpop.f32.mrf.mxu0
        %v2034 = vadd.f32 %v1993, %v2033
        %2035 = vmatmul.f32.gmra.mxu0 %v1709
        %v2036 = vpop.f32.mrf.mxu0
        %v2037 = vadd.f32 %v1996, %v2036
        %2038 = vmatmul.f32.gmra.mxu0 %v1712
        %v2039 = vpop.f32.mrf.mxu0
        %v2040 = vadd.f32 %v1999, %v2039
        %2041 = vdwg.mxu0
        %2042 = vmatpush.msra.mxu0 %v1091
        %2043 = vmatpush.msra.mxu0 %v1083
        %2044 = vmatpush.msra.mxu0 %v1075
        %2045 = vmatpush.msra.mxu0 %v1067
        %2046 = vmatpush.msra.mxu0 %v1059
        %2047 = vmatpush.msra.mxu0 %v1051
        %2048 = vmatpush.msra.mxu0 %v1043
        %2049 = vmatpush.msra.mxu0 %v1035
        %2050 = vmatpush.msra.mxu0 %v1356
        %2051 = vmatpush.msra.mxu0 %v1348
        %2052 = vmatpush.msra.mxu0 %v1340
        %2053 = vmatpush.msra.mxu0 %v1332
        %2054 = vmatpush.msra.mxu0 %v1324
        %2055 = vmatpush.msra.mxu0 %v1316
        %2056 = vmatpush.msra.mxu0 %v1308
        %2057 = vmatpush.msra.mxu0 %v1300
        %2058 = vmatmul.f32.gmra.mxu0 %v1625
        %v2059 = vpop.f32.mrf.mxu0
        %v2060 = vadd.f32 %v1652, %v2059
        %2061 = vmatmul.f32.gmra.mxu0 %v1627
        %v2062 = vpop.f32.mrf.mxu0
        %v2063 = vadd.f32 %v1657, %v2062
        %2064 = vmatmul.f32.gmra.mxu0 %v1629
        %v2065 = vpop.f32.mrf.mxu0
        %v2066 = vadd.f32 %v1662, %v2065
        %2067 = vmatmul.f32.gmra.mxu0 %v1631
        %v2068 = vpop.f32.mrf.mxu0
        %v2069 = vadd.f32 %v1667, %v2068
        %2070 = vmatmul.f32.gmra.mxu0 %v1633
        %v2071 = vpop.f32.mrf.mxu0
        %v2072 = vadd.f32 %v1672, %v2071
        %2073 = vmatmul.f32.gmra.mxu0 %v1635
        %v2074 = vpop.f32.mrf.mxu0
        %v2075 = vadd.f32 %v1677, %v2074
        %2076 = vmatmul.f32.gmra.mxu0 %v1637
        %v2077 = vpop.f32.mrf.mxu0
        %v2078 = vadd.f32 %v1682, %v2077
        %2079 = vmatmul.f32.gmra.mxu0 %v1639
        %v2080 = vpop.f32.mrf.mxu0
        %v2081 = vadd.f32 %v1687, %v2080
        %2082 = vdwg.mxu0
        %2083 = vmatpush.msra.mxu0 0.0
        %2084 = vmatpush.msra.mxu0 0.0
        %2085 = vmatpush.msra.mxu0 0.0
        %2086 = vmatpush.msra.mxu0 0.0
        %2087 = vmatpush.msra.mxu0 0.0
        %2088 = vmatpush.msra.mxu0 0.0
        %2089 = vmatpush.msra.mxu0 0.0
        %2090 = vmatpush.msra.mxu0 0.0
        %2091 = vmatpush.msra.mxu0 %v1621
        %2092 = vmatpush.msra.mxu0 %v1613
        %2093 = vmatpush.msra.mxu0 %v1605
        %2094 = vmatpush.msra.mxu0 %v1597
        %2095 = vmatpush.msra.mxu0 %v1589
        %2096 = vmatpush.msra.mxu0 %v1581
        %2097 = vmatpush.msra.mxu0 %v1573
        %2098 = vmatpush.msra.mxu0 %v1565
        %2099 = vmatmul.f32.gmra.mxu0 %v1691
        %v2100 = vpop.f32.mrf.mxu0
        %v2101 = vadd.f32 %v2060, %v2100
        %2102 = vmatmul.f32.gmra.mxu0 %v1694
        %v2103 = vpop.f32.mrf.mxu0
        %v2104 = vadd.f32 %v2063, %v2103
        %2105 = vmatmul.f32.gmra.mxu0 %v1697
        %v2106 = vpop.f32.mrf.mxu0
        %v2107 = vadd.f32 %v2066, %v2106
        %2108 = vmatmul.f32.gmra.mxu0 %v1700
        %v2109 = vpop.f32.mrf.mxu0
        %v2110 = vadd.f32 %v2069, %v2109
        %2111 = vmatmul.f32.gmra.mxu0 %v1703
        %v2112 = vpop.f32.mrf.mxu0
        %v2113 = vadd.f32 %v2072, %v2112
        %2114 = vmatmul.f32.gmra.mxu0 %v1706
        %v2115 = vpop.f32.mrf.mxu0
        %v2116 = vadd.f32 %v2075, %v2115
        %2117 = vmatmul.f32.gmra.mxu0 %v1709
        %v2118 = vpop.f32.mrf.mxu0
        %v2119 = vadd.f32 %v2078, %v2118
        %2120 = vmatmul.f32.gmra.mxu0 %v1712
        %v2121 = vpop.f32.mrf.mxu0
        %v2122 = vadd.f32 %v2081, %v2121
        %2123 = vdwg.mxu0
        %2124 = vmatpush.msra.mxu0 %v1092
        %2125 = vmatpush.msra.mxu0 %v1084
        %2126 = vmatpush.msra.mxu0 %v1076
        %2127 = vmatpush.msra.mxu0 %v1068
        %2128 = vmatpush.msra.mxu0 %v1060
        %2129 = vmatpush.msra.mxu0 %v1052
        %2130 = vmatpush.msra.mxu0 %v1044
        %2131 = vmatpush.msra.mxu0 %v1036
        %2132 = vmatpush.msra.mxu0 %v1357
        %2133 = vmatpush.msra.mxu0 %v1349
        %2134 = vmatpush.msra.mxu0 %v1341
        %2135 = vmatpush.msra.mxu0 %v1333
        %2136 = vmatpush.msra.mxu0 %v1325
        %2137 = vmatpush.msra.mxu0 %v1317
        %2138 = vmatpush.msra.mxu0 %v1309
        %2139 = vmatpush.msra.mxu0 %v1301
        %2140 = vmatmul.f32.gmra.mxu0 %v1625
        %v2141 = vpop.f32.mrf.mxu0
        %v2142 = vadd.f32 %v1652, %v2141
        %2143 = vmatmul.f32.gmra.mxu0 %v1627
        %v2144 = vpop.f32.mrf.mxu0
        %v2145 = vadd.f32 %v1657, %v2144
        %2146 = vmatmul.f32.gmra.mxu0 %v1629
        %v2147 = vpop.f32.mrf.mxu0
        %v2148 = vadd.f32 %v1662, %v2147
        %2149 = vmatmul.f32.gmra.mxu0 %v1631
        %v2150 = vpop.f32.mrf.mxu0
        %v2151 = vadd.f32 %v1667, %v2150
        %2152 = vmatmul.f32.gmra.mxu0 %v1633
        %v2153 = vpop.f32.mrf.mxu0
        %v2154 = vadd.f32 %v1672, %v2153
        %2155 = vmatmul.f32.gmra.mxu0 %v1635
        %v2156 = vpop.f32.mrf.mxu0
        %v2157 = vadd.f32 %v1677, %v2156
        %2158 = vmatmul.f32.gmra.mxu0 %v1637
        %v2159 = vpop.f32.mrf.mxu0
        %v2160 = vadd.f32 %v1682, %v2159
        %2161 = vmatmul.f32.gmra.mxu0 %v1639
        %v2162 = vpop.f32.mrf.mxu0
        %v2163 = vadd.f32 %v1687, %v2162
        %2164 = vdwg.mxu0
        %2165 = vmatpush.msra.mxu0 0.0
        %2166 = vmatpush.msra.mxu0 0.0
        %2167 = vmatpush.msra.mxu0 0.0
        %2168 = vmatpush.msra.mxu0 0.0
        %2169 = vmatpush.msra.mxu0 0.0
        %2170 = vmatpush.msra.mxu0 0.0
        %2171 = vmatpush.msra.mxu0 0.0
        %2172 = vmatpush.msra.mxu0 0.0
        %2173 = vmatpush.msra.mxu0 %v1622
        %2174 = vmatpush.msra.mxu0 %v1614
        %2175 = vmatpush.msra.mxu0 %v1606
        %2176 = vmatpush.msra.mxu0 %v1598
        %2177 = vmatpush.msra.mxu0 %v1590
        %2178 = vmatpush.msra.mxu0 %v1582
        %2179 = vmatpush.msra.mxu0 %v1574
        %2180 = vmatpush.msra.mxu0 %v1566
        %2181 = vmatmul.f32.gmra.mxu0 %v1691
        %v2182 = vpop.f32.mrf.mxu0
        %v2183 = vadd.f32 %v2142, %v2182
        %2184 = vmatmul.f32.gmra.mxu0 %v1694
        %v2185 = vpop.f32.mrf.mxu0
        %v2186 = vadd.f32 %v2145, %v2185
        %2187 = vmatmul.f32.gmra.mxu0 %v1697
        %v2188 = vpop.f32.mrf.mxu0
        %v2189 = vadd.f32 %v2148, %v2188
        %2190 = vmatmul.f32.gmra.mxu0 %v1700
        %v2191 = vpop.f32.mrf.mxu0
        %v2192 = vadd.f32 %v2151, %v2191
        %2193 = vmatmul.f32.gmra.mxu0 %v1703
        %v2194 = vpop.f32.mrf.mxu0
        %v2195 = vadd.f32 %v2154, %v2194
        %2196 = vmatmul.f32.gmra.mxu0 %v1706
        %v2197 = vpop.f32.mrf.mxu0
        %v2198 = vadd.f32 %v2157, %v2197
        %2199 = vmatmul.f32.gmra.mxu0 %v1709
        %v2200 = vpop.f32.mrf.mxu0
        %v2201 = vadd.f32 %v2160, %v2200
        %2202 = vmatmul.f32.gmra.mxu0 %v1712
        %v2203 = vpop.f32.mrf.mxu0
        %v2204 = vadd.f32 %v2163, %v2203
        %2205 = vdwg.mxu0
        %2206 = vmatpush.msra.mxu0 %v1093
        %2207 = vmatpush.msra.mxu0 %v1085
        %2208 = vmatpush.msra.mxu0 %v1077
        %2209 = vmatpush.msra.mxu0 %v1069
        %2210 = vmatpush.msra.mxu0 %v1061
        %2211 = vmatpush.msra.mxu0 %v1053
        %2212 = vmatpush.msra.mxu0 %v1045
        %2213 = vmatpush.msra.mxu0 %v1037
        %2214 = vmatpush.msra.mxu0 %v1358
        %2215 = vmatpush.msra.mxu0 %v1350
        %2216 = vmatpush.msra.mxu0 %v1342
        %2217 = vmatpush.msra.mxu0 %v1334
        %2218 = vmatpush.msra.mxu0 %v1326
        %2219 = vmatpush.msra.mxu0 %v1318
        %2220 = vmatpush.msra.mxu0 %v1310
        %2221 = vmatpush.msra.mxu0 %v1302
        %2222 = vmatmul.f32.gmra.mxu0 %v1625
        %v2223 = vpop.f32.mrf.mxu0
        %v2224 = vadd.f32 %v1652, %v2223
        %2225 = vmatmul.f32.gmra.mxu0 %v1627
        %v2226 = vpop.f32.mrf.mxu0
        %v2227 = vadd.f32 %v1657, %v2226
        %2228 = vmatmul.f32.gmra.mxu0 %v1629
        %v2229 = vpop.f32.mrf.mxu0
        %v2230 = vadd.f32 %v1662, %v2229
        %2231 = vmatmul.f32.gmra.mxu0 %v1631
        %v2232 = vpop.f32.mrf.mxu0
        %v2233 = vadd.f32 %v1667, %v2232
        %2234 = vmatmul.f32.gmra.mxu0 %v1633
        %v2235 = vpop.f32.mrf.mxu0
        %v2236 = vadd.f32 %v1672, %v2235
        %2237 = vmatmul.f32.gmra.mxu0 %v1635
        %v2238 = vpop.f32.mrf.mxu0
        %v2239 = vadd.f32 %v1677, %v2238
        %2240 = vmatmul.f32.gmra.mxu0 %v1637
        %v2241 = vpop.f32.mrf.mxu0
        %v2242 = vadd.f32 %v1682, %v2241
        %2243 = vmatmul.f32.gmra.mxu0 %v1639
        %v2244 = vpop.f32.mrf.mxu0
        %v2245 = vadd.f32 %v1687, %v2244
        %2246 = vdwg.mxu0
        %2247 = vmatpush.msra.mxu0 0.0
        %2248 = vmatpush.msra.mxu0 0.0
        %2249 = vmatpush.msra.mxu0 0.0
        %2250 = vmatpush.msra.mxu0 0.0
        %2251 = vmatpush.msra.mxu0 0.0
        %2252 = vmatpush.msra.mxu0 0.0
        %2253 = vmatpush.msra.mxu0 0.0
        %2254 = vmatpush.msra.mxu0 0.0
        %2255 = vmatpush.msra.mxu0 %v1623
        %2256 = vmatpush.msra.mxu0 %v1615
        %2257 = vmatpush.msra.mxu0 %v1607
        %2258 = vmatpush.msra.mxu0 %v1599
        %2259 = vmatpush.msra.mxu0 %v1591
        %2260 = vmatpush.msra.mxu0 %v1583
        %2261 = vmatpush.msra.mxu0 %v1575
        %2262 = vmatpush.msra.mxu0 %v1567
        %2263 = vmatmul.f32.gmra.mxu0 %v1691
        %v2264 = vpop.f32.mrf.mxu0
        %v2265 = vadd.f32 %v2224, %v2264
        %2266 = vmatmul.f32.gmra.mxu0 %v1694
        %v2267 = vpop.f32.mrf.mxu0
        %v2268 = vadd.f32 %v2227, %v2267
        %2269 = vmatmul.f32.gmra.mxu0 %v1697
        %v2270 = vpop.f32.mrf.mxu0
        %v2271 = vadd.f32 %v2230, %v2270
        %2272 = vmatmul.f32.gmra.mxu0 %v1700
        %v2273 = vpop.f32.mrf.mxu0
        %v2274 = vadd.f32 %v2233, %v2273
        %2275 = vmatmul.f32.gmra.mxu0 %v1703
        %v2276 = vpop.f32.mrf.mxu0
        %v2277 = vadd.f32 %v2236, %v2276
        %2278 = vmatmul.f32.gmra.mxu0 %v1706
        %v2279 = vpop.f32.mrf.mxu0
        %v2280 = vadd.f32 %v2239, %v2279
        %2281 = vmatmul.f32.gmra.mxu0 %v1709
        %v2282 = vpop.f32.mrf.mxu0
        %v2283 = vadd.f32 %v2242, %v2282
        %2284 = vmatmul.f32.gmra.mxu0 %v1712
        %v2285 = vpop.f32.mrf.mxu0
        %v2286 = vadd.f32 %v2245, %v2285
        %2287 = vdwg.mxu0
        %2288 = vmatpush.msra.mxu0 %v1094
        %2289 = vmatpush.msra.mxu0 %v1086
        %2290 = vmatpush.msra.mxu0 %v1078
        %2291 = vmatpush.msra.mxu0 %v1070
        %2292 = vmatpush.msra.mxu0 %v1062
        %2293 = vmatpush.msra.mxu0 %v1054
        %2294 = vmatpush.msra.mxu0 %v1046
        %2295 = vmatpush.msra.mxu0 %v1038
        %2296 = vmatpush.msra.mxu0 %v1359
        %2297 = vmatpush.msra.mxu0 %v1351
        %2298 = vmatpush.msra.mxu0 %v1343
        %2299 = vmatpush.msra.mxu0 %v1335
        %2300 = vmatpush.msra.mxu0 %v1327
        %2301 = vmatpush.msra.mxu0 %v1319
        %2302 = vmatpush.msra.mxu0 %v1311
        %2303 = vmatpush.msra.mxu0 %v1303
        %2304 = vmatmul.f32.gmra.mxu0 %v1625
        %v2305 = vpop.f32.mrf.mxu0
        %v2306 = vadd.f32 %v1652, %v2305
        %2307 = vmatmul.f32.gmra.mxu0 %v1627
        %v2308 = vpop.f32.mrf.mxu0
        %v2309 = vadd.f32 %v1657, %v2308
        %2310 = vmatmul.f32.gmra.mxu0 %v1629
        %v2311 = vpop.f32.mrf.mxu0
        %v2312 = vadd.f32 %v1662, %v2311
        %2313 = vmatmul.f32.gmra.mxu0 %v1631
        %v2314 = vpop.f32.mrf.mxu0
        %v2315 = vadd.f32 %v1667, %v2314
        %2316 = vmatmul.f32.gmra.mxu0 %v1633
        %v2317 = vpop.f32.mrf.mxu0
        %v2318 = vadd.f32 %v1672, %v2317
        %2319 = vmatmul.f32.gmra.mxu0 %v1635
        %v2320 = vpop.f32.mrf.mxu0
        %v2321 = vadd.f32 %v1677, %v2320
        %2322 = vmatmul.f32.gmra.mxu0 %v1637
        %v2323 = vpop.f32.mrf.mxu0
        %v2324 = vadd.f32 %v1682, %v2323
        %2325 = vmatmul.f32.gmra.mxu0 %v1639
        %v2326 = vpop.f32.mrf.mxu0
        %v2327 = vadd.f32 %v1687, %v2326
        %2328 = vdwg.mxu0
        %2329 = vmatpush.msra.mxu0 0.0
        %2330 = vmatpush.msra.mxu0 0.0
        %2331 = vmatpush.msra.mxu0 0.0
        %2332 = vmatpush.msra.mxu0 0.0
        %2333 = vmatpush.msra.mxu0 0.0
        %2334 = vmatpush.msra.mxu0 0.0
        %2335 = vmatpush.msra.mxu0 0.0
        %2336 = vmatpush.msra.mxu0 0.0
        %2337 = vmatpush.msra.mxu0 %v1624
        %2338 = vmatpush.msra.mxu0 %v1616
        %2339 = vmatpush.msra.mxu0 %v1608
        %2340 = vmatpush.msra.mxu0 %v1600
        %2341 = vmatpush.msra.mxu0 %v1592
        %2342 = vmatpush.msra.mxu0 %v1584
        %2343 = vmatpush.msra.mxu0 %v1576
        %2344 = vmatpush.msra.mxu0 %v1568
        %2345 = vmatmul.f32.gmra.mxu0 %v1691
        %v2346 = vpop.f32.mrf.mxu0
        %v2347 = vadd.f32 %v2306, %v2346
        %2348 = vmatmul.f32.gmra.mxu0 %v1694
        %v2349 = vpop.f32.mrf.mxu0
        %v2350 = vadd.f32 %v2309, %v2349
        %2351 = vmatmul.f32.gmra.mxu0 %v1697
        %v2352 = vpop.f32.mrf.mxu0
        %v2353 = vadd.f32 %v2312, %v2352
        %2354 = vmatmul.f32.gmra.mxu0 %v1700
        %v2355 = vpop.f32.mrf.mxu0
        %v2356 = vadd.f32 %v2315, %v2355
        %2357 = vmatmul.f32.gmra.mxu0 %v1703
        %v2358 = vpop.f32.mrf.mxu0
        %v2359 = vadd.f32 %v2318, %v2358
        %2360 = vmatmul.f32.gmra.mxu0 %v1706
        %v2361 = vpop.f32.mrf.mxu0
        %v2362 = vadd.f32 %v2321, %v2361
        %2363 = vmatmul.f32.gmra.mxu0 %v1709
        %v2364 = vpop.f32.mrf.mxu0
        %v2365 = vadd.f32 %v2324, %v2364
        %2366 = vmatmul.f32.gmra.mxu0 %v1712
        %v2367 = vpop.f32.mrf.mxu0
        %v2368 = vadd.f32 %v2327, %v2367
        %2369 = vdwg.mxu0
        %v2370 = vmax.f32 %v1773, 0.0
        %v2371 = vmax.f32 %v1855, 0.0
        %v2372 = vmax.f32 %v1937, 0.0
        %v2373 = vmax.f32 %v2019, 0.0
        %v2374 = vmax.f32 %v2101, 0.0
        %v2375 = vmax.f32 %v2183, 0.0
        %v2376 = vmax.f32 %v2265, 0.0
        %v2377 = vmax.f32 %v2347, 0.0
        %v2378 = vmax.f32 %v1776, 0.0
        %v2379 = vmax.f32 %v1858, 0.0
        %v2380 = vmax.f32 %v1940, 0.0
        %v2381 = vmax.f32 %v2022, 0.0
        %v2382 = vmax.f32 %v2104, 0.0
        %v2383 = vmax.f32 %v2186, 0.0
        %v2384 = vmax.f32 %v2268, 0.0
        %v2385 = vmax.f32 %v2350, 0.0
        %v2386 = vmax.f32 %v1779, 0.0
        %v2387 = vmax.f32 %v1861, 0.0
        %v2388 = vmax.f32 %v1943, 0.0
        %v2389 = vmax.f32 %v2025, 0.0
        %v2390 = vmax.f32 %v2107, 0.0
        %v2391 = vmax.f32 %v2189, 0.0
        %v2392 = vmax.f32 %v2271, 0.0
        %v2393 = vmax.f32 %v2353, 0.0
        %v2394 = vmax.f32 %v1782, 0.0
        %v2395 = vmax.f32 %v1864, 0.0
        %v2396 = vmax.f32 %v1946, 0.0
        %v2397 = vmax.f32 %v2028, 0.0
        %v2398 = vmax.f32 %v2110, 0.0
        %v2399 = vmax.f32 %v2192, 0.0
        %v2400 = vmax.f32 %v2274, 0.0
        %v2401 = vmax.f32 %v2356, 0.0
        %v2402 = vmax.f32 %v1785, 0.0
        %v2403 = vmax.f32 %v1867, 0.0
        %v2404 = vmax.f32 %v1949, 0.0
        %v2405 = vmax.f32 %v2031, 0.0
        %v2406 = vmax.f32 %v2113, 0.0
        %v2407 = vmax.f32 %v2195, 0.0
        %v2408 = vmax.f32 %v2277, 0.0
        %v2409 = vmax.f32 %v2359, 0.0
        %v2410 = vmax.f32 %v1788, 0.0
        %v2411 = vmax.f32 %v1870, 0.0
        %v2412 = vmax.f32 %v1952, 0.0
        %v2413 = vmax.f32 %v2034, 0.0
        %v2414 = vmax.f32 %v2116, 0.0
        %v2415 = vmax.f32 %v2198, 0.0
        %v2416 = vmax.f32 %v2280, 0.0
        %v2417 = vmax.f32 %v2362, 0.0
        %v2418 = vmax.f32 %v1791, 0.0
        %v2419 = vmax.f32 %v1873, 0.0
        %v2420 = vmax.f32 %v1955, 0.0
        %v2421 = vmax.f32 %v2037, 0.0
        %v2422 = vmax.f32 %v2119, 0.0
        %v2423 = vmax.f32 %v2201, 0.0
        %v2424 = vmax.f32 %v2283, 0.0
        %v2425 = vmax.f32 %v2365, 0.0
        %v2426 = vmax.f32 %v1794, 0.0
        %v2427 = vmax.f32 %v1876, 0.0
        %v2428 = vmax.f32 %v1958, 0.0
        %v2429 = vmax.f32 %v2040, 0.0
        %v2430 = vmax.f32 %v2122, 0.0
        %v2431 = vmax.f32 %v2204, 0.0
        %v2432 = vmax.f32 %v2286, 0.0
        %v2433 = vmax.f32 %v2368, 0.0
        %2434 = vrot.lane.b32.xlu0 %v2370, 1
        %v2435 = vpop.permute.xlu0 %2434
        %2436 = vrot.lane.b32.xlu0 %v2378, 1
        %v2437 = vpop.permute.xlu0 %2436
        %2438 = vrot.lane.b32.xlu0 %v2386, 1
        %v2439 = vpop.permute.xlu0 %2438
        %2440 = vrot.lane.b32.xlu0 %v2394, 1
        %v2441 = vpop.permute.xlu0 %2440
        %2442 = vrot.lane.b32.xlu0 %v2402, 1
        %v2443 = vpop.permute.xlu0 %2442
        %2444 = vrot.lane.b32.xlu0 %v2410, 1
        %v2445 = vpop.permute.xlu0 %2444
        %2446 = vrot.lane.b32.xlu0 %v2418, 1
        %v2447 = vpop.permute.xlu0 %2446
        %2448 = vrot.lane.b32.xlu0 %v2426, 1
        %v2449 = vpop.permute.xlu0 %2448
        %2450 = vrot.lane.b32.xlu0 %v2371, 1
        %v2451 = vpop.permute.xlu0 %2450
        %2452 = vrot.lane.b32.xlu0 %v2379, 1
        %v2453 = vpop.permute.xlu0 %2452
        %2454 = vrot.lane.b32.xlu0 %v2387, 1
        %v2455 = vpop.permute.xlu0 %2454
        %2456 = vrot.lane.b32.xlu0 %v2395, 1
        %v2457 = vpop.permute.xlu0 %2456
        %2458 = vrot.lane.b32.xlu0 %v2403, 1
        %v2459 = vpop.permute.xlu0 %2458
        %2460 = vrot.lane.b32.xlu0 %v2411, 1
        %v2461 = vpop.permute.xlu0 %2460
        %2462 = vrot.lane.b32.xlu0 %v2419, 1
        %v2463 = vpop.permute.xlu0 %2462
        %2464 = vrot.lane.b32.xlu0 %v2427, 1
        %v2465 = vpop.permute.xlu0 %2464
        %2466 = vrot.lane.b32.xlu0 %v2372, 1
        %v2467 = vpop.permute.xlu0 %2466
        %2468 = vrot.lane.b32.xlu0 %v2380, 1
        %v2469 = vpop.permute.xlu0 %2468
        %2470 = vrot.lane.b32.xlu0 %v2388, 1
        %v2471 = vpop.permute.xlu0 %2470
        %2472 = vrot.lane.b32.xlu0 %v2396, 1
        %v2473 = vpop.permute.xlu0 %2472
        %2474 = vrot.lane.b32.xlu0 %v2404, 1
        %v2475 = vpop.permute.xlu0 %2474
        %2476 = vrot.lane.b32.xlu0 %v2412, 1
        %v2477 = vpop.permute.xlu0 %2476
        %2478 = vrot.lane.b32.xlu0 %v2420, 1
        %v2479 = vpop.permute.xlu0 %2478
        %2480 = vrot.lane.b32.xlu0 %v2428, 1
        %v2481 = vpop.permute.xlu0 %2480
        %2482 = vrot.lane.b32.xlu0 %v2373, 1
        %v2483 = vpop.permute.xlu0 %2482
        %2484 = vrot.lane.b32.xlu0 %v2381, 1
        %v2485 = vpop.permute.xlu0 %2484
        %2486 = vrot.lane.b32.xlu0 %v2389, 1
        %v2487 = vpop.permute.xlu0 %2486
        %2488 = vrot.lane.b32.xlu0 %v2397, 1
        %v2489 = vpop.permute.xlu0 %2488
        %2490 = vrot.lane.b32.xlu0 %v2405, 1
        %v2491 = vpop.permute.xlu0 %2490
        %2492 = vrot.lane.b32.xlu0 %v2413, 1
        %v2493 = vpop.permute.xlu0 %2492
        %2494 = vrot.lane.b32.xlu0 %v2421, 1
        %v2495 = vpop.permute.xlu0 %2494
        %2496 = vrot.lane.b32.xlu0 %v2429, 1
        %v2497 = vpop.permute.xlu0 %2496
        %2498 = vrot.lane.b32.xlu0 %v2374, 1
        %v2499 = vpop.permute.xlu0 %2498
        %2500 = vrot.lane.b32.xlu0 %v2382, 1
        %v2501 = vpop.permute.xlu0 %2500
        %2502 = vrot.lane.b32.xlu0 %v2390, 1
        %v2503 = vpop.permute.xlu0 %2502
        %2504 = vrot.lane.b32.xlu0 %v2398, 1
        %v2505 = vpop.permute.xlu0 %2504
        %2506 = vrot.lane.b32.xlu0 %v2406, 1
        %v2507 = vpop.permute.xlu0 %2506
        %2508 = vrot.lane.b32.xlu0 %v2414, 1
        %v2509 = vpop.permute.xlu0 %2508
        %2510 = vrot.lane.b32.xlu0 %v2422, 1
        %v2511 = vpop.permute.xlu0 %2510
        %2512 = vrot.lane.b32.xlu0 %v2430, 1
        %v2513 = vpop.permute.xlu0 %2512
        %2514 = vrot.lane.b32.xlu0 %v2375, 1
        %v2515 = vpop.permute.xlu0 %2514
        %2516 = vrot.lane.b32.xlu0 %v2383, 1
        %v2517 = vpop.permute.xlu0 %2516
        %2518 = vrot.lane.b32.xlu0 %v2391, 1
        %v2519 = vpop.permute.xlu0 %2518
        %2520 = vrot.lane.b32.xlu0 %v2399, 1
        %v2521 = vpop.permute.xlu0 %2520
        %2522 = vrot.lane.b32.xlu0 %v2407, 1
        %v2523 = vpop.permute.xlu0 %2522
        %2524 = vrot.lane.b32.xlu0 %v2415, 1
        %v2525 = vpop.permute.xlu0 %2524
        %2526 = vrot.lane.b32.xlu0 %v2423, 1
        %v2527 = vpop.permute.xlu0 %2526
        %2528 = vrot.lane.b32.xlu0 %v2431, 1
        %v2529 = vpop.permute.xlu0 %2528
        %2530 = vrot.lane.b32.xlu0 %v2376, 1
        %v2531 = vpop.permute.xlu0 %2530
        %2532 = vrot.lane.b32.xlu0 %v2384, 1
        %v2533 = vpop.permute.xlu0 %2532
        %2534 = vrot.lane.b32.xlu0 %v2392, 1
        %v2535 = vpop.permute.xlu0 %2534
        %2536 = vrot.lane.b32.xlu0 %v2400, 1
        %v2537 = vpop.permute.xlu0 %2536
        %2538 = vrot.lane.b32.xlu0 %v2408, 1
        %v2539 = vpop.permute.xlu0 %2538
        %2540 = vrot.lane.b32.xlu0 %v2416, 1
        %v2541 = vpop.permute.xlu0 %2540
        %2542 = vrot.lane.b32.xlu0 %v2424, 1
        %v2543 = vpop.permute.xlu0 %2542
        %2544 = vrot.lane.b32.xlu0 %v2432, 1
        %v2545 = vpop.permute.xlu0 %2544
        %2546 = vrot.lane.b32.xlu0 %v2377, 1
        %v2547 = vpop.permute.xlu0 %2546
        %2548 = vrot.lane.b32.xlu0 %v2385, 1
        %v2549 = vpop.permute.xlu0 %2548
        %2550 = vrot.lane.b32.xlu0 %v2393, 1
        %v2551 = vpop.permute.xlu0 %2550
        %2552 = vrot.lane.b32.xlu0 %v2401, 1
        %v2553 = vpop.permute.xlu0 %2552
        %2554 = vrot.lane.b32.xlu0 %v2409, 1
        %v2555 = vpop.permute.xlu0 %2554
        %2556 = vrot.lane.b32.xlu0 %v2417, 1
        %v2557 = vpop.permute.xlu0 %2556
        %2558 = vrot.lane.b32.xlu0 %v2425, 1
        %v2559 = vpop.permute.xlu0 %2558
        %2560 = vrot.lane.b32.xlu0 %v2433, 1
        %v2561 = vpop.permute.xlu0 %2560
        %v2562 = vsel %vm1223, %v2531, %v2547
        %v2563 = vsel %vm1223, %v2533, %v2549
        %v2564 = vsel %vm1223, %v2535, %v2551
        %v2565 = vsel %vm1223, %v2537, %v2553
        %v2566 = vsel %vm1223, %v2539, %v2555
        %v2567 = vsel %vm1223, %v2541, %v2557
        %v2568 = vsel %vm1223, %v2543, %v2559
        %v2569 = vsel %vm1223, %v2545, %v2561
        %v2570 = vsel %vm1223, %v2515, %v2531
        %v2571 = vsel %vm1223, %v2517, %v2533
        %v2572 = vsel %vm1223, %v2519, %v2535
        %v2573 = vsel %vm1223, %v2521, %v2537
        %v2574 = vsel %vm1223, %v2523, %v2539
        %v2575 = vsel %vm1223, %v2525, %v2541
        %v2576 = vsel %vm1223, %v2527, %v2543
        %v2577 = vsel %vm1223, %v2529, %v2545
        %v2578 = vsel %vm1223, %v2499, %v2515
        %v2579 = vsel %vm1223, %v2501, %v2517
        %v2580 = vsel %vm1223, %v2503, %v2519
        %v2581 = vsel %vm1223, %v2505, %v2521
        %v2582 = vsel %vm1223, %v2507, %v2523
        %v2583 = vsel %vm1223, %v2509, %v2525
        %v2584 = vsel %vm1223, %v2511, %v2527
        %v2585 = vsel %vm1223, %v2513, %v2529
        %v2586 = vsel %vm1223, %v2483, %v2499
        %v2587 = vsel %vm1223, %v2485, %v2501
        %v2588 = vsel %vm1223, %v2487, %v2503
        %v2589 = vsel %vm1223, %v2489, %v2505
        %v2590 = vsel %vm1223, %v2491, %v2507
        %v2591 = vsel %vm1223, %v2493, %v2509
        %v2592 = vsel %vm1223, %v2495, %v2511
        %v2593 = vsel %vm1223, %v2497, %v2513
        %v2594 = vsel %vm1223, %v2467, %v2483
        %v2595 = vsel %vm1223, %v2469, %v2485
        %v2596 = vsel %vm1223, %v2471, %v2487
        %v2597 = vsel %vm1223, %v2473, %v2489
        %v2598 = vsel %vm1223, %v2475, %v2491
        %v2599 = vsel %vm1223, %v2477, %v2493
        %v2600 = vsel %vm1223, %v2479, %v2495
        %v2601 = vsel %vm1223, %v2481, %v2497
        %v2602 = vsel %vm1223, %v2451, %v2467
        %v2603 = vsel %vm1223, %v2453, %v2469
        %v2604 = vsel %vm1223, %v2455, %v2471
        %v2605 = vsel %vm1223, %v2457, %v2473
        %v2606 = vsel %vm1223, %v2459, %v2475
        %v2607 = vsel %vm1223, %v2461, %v2477
        %v2608 = vsel %vm1223, %v2463, %v2479
        %v2609 = vsel %vm1223, %v2465, %v2481
        %v2610 = vsel %vm1223, %v2435, %v2451
        %v2611 = vsel %vm1223, %v2437, %v2453
        %v2612 = vsel %vm1223, %v2439, %v2455
        %v2613 = vsel %vm1223, %v2441, %v2457
        %v2614 = vsel %vm1223, %v2443, %v2459
        %v2615 = vsel %vm1223, %v2445, %v2461
        %v2616 = vsel %vm1223, %v2447, %v2463
        %v2617 = vsel %vm1223, %v2449, %v2465
        %v2618 = vsel %vm1223, %v2547, %v2435
        %v2619 = vsel %vm1223, %v2549, %v2437
        %v2620 = vsel %vm1223, %v2551, %v2439
        %v2621 = vsel %vm1223, %v2553, %v2441
        %v2622 = vsel %vm1223, %v2555, %v2443
        %v2623 = vsel %vm1223, %v2557, %v2445
        %v2624 = vsel %vm1223, %v2559, %v2447
        %v2625 = vsel %vm1223, %v2561, %v2449
        %v2626 = vsel %vm1288, %v2618, 0.0
        %v2627 = vsel %vm1289, %v2610, 0.0
        %v2628 = vsel %vm1290, %v2602, 0.0
        %v2629 = vsel %vm1291, %v2594, 0.0
        %v2630 = vsel %vm1292, %v2586, 0.0
        %v2631 = vsel %vm1293, %v2578, 0.0
        %v2632 = vsel %vm1294, %v2570, 0.0
        %v2633 = vsel %vm1295, %v2562, 0.0
        %v2634 = vsel %vm1288, %v2619, 0.0
        %v2635 = vsel %vm1289, %v2611, 0.0
        %v2636 = vsel %vm1290, %v2603, 0.0
        %v2637 = vsel %vm1291, %v2595, 0.0
        %v2638 = vsel %vm1292, %v2587, 0.0
        %v2639 = vsel %vm1293, %v2579, 0.0
        %v2640 = vsel %vm1294, %v2571, 0.0
        %v2641 = vsel %vm1295, %v2563, 0.0
        %v2642 = vsel %vm1288, %v2620, 0.0
        %v2643 = vsel %vm1289, %v2612, 0.0
        %v2644 = vsel %vm1290, %v2604, 0.0
        %v2645 = vsel %vm1291, %v2596, 0.0
        %v2646 = vsel %vm1292, %v2588, 0.0
        %v2647 = vsel %vm1293, %v2580, 0.0
        %v2648 = vsel %vm1294, %v2572, 0.0
        %v2649 = vsel %vm1295, %v2564, 0.0
        %v2650 = vsel %vm1288, %v2621, 0.0
        %v2651 = vsel %vm1289, %v2613, 0.0
        %v2652 = vsel %vm1290, %v2605, 0.0
        %v2653 = vsel %vm1291, %v2597, 0.0
        %v2654 = vsel %vm1292, %v2589, 0.0
        %v2655 = vsel %vm1293, %v2581, 0.0
        %v2656 = vsel %vm1294, %v2573, 0.0
        %v2657 = vsel %vm1295, %v2565, 0.0
        %v2658 = vsel %vm1288, %v2622, 0.0
        %v2659 = vsel %vm1289, %v2614, 0.0
        %v2660 = vsel %vm1290, %v2606, 0.0
        %v2661 = vsel %vm1291, %v2598, 0.0
        %v2662 = vsel %vm1292, %v2590, 0.0
        %v2663 = vsel %vm1293, %v2582, 0.0
        %v2664 = vsel %vm1294, %v2574, 0.0
        %v2665 = vsel %vm1295, %v2566, 0.0
        %v2666 = vsel %vm1288, %v2623, 0.0
        %v2667 = vsel %vm1289, %v2615, 0.0
        %v2668 = vsel %vm1290, %v2607, 0.0
        %v2669 = vsel %vm1291, %v2599, 0.0
        %v2670 = vsel %vm1292, %v2591, 0.0
        %v2671 = vsel %vm1293, %v2583, 0.0
        %v2672 = vsel %vm1294, %v2575, 0.0
        %v2673 = vsel %vm1295, %v2567, 0.0
        %v2674 = vsel %vm1288, %v2624, 0.0
        %v2675 = vsel %vm1289, %v2616, 0.0
        %v2676 = vsel %vm1290, %v2608, 0.0
        %v2677 = vsel %vm1291, %v2600, 0.0
        %v2678 = vsel %vm1292, %v2592, 0.0
        %v2679 = vsel %vm1293, %v2584, 0.0
        %v2680 = vsel %vm1294, %v2576, 0.0
        %v2681 = vsel %vm1295, %v2568, 0.0
        %v2682 = vsel %vm1288, %v2625, 0.0
        %v2683 = vsel %vm1289, %v2617, 0.0
        %v2684 = vsel %vm1290, %v2609, 0.0
        %v2685 = vsel %vm1291, %v2601, 0.0
        %v2686 = vsel %vm1292, %v2593, 0.0
        %v2687 = vsel %vm1293, %v2585, 0.0
        %v2688 = vsel %vm1294, %v2577, 0.0
        %v2689 = vsel %vm1295, %v2569, 0.0
        %2690 = vrot.lane.b32.xlu0 %v2370, 127
        %v2691 = vpop.permute.xlu0 %2690
        %2692 = vrot.lane.b32.xlu0 %v2378, 127
        %v2693 = vpop.permute.xlu0 %2692
        %2694 = vrot.lane.b32.xlu0 %v2386, 127
        %v2695 = vpop.permute.xlu0 %2694
        %2696 = vrot.lane.b32.xlu0 %v2394, 127
        %v2697 = vpop.permute.xlu0 %2696
        %2698 = vrot.lane.b32.xlu0 %v2402, 127
        %v2699 = vpop.permute.xlu0 %2698
        %2700 = vrot.lane.b32.xlu0 %v2410, 127
        %v2701 = vpop.permute.xlu0 %2700
        %2702 = vrot.lane.b32.xlu0 %v2418, 127
        %v2703 = vpop.permute.xlu0 %2702
        %2704 = vrot.lane.b32.xlu0 %v2426, 127
        %v2705 = vpop.permute.xlu0 %2704
        %2706 = vrot.lane.b32.xlu0 %v2371, 127
        %v2707 = vpop.permute.xlu0 %2706
        %2708 = vrot.lane.b32.xlu0 %v2379, 127
        %v2709 = vpop.permute.xlu0 %2708
        %2710 = vrot.lane.b32.xlu0 %v2387, 127
        %v2711 = vpop.permute.xlu0 %2710
        %2712 = vrot.lane.b32.xlu0 %v2395, 127
        %v2713 = vpop.permute.xlu0 %2712
        %2714 = vrot.lane.b32.xlu0 %v2403, 127
        %v2715 = vpop.permute.xlu0 %2714
        %2716 = vrot.lane.b32.xlu0 %v2411, 127
        %v2717 = vpop.permute.xlu0 %2716
        %2718 = vrot.lane.b32.xlu0 %v2419, 127
        %v2719 = vpop.permute.xlu0 %2718
        %2720 = vrot.lane.b32.xlu0 %v2427, 127
        %v2721 = vpop.permute.xlu0 %2720
        %2722 = vrot.lane.b32.xlu0 %v2372, 127
        %v2723 = vpop.permute.xlu0 %2722
        %2724 = vrot.lane.b32.xlu0 %v2380, 127
        %v2725 = vpop.permute.xlu0 %2724
        %2726 = vrot.lane.b32.xlu0 %v2388, 127
        %v2727 = vpop.permute.xlu0 %2726
        %2728 = vrot.lane.b32.xlu0 %v2396, 127
        %v2729 = vpop.permute.xlu0 %2728
        %2730 = vrot.lane.b32.xlu0 %v2404, 127
        %v2731 = vpop.permute.xlu0 %2730
        %2732 = vrot.lane.b32.xlu0 %v2412, 127
        %v2733 = vpop.permute.xlu0 %2732
        %2734 = vrot.lane.b32.xlu0 %v2420, 127
        %v2735 = vpop.permute.xlu0 %2734
        %2736 = vrot.lane.b32.xlu0 %v2428, 127
        %v2737 = vpop.permute.xlu0 %2736
        %2738 = vrot.lane.b32.xlu0 %v2373, 127
        %v2739 = vpop.permute.xlu0 %2738
        %2740 = vrot.lane.b32.xlu0 %v2381, 127
        %v2741 = vpop.permute.xlu0 %2740
        %2742 = vrot.lane.b32.xlu0 %v2389, 127
        %v2743 = vpop.permute.xlu0 %2742
        %2744 = vrot.lane.b32.xlu0 %v2397, 127
        %v2745 = vpop.permute.xlu0 %2744
        %2746 = vrot.lane.b32.xlu0 %v2405, 127
        %v2747 = vpop.permute.xlu0 %2746
        %2748 = vrot.lane.b32.xlu0 %v2413, 127
        %v2749 = vpop.permute.xlu0 %2748
        %2750 = vrot.lane.b32.xlu0 %v2421, 127
        %v2751 = vpop.permute.xlu0 %2750
        %2752 = vrot.lane.b32.xlu0 %v2429, 127
        %v2753 = vpop.permute.xlu0 %2752
        %2754 = vrot.lane.b32.xlu0 %v2374, 127
        %v2755 = vpop.permute.xlu0 %2754
        %2756 = vrot.lane.b32.xlu0 %v2382, 127
        %v2757 = vpop.permute.xlu0 %2756
        %2758 = vrot.lane.b32.xlu0 %v2390, 127
        %v2759 = vpop.permute.xlu0 %2758
        %2760 = vrot.lane.b32.xlu0 %v2398, 127
        %v2761 = vpop.permute.xlu0 %2760
        %2762 = vrot.lane.b32.xlu0 %v2406, 127
        %v2763 = vpop.permute.xlu0 %2762
        %2764 = vrot.lane.b32.xlu0 %v2414, 127
        %v2765 = vpop.permute.xlu0 %2764
        %2766 = vrot.lane.b32.xlu0 %v2422, 127
        %v2767 = vpop.permute.xlu0 %2766
        %2768 = vrot.lane.b32.xlu0 %v2430, 127
        %v2769 = vpop.permute.xlu0 %2768
        %2770 = vrot.lane.b32.xlu0 %v2375, 127
        %v2771 = vpop.permute.xlu0 %2770
        %2772 = vrot.lane.b32.xlu0 %v2383, 127
        %v2773 = vpop.permute.xlu0 %2772
        %2774 = vrot.lane.b32.xlu0 %v2391, 127
        %v2775 = vpop.permute.xlu0 %2774
        %2776 = vrot.lane.b32.xlu0 %v2399, 127
        %v2777 = vpop.permute.xlu0 %2776
        %2778 = vrot.lane.b32.xlu0 %v2407, 127
        %v2779 = vpop.permute.xlu0 %2778
        %2780 = vrot.lane.b32.xlu0 %v2415, 127
        %v2781 = vpop.permute.xlu0 %2780
        %2782 = vrot.lane.b32.xlu0 %v2423, 127
        %v2783 = vpop.permute.xlu0 %2782
        %2784 = vrot.lane.b32.xlu0 %v2431, 127
        %v2785 = vpop.permute.xlu0 %2784
        %2786 = vrot.lane.b32.xlu0 %v2376, 127
        %v2787 = vpop.permute.xlu0 %2786
        %2788 = vrot.lane.b32.xlu0 %v2384, 127
        %v2789 = vpop.permute.xlu0 %2788
        %2790 = vrot.lane.b32.xlu0 %v2392, 127
        %v2791 = vpop.permute.xlu0 %2790
        %2792 = vrot.lane.b32.xlu0 %v2400, 127
        %v2793 = vpop.permute.xlu0 %2792
        %2794 = vrot.lane.b32.xlu0 %v2408, 127
        %v2795 = vpop.permute.xlu0 %2794
        %2796 = vrot.lane.b32.xlu0 %v2416, 127
        %v2797 = vpop.permute.xlu0 %2796
        %2798 = vrot.lane.b32.xlu0 %v2424, 127
        %v2799 = vpop.permute.xlu0 %2798
        %2800 = vrot.lane.b32.xlu0 %v2432, 127
        %v2801 = vpop.permute.xlu0 %2800
        %2802 = vrot.lane.b32.xlu0 %v2377, 127
        %v2803 = vpop.permute.xlu0 %2802
        %2804 = vrot.lane.b32.xlu0 %v2385, 127
        %v2805 = vpop.permute.xlu0 %2804
        %2806 = vrot.lane.b32.xlu0 %v2393, 127
        %v2807 = vpop.permute.xlu0 %2806
        %2808 = vrot.lane.b32.xlu0 %v2401, 127
        %v2809 = vpop.permute.xlu0 %2808
        %2810 = vrot.lane.b32.xlu0 %v2409, 127
        %v2811 = vpop.permute.xlu0 %2810
        %2812 = vrot.lane.b32.xlu0 %v2417, 127
        %v2813 = vpop.permute.xlu0 %2812
        %2814 = vrot.lane.b32.xlu0 %v2425, 127
        %v2815 = vpop.permute.xlu0 %2814
        %2816 = vrot.lane.b32.xlu0 %v2433, 127
        %v2817 = vpop.permute.xlu0 %2816
        %v2818 = vsel %vm1488, %v2787, %v2803
        %v2819 = vsel %vm1488, %v2789, %v2805
        %v2820 = vsel %vm1488, %v2791, %v2807
        %v2821 = vsel %vm1488, %v2793, %v2809
        %v2822 = vsel %vm1488, %v2795, %v2811
        %v2823 = vsel %vm1488, %v2797, %v2813
        %v2824 = vsel %vm1488, %v2799, %v2815
        %v2825 = vsel %vm1488, %v2801, %v2817
        %v2826 = vsel %vm1488, %v2771, %v2787
        %v2827 = vsel %vm1488, %v2773, %v2789
        %v2828 = vsel %vm1488, %v2775, %v2791
        %v2829 = vsel %vm1488, %v2777, %v2793
        %v2830 = vsel %vm1488, %v2779, %v2795
        %v2831 = vsel %vm1488, %v2781, %v2797
        %v2832 = vsel %vm1488, %v2783, %v2799
        %v2833 = vsel %vm1488, %v2785, %v2801
        %v2834 = vsel %vm1488, %v2755, %v2771
        %v2835 = vsel %vm1488, %v2757, %v2773
        %v2836 = vsel %vm1488, %v2759, %v2775
        %v2837 = vsel %vm1488, %v2761, %v2777
        %v2838 = vsel %vm1488, %v2763, %v2779
        %v2839 = vsel %vm1488, %v2765, %v2781
        %v2840 = vsel %vm1488, %v2767, %v2783
        %v2841 = vsel %vm1488, %v2769, %v2785
        %v2842 = vsel %vm1488, %v2739, %v2755
        %v2843 = vsel %vm1488, %v2741, %v2757
        %v2844 = vsel %vm1488, %v2743, %v2759
        %v2845 = vsel %vm1488, %v2745, %v2761
        %v2846 = vsel %vm1488, %v2747, %v2763
        %v2847 = vsel %vm1488, %v2749, %v2765
        %v2848 = vsel %vm1488, %v2751, %v2767
        %v2849 = vsel %vm1488, %v2753, %v2769
        %v2850 = vsel %vm1488, %v2723, %v2739
        %v2851 = vsel %vm1488, %v2725, %v2741
        %v2852 = vsel %vm1488, %v2727, %v2743
        %v2853 = vsel %vm1488, %v2729, %v2745
        %v2854 = vsel %vm1488, %v2731, %v2747
        %v2855 = vsel %vm1488, %v2733, %v2749
        %v2856 = vsel %vm1488, %v2735, %v2751
        %v2857 = vsel %vm1488, %v2737, %v2753
        %v2858 = vsel %vm1488, %v2707, %v2723
        %v2859 = vsel %vm1488, %v2709, %v2725
        %v2860 = vsel %vm1488, %v2711, %v2727
        %v2861 = vsel %vm1488, %v2713, %v2729
        %v2862 = vsel %vm1488, %v2715, %v2731
        %v2863 = vsel %vm1488, %v2717, %v2733
        %v2864 = vsel %vm1488, %v2719, %v2735
        %v2865 = vsel %vm1488, %v2721, %v2737
        %v2866 = vsel %vm1488, %v2691, %v2707
        %v2867 = vsel %vm1488, %v2693, %v2709
        %v2868 = vsel %vm1488, %v2695, %v2711
        %v2869 = vsel %vm1488, %v2697, %v2713
        %v2870 = vsel %vm1488, %v2699, %v2715
        %v2871 = vsel %vm1488, %v2701, %v2717
        %v2872 = vsel %vm1488, %v2703, %v2719
        %v2873 = vsel %vm1488, %v2705, %v2721
        %v2874 = vsel %vm1488, %v2803, %v2691
        %v2875 = vsel %vm1488, %v2805, %v2693
        %v2876 = vsel %vm1488, %v2807, %v2695
        %v2877 = vsel %vm1488, %v2809, %v2697
        %v2878 = vsel %vm1488, %v2811, %v2699
        %v2879 = vsel %vm1488, %v2813, %v2701
        %v2880 = vsel %vm1488, %v2815, %v2703
        %v2881 = vsel %vm1488, %v2817, %v2705
        %v2882 = vsel %vm1553, %v2866, 0.0
        %v2883 = vsel %vm1554, %v2858, 0.0
        %v2884 = vsel %vm1555, %v2850, 0.0
        %v2885 = vsel %vm1556, %v2842, 0.0
        %v2886 = vsel %vm1557, %v2834, 0.0
        %v2887 = vsel %vm1558, %v2826, 0.0
        %v2888 = vsel %vm1559, %v2818, 0.0
        %v2889 = vsel %vm1560, %v2874, 0.0
        %v2890 = vsel %vm1553, %v2867, 0.0
        %v2891 = vsel %vm1554, %v2859, 0.0
        %v2892 = vsel %vm1555, %v2851, 0.0
        %v2893 = vsel %vm1556, %v2843, 0.0
        %v2894 = vsel %vm1557, %v2835, 0.0
        %v2895 = vsel %vm1558, %v2827, 0.0
        %v2896 = vsel %vm1559, %v2819, 0.0
        %v2897 = vsel %vm1560, %v2875, 0.0
        %v2898 = vsel %vm1553, %v2868, 0.0
        %v2899 = vsel %vm1554, %v2860, 0.0
        %v2900 = vsel %vm1555, %v2852, 0.0
        %v2901 = vsel %vm1556, %v2844, 0.0
        %v2902 = vsel %vm1557, %v2836, 0.0
        %v2903 = vsel %vm1558, %v2828, 0.0
        %v2904 = vsel %vm1559, %v2820, 0.0
        %v2905 = vsel %vm1560, %v2876, 0.0
        %v2906 = vsel %vm1553, %v2869, 0.0
        %v2907 = vsel %vm1554, %v2861, 0.0
        %v2908 = vsel %vm1555, %v2853, 0.0
        %v2909 = vsel %vm1556, %v2845, 0.0
        %v2910 = vsel %vm1557, %v2837, 0.0
        %v2911 = vsel %vm1558, %v2829, 0.0
        %v2912 = vsel %vm1559, %v2821, 0.0
        %v2913 = vsel %vm1560, %v2877, 0.0
        %v2914 = vsel %vm1553, %v2870, 0.0
        %v2915 = vsel %vm1554, %v2862, 0.0
        %v2916 = vsel %vm1555, %v2854, 0.0
        %v2917 = vsel %vm1556, %v2846, 0.0
        %v2918 = vsel %vm1557, %v2838, 0.0
        %v2919 = vsel %vm1558, %v2830, 0.0
        %v2920 = vsel %vm1559, %v2822, 0.0
        %v2921 = vsel %vm1560, %v2878, 0.0
        %v2922 = vsel %vm1553, %v2871, 0.0
        %v2923 = vsel %vm1554, %v2863, 0.0
        %v2924 = vsel %vm1555, %v2855, 0.0
        %v2925 = vsel %vm1556, %v2847, 0.0
        %v2926 = vsel %vm1557, %v2839, 0.0
        %v2927 = vsel %vm1558, %v2831, 0.0
        %v2928 = vsel %vm1559, %v2823, 0.0
        %v2929 = vsel %vm1560, %v2879, 0.0
        %v2930 = vsel %vm1553, %v2872, 0.0
        %v2931 = vsel %vm1554, %v2864, 0.0
        %v2932 = vsel %vm1555, %v2856, 0.0
        %v2933 = vsel %vm1556, %v2848, 0.0
        %v2934 = vsel %vm1557, %v2840, 0.0
        %v2935 = vsel %vm1558, %v2832, 0.0
        %v2936 = vsel %vm1559, %v2824, 0.0
        %v2937 = vsel %vm1560, %v2880, 0.0
        %v2938 = vsel %vm1553, %v2873, 0.0
        %v2939 = vsel %vm1554, %v2865, 0.0
        %v2940 = vsel %vm1555, %v2857, 0.0
        %v2941 = vsel %vm1556, %v2849, 0.0
        %v2942 = vsel %vm1557, %v2841, 0.0
        %v2943 = vsel %vm1558, %v2833, 0.0
        %v2944 = vsel %vm1559, %v2825, 0.0
        %v2945 = vsel %vm1560, %v2881, 0.0
        %v2946 = vld [vmem:[%s5] sm:$0xff]
        %v2947 = vld [vmem:[%s5 + $0x8] sm:$0xff]
        %v2948 = vld [vmem:[%s5 + $0x10] sm:$0xff]
        %v2949 = vld [vmem:[%s5 + $0x18] sm:$0xff]
        %v2950 = vld [vmem:[%s5 + $0x20] sm:$0xff]
        %v2951 = vld [vmem:[%s5 + $0x28] sm:$0xff]
        %v2952 = vld [vmem:[%s5 + $0x30] sm:$0xff]
        %v2953 = vld [vmem:[%s5 + $0x38] sm:$0xff]
        %v2954 = vld [vmem:[%s5 + $0x40] sm:$0xff]
        %v2955 = vld [vmem:[%s5 + $0x48] sm:$0xff]
        %v2956 = vld [vmem:[%s5 + $0x50] sm:$0xff]
        %v2957 = vld [vmem:[%s5 + $0x58] sm:$0xff]
        %v2958 = vld [vmem:[%s5 + $0x60] sm:$0xff]
        %v2959 = vld [vmem:[%s5 + $0x68] sm:$0xff]
        %v2960 = vld [vmem:[%s5 + $0x70] sm:$0xff]
        %v2961 = vld [vmem:[%s5 + $0x78] sm:$0xff]
        %v2962 = vld [vmem:[%s6] sm:$0xff]
        %v2963 = vld [vmem:[%s6 + $0x8] sm:$0xff]
        %v2964 = vld [vmem:[%s6 + $0x10] sm:$0xff]
        %v2965 = vld [vmem:[%s6 + $0x18] sm:$0xff]
        %v2966 = vld [vmem:[%s6 + $0x20] sm:$0xff]
        %v2967 = vld [vmem:[%s6 + $0x28] sm:$0xff]
        %v2968 = vld [vmem:[%s6 + $0x30] sm:$0xff]
        %v2969 = vld [vmem:[%s6 + $0x38] sm:$0xff]
        %2971 = vset.pattern.permute.xlu0 0
        %2972 = vperm.xlu0 %2971, %v2962
        %v2973 = vpop.permute.xlu0 %2972
        %2976 = vset.pattern.permute.xlu0 0
        %2977 = vperm.xlu0 %2976, %v2963
        %v2978 = vpop.permute.xlu0 %2977
        %2981 = vset.pattern.permute.xlu0 0
        %2982 = vperm.xlu0 %2981, %v2964
        %v2983 = vpop.permute.xlu0 %2982
        %2986 = vset.pattern.permute.xlu0 0
        %2987 = vperm.xlu0 %2986, %v2965
        %v2988 = vpop.permute.xlu0 %2987
        %2991 = vset.pattern.permute.xlu0 0
        %2992 = vperm.xlu0 %2991, %v2966
        %v2993 = vpop.permute.xlu0 %2992
        %2996 = vset.pattern.permute.xlu0 0
        %2997 = vperm.xlu0 %2996, %v2967
        %v2998 = vpop.permute.xlu0 %2997
        %3001 = vset.pattern.permute.xlu0 0
        %3002 = vperm.xlu0 %3001, %v2968
        %v3003 = vpop.permute.xlu0 %3002
        %3006 = vset.pattern.permute.xlu0 0
        %3007 = vperm.xlu0 %3006, %v2969
        %v3008 = vpop.permute.xlu0 %3007
        %v3011 = vsel %vm1689, %v2947, 0
        %v3014 = vsel %vm1689, %v2949, 0
        %v3017 = vsel %vm1689, %v2951, 0
        %v3020 = vsel %vm1689, %v2953, 0
        %v3023 = vsel %vm1689, %v2955, 0
        %v3026 = vsel %vm1689, %v2957, 0
        %v3029 = vsel %vm1689, %v2959, 0
        %v3032 = vsel %vm1689, %v2961, 0
        %3034 = vmatpush.msra.mxu0 %v2426
        %3035 = vmatpush.msra.mxu0 %v2418
        %3036 = vmatpush.msra.mxu0 %v2410
        %3037 = vmatpush.msra.mxu0 %v2402
        %3038 = vmatpush.msra.mxu0 %v2394
        %3039 = vmatpush.msra.mxu0 %v2386
        %3040 = vmatpush.msra.mxu0 %v2378
        %3041 = vmatpush.msra.mxu0 %v2370
        %3042 = vmatpush.msra.mxu0 %v2682
        %3043 = vmatpush.msra.mxu0 %v2674
        %3044 = vmatpush.msra.mxu0 %v2666
        %3045 = vmatpush.msra.mxu0 %v2658
        %3046 = vmatpush.msra.mxu0 %v2650
        %3047 = vmatpush.msra.mxu0 %v2642
        %3048 = vmatpush.msra.mxu0 %v2634
        %3049 = vmatpush.msra.mxu0 %v2626
        %3050 = vmatmul.f32.gmra.mxu0 %v2946
        %v3051 = vpop.f32.mrf.mxu0
        %v3052 = vadd.f32 %v2973, %v3051
        %3053 = vmatmul.f32.gmra.mxu0 %v2948
        %v3054 = vpop.f32.mrf.mxu0
        %v3055 = vadd.f32 %v2978, %v3054
        %3056 = vmatmul.f32.gmra.mxu0 %v2950
        %v3057 = vpop.f32.mrf.mxu0
        %v3058 = vadd.f32 %v2983, %v3057
        %3059 = vmatmul.f32.gmra.mxu0 %v2952
        %v3060 = vpop.f32.mrf.mxu0
        %v3061 = vadd.f32 %v2988, %v3060
        %3062 = vmatmul.f32.gmra.mxu0 %v2954
        %v3063 = vpop.f32.mrf.mxu0
        %v3064 = vadd.f32 %v2993, %v3063
        %3065 = vmatmul.f32.gmra.mxu0 %v2956
        %v3066 = vpop.f32.mrf.mxu0
        %v3067 = vadd.f32 %v2998, %v3066
        %3068 = vmatmul.f32.gmra.mxu0 %v2958
        %v3069 = vpop.f32.mrf.mxu0
        %v3070 = vadd.f32 %v3003, %v3069
        %3071 = vmatmul.f32.gmra.mxu0 %v2960
        %v3072 = vpop.f32.mrf.mxu0
        %v3073 = vadd.f32 %v3008, %v3072
        %3074 = vdwg.mxu0
        %3075 = vmatpush.msra.mxu0 0.0
        %3076 = vmatpush.msra.mxu0 0.0
        %3077 = vmatpush.msra.mxu0 0.0
        %3078 = vmatpush.msra.mxu0 0.0
        %3079 = vmatpush.msra.mxu0 0.0
        %3080 = vmatpush.msra.mxu0 0.0
        %3081 = vmatpush.msra.mxu0 0.0
        %3082 = vmatpush.msra.mxu0 0.0
        %3083 = vmatpush.msra.mxu0 %v2938
        %3084 = vmatpush.msra.mxu0 %v2930
        %3085 = vmatpush.msra.mxu0 %v2922
        %3086 = vmatpush.msra.mxu0 %v2914
        %3087 = vmatpush.msra.mxu0 %v2906
        %3088 = vmatpush.msra.mxu0 %v2898
        %3089 = vmatpush.msra.mxu0 %v2890
        %3090 = vmatpush.msra.mxu0 %v2882
        %3091 = vmatmul.f32.gmra.mxu0 %v3011
        %v3092 = vpop.f32.mrf.mxu0
        %v3093 = vadd.f32 %v3052, %v3092
        %3094 = vmatmul.f32.gmra.mxu0 %v3014
        %v3095 = vpop.f32.mrf.mxu0
        %v3096 = vadd.f32 %v3055, %v3095
        %3097 = vmatmul.f32.gmra.mxu0 %v3017
        %v3098 = vpop.f32.mrf.mxu0
        %v3099 = vadd.f32 %v3058, %v3098
        %3100 = vmatmul.f32.gmra.mxu0 %v3020
        %v3101 = vpop.f32.mrf.mxu0
        %v3102 = vadd.f32 %v3061, %v3101
        %3103 = vmatmul.f32.gmra.mxu0 %v3023
        %v3104 = vpop.f32.mrf.mxu0
        %v3105 = vadd.f32 %v3064, %v3104
        %3106 = vmatmul.f32.gmra.mxu0 %v3026
        %v3107 = vpop.f32.mrf.mxu0
        %v3108 = vadd.f32 %v3067, %v3107
        %3109 = vmatmul.f32.gmra.mxu0 %v3029
        %v3110 = vpop.f32.mrf.mxu0
        %v3111 = vadd.f32 %v3070, %v3110
        %3112 = vmatmul.f32.gmra.mxu0 %v3032
        %v3113 = vpop.f32.mrf.mxu0
        %v3114 = vadd.f32 %v3073, %v3113
        %3115 = vdwg.mxu0
        %3116 = vmatpush.msra.mxu0 %v2427
        %3117 = vmatpush.msra.mxu0 %v2419
        %3118 = vmatpush.msra.mxu0 %v2411
        %3119 = vmatpush.msra.mxu0 %v2403
        %3120 = vmatpush.msra.mxu0 %v2395
        %3121 = vmatpush.msra.mxu0 %v2387
        %3122 = vmatpush.msra.mxu0 %v2379
        %3123 = vmatpush.msra.mxu0 %v2371
        %3124 = vmatpush.msra.mxu0 %v2683
        %3125 = vmatpush.msra.mxu0 %v2675
        %3126 = vmatpush.msra.mxu0 %v2667
        %3127 = vmatpush.msra.mxu0 %v2659
        %3128 = vmatpush.msra.mxu0 %v2651
        %3129 = vmatpush.msra.mxu0 %v2643
        %3130 = vmatpush.msra.mxu0 %v2635
        %3131 = vmatpush.msra.mxu0 %v2627
        %3132 = vmatmul.f32.gmra.mxu0 %v2946
        %v3133 = vpop.f32.mrf.mxu0
        %v3134 = vadd.f32 %v2973, %v3133
        %3135 = vmatmul.f32.gmra.mxu0 %v2948
        %v3136 = vpop.f32.mrf.mxu0
        %v3137 = vadd.f32 %v2978, %v3136
        %3138 = vmatmul.f32.gmra.mxu0 %v2950
        %v3139 = vpop.f32.mrf.mxu0
        %v3140 = vadd.f32 %v2983, %v3139
        %3141 = vmatmul.f32.gmra.mxu0 %v2952
        %v3142 = vpop.f32.mrf.mxu0
        %v3143 = vadd.f32 %v2988, %v3142
        %3144 = vmatmul.f32.gmra.mxu0 %v2954
        %v3145 = vpop.f32.mrf.mxu0
        %v3146 = vadd.f32 %v2993, %v3145
        %3147 = vmatmul.f32.gmra.mxu0 %v2956
        %v3148 = vpop.f32.mrf.mxu0
        %v3149 = vadd.f32 %v2998, %v3148
        %3150 = vmatmul.f32.gmra.mxu0 %v2958
        %v3151 = vpop.f32.mrf.mxu0
        %v3152 = vadd.f32 %v3003, %v3151
        %3153 = vmatmul.f32.gmra.mxu0 %v2960
        %v3154 = vpop.f32.mrf.mxu0
        %v3155 = vadd.f32 %v3008, %v3154
        %3156 = vdwg.mxu0
        %3157 = vmatpush.msra.mxu0 0.0
        %3158 = vmatpush.msra.mxu0 0.0
        %3159 = vmatpush.msra.mxu0 0.0
        %3160 = vmatpush.msra.mxu0 0.0
        %3161 = vmatpush.msra.mxu0 0.0
        %3162 = vmatpush.msra.mxu0 0.0
        %3163 = vmatpush.msra.mxu0 0.0
        %3164 = vmatpush.msra.mxu0 0.0
        %3165 = vmatpush.msra.mxu0 %v2939
        %3166 = vmatpush.msra.mxu0 %v2931
        %3167 = vmatpush.msra.mxu0 %v2923
        %3168 = vmatpush.msra.mxu0 %v2915
        %3169 = vmatpush.msra.mxu0 %v2907
        %3170 = vmatpush.msra.mxu0 %v2899
        %3171 = vmatpush.msra.mxu0 %v2891
        %3172 = vmatpush.msra.mxu0 %v2883
        %3173 = vmatmul.f32.gmra.mxu0 %v3011
        %v3174 = vpop.f32.mrf.mxu0
        %v3175 = vadd.f32 %v3134, %v3174
        %3176 = vmatmul.f32.gmra.mxu0 %v3014
        %v3177 = vpop.f32.mrf.mxu0
        %v3178 = vadd.f32 %v3137, %v3177
        %3179 = vmatmul.f32.gmra.mxu0 %v3017
        %v3180 = vpop.f32.mrf.mxu0
        %v3181 = vadd.f32 %v3140, %v3180
        %3182 = vmatmul.f32.gmra.mxu0 %v3020
        %v3183 = vpop.f32.mrf.mxu0
        %v3184 = vadd.f32 %v3143, %v3183
        %3185 = vmatmul.f32.gmra.mxu0 %v3023
        %v3186 = vpop.f32.mrf.mxu0
        %v3187 = vadd.f32 %v3146, %v3186
        %3188 = vmatmul.f32.gmra.mxu0 %v3026
        %v3189 = vpop.f32.mrf.mxu0
        %v3190 = vadd.f32 %v3149, %v3189
        %3191 = vmatmul.f32.gmra.mxu0 %v3029
        %v3192 = vpop.f32.mrf.mxu0
        %v3193 = vadd.f32 %v3152, %v3192
        %3194 = vmatmul.f32.gmra.mxu0 %v3032
        %v3195 = vpop.f32.mrf.mxu0
        %v3196 = vadd.f32 %v3155, %v3195
        %3197 = vdwg.mxu0
        %3198 = vmatpush.msra.mxu0 %v2428
        %3199 = vmatpush.msra.mxu0 %v2420
        %3200 = vmatpush.msra.mxu0 %v2412
        %3201 = vmatpush.msra.mxu0 %v2404
        %3202 = vmatpush.msra.mxu0 %v2396
        %3203 = vmatpush.msra.mxu0 %v2388
        %3204 = vmatpush.msra.mxu0 %v2380
        %3205 = vmatpush.msra.mxu0 %v2372
        %3206 = vmatpush.msra.mxu0 %v2684
        %3207 = vmatpush.msra.mxu0 %v2676
        %3208 = vmatpush.msra.mxu0 %v2668
        %3209 = vmatpush.msra.mxu0 %v2660
        %3210 = vmatpush.msra.mxu0 %v2652
        %3211 = vmatpush.msra.mxu0 %v2644
        %3212 = vmatpush.msra.mxu0 %v2636
        %3213 = vmatpush.msra.mxu0 %v2628
        %3214 = vmatmul.f32.gmra.mxu0 %v2946
        %v3215 = vpop.f32.mrf.mxu0
        %v3216 = vadd.f32 %v2973, %v3215
        %3217 = vmatmul.f32.gmra.mxu0 %v2948
        %v3218 = vpop.f32.mrf.mxu0
        %v3219 = vadd.f32 %v2978, %v3218
        %3220 = vmatmul.f32.gmra.mxu0 %v2950
        %v3221 = vpop.f32.mrf.mxu0
        %v3222 = vadd.f32 %v2983, %v3221
        %3223 = vmatmul.f32.gmra.mxu0 %v2952
        %v3224 = vpop.f32.mrf.mxu0
        %v3225 = vadd.f32 %v2988, %v3224
        %3226 = vmatmul.f32.gmra.mxu0 %v2954
        %v3227 = vpop.f32.mrf.mxu0
        %v3228 = vadd.f32 %v2993, %v3227
        %3229 = vmatmul.f32.gmra.mxu0 %v2956
        %v3230 = vpop.f32.mrf.mxu0
        %v3231 = vadd.f32 %v2998, %v3230
        %3232 = vmatmul.f32.gmra.mxu0 %v2958
        %v3233 = vpop.f32.mrf.mxu0
        %v3234 = vadd.f32 %v3003, %v3233
        %3235 = vmatmul.f32.gmra.mxu0 %v2960
        %v3236 = vpop.f32.mrf.mxu0
        %v3237 = vadd.f32 %v3008, %v3236
        %3238 = vdwg.mxu0
        %3239 = vmatpush.msra.mxu0 0.0
        %3240 = vmatpush.msra.mxu0 0.0
        %3241 = vmatpush.msra.mxu0 0.0
        %3242 = vmatpush.msra.mxu0 0.0
        %3243 = vmatpush.msra.mxu0 0.0
        %3244 = vmatpush.msra.mxu0 0.0
        %3245 = vmatpush.msra.mxu0 0.0
        %3246 = vmatpush.msra.mxu0 0.0
        %3247 = vmatpush.msra.mxu0 %v2940
        %3248 = vmatpush.msra.mxu0 %v2932
        %3249 = vmatpush.msra.mxu0 %v2924
        %3250 = vmatpush.msra.mxu0 %v2916
        %3251 = vmatpush.msra.mxu0 %v2908
        %3252 = vmatpush.msra.mxu0 %v2900
        %3253 = vmatpush.msra.mxu0 %v2892
        %3254 = vmatpush.msra.mxu0 %v2884
        %3255 = vmatmul.f32.gmra.mxu0 %v3011
        %v3256 = vpop.f32.mrf.mxu0
        %v3257 = vadd.f32 %v3216, %v3256
        %3258 = vmatmul.f32.gmra.mxu0 %v3014
        %v3259 = vpop.f32.mrf.mxu0
        %v3260 = vadd.f32 %v3219, %v3259
        %3261 = vmatmul.f32.gmra.mxu0 %v3017
        %v3262 = vpop.f32.mrf.mxu0
        %v3263 = vadd.f32 %v3222, %v3262
        %3264 = vmatmul.f32.gmra.mxu0 %v3020
        %v3265 = vpop.f32.mrf.mxu0
        %v3266 = vadd.f32 %v3225, %v3265
        %3267 = vmatmul.f32.gmra.mxu0 %v3023
        %v3268 = vpop.f32.mrf.mxu0
        %v3269 = vadd.f32 %v3228, %v3268
        %3270 = vmatmul.f32.gmra.mxu0 %v3026
        %v3271 = vpop.f32.mrf.mxu0
        %v3272 = vadd.f32 %v3231, %v3271
        %3273 = vmatmul.f32.gmra.mxu0 %v3029
        %v3274 = vpop.f32.mrf.mxu0
        %v3275 = vadd.f32 %v3234, %v3274
        %3276 = vmatmul.f32.gmra.mxu0 %v3032
        %v3277 = vpop.f32.mrf.mxu0
        %v3278 = vadd.f32 %v3237, %v3277
        %3279 = vdwg.mxu0
        %3280 = vmatpush.msra.mxu0 %v2429
        %3281 = vmatpush.msra.mxu0 %v2421
        %3282 = vmatpush.msra.mxu0 %v2413
        %3283 = vmatpush.msra.mxu0 %v2405
        %3284 = vmatpush.msra.mxu0 %v2397
        %3285 = vmatpush.msra.mxu0 %v2389
        %3286 = vmatpush.msra.mxu0 %v2381
        %3287 = vmatpush.msra.mxu0 %v2373
        %3288 = vmatpush.msra.mxu0 %v2685
        %3289 = vmatpush.msra.mxu0 %v2677
        %3290 = vmatpush.msra.mxu0 %v2669
        %3291 = vmatpush.msra.mxu0 %v2661
        %3292 = vmatpush.msra.mxu0 %v2653
        %3293 = vmatpush.msra.mxu0 %v2645
        %3294 = vmatpush.msra.mxu0 %v2637
        %3295 = vmatpush.msra.mxu0 %v2629
        %3296 = vmatmul.f32.gmra.mxu0 %v2946
        %v3297 = vpop.f32.mrf.mxu0
        %v3298 = vadd.f32 %v2973, %v3297
        %3299 = vmatmul.f32.gmra.mxu0 %v2948
        %v3300 = vpop.f32.mrf.mxu0
        %v3301 = vadd.f32 %v2978, %v3300
        %3302 = vmatmul.f32.gmra.mxu0 %v2950
        %v3303 = vpop.f32.mrf.mxu0
        %v3304 = vadd.f32 %v2983, %v3303
        %3305 = vmatmul.f32.gmra.mxu0 %v2952
        %v3306 = vpop.f32.mrf.mxu0
        %v3307 = vadd.f32 %v2988, %v3306
        %3308 = vmatmul.f32.gmra.mxu0 %v2954
        %v3309 = vpop.f32.mrf.mxu0
        %v3310 = vadd.f32 %v2993, %v3309
        %3311 = vmatmul.f32.gmra.mxu0 %v2956
        %v3312 = vpop.f32.mrf.mxu0
        %v3313 = vadd.f32 %v2998, %v3312
        %3314 = vmatmul.f32.gmra.mxu0 %v2958
        %v3315 = vpop.f32.mrf.mxu0
        %v3316 = vadd.f32 %v3003, %v3315
        %3317 = vmatmul.f32.gmra.mxu0 %v2960
        %v3318 = vpop.f32.mrf.mxu0
        %v3319 = vadd.f32 %v3008, %v3318
        %3320 = vdwg.mxu0
        %3321 = vmatpush.msra.mxu0 0.0
        %3322 = vmatpush.msra.mxu0 0.0
        %3323 = vmatpush.msra.mxu0 0.0
        %3324 = vmatpush.msra.mxu0 0.0
        %3325 = vmatpush.msra.mxu0 0.0
        %3326 = vmatpush.msra.mxu0 0.0
        %3327 = vmatpush.msra.mxu0 0.0
        %3328 = vmatpush.msra.mxu0 0.0
        %3329 = vmatpush.msra.mxu0 %v2941
        %3330 = vmatpush.msra.mxu0 %v2933
        %3331 = vmatpush.msra.mxu0 %v2925
        %3332 = vmatpush.msra.mxu0 %v2917
        %3333 = vmatpush.msra.mxu0 %v2909
        %3334 = vmatpush.msra.mxu0 %v2901
        %3335 = vmatpush.msra.mxu0 %v2893
        %3336 = vmatpush.msra.mxu0 %v2885
        %3337 = vmatmul.f32.gmra.mxu0 %v3011
        %v3338 = vpop.f32.mrf.mxu0
        %v3339 = vadd.f32 %v3298, %v3338
        %3340 = vmatmul.f32.gmra.mxu0 %v3014
        %v3341 = vpop.f32.mrf.mxu0
        %v3342 = vadd.f32 %v3301, %v3341
        %3343 = vmatmul.f32.gmra.mxu0 %v3017
        %v3344 = vpop.f32.mrf.mxu0
        %v3345 = vadd.f32 %v3304, %v3344
        %3346 = vmatmul.f32.gmra.mxu0 %v3020
        %v3347 = vpop.f32.mrf.mxu0
        %v3348 = vadd.f32 %v3307, %v3347
        %3349 = vmatmul.f32.gmra.mxu0 %v3023
        %v3350 = vpop.f32.mrf.mxu0
        %v3351 = vadd.f32 %v3310, %v3350
        %3352 = vmatmul.f32.gmra.mxu0 %v3026
        %v3353 = vpop.f32.mrf.mxu0
        %v3354 = vadd.f32 %v3313, %v3353
        %3355 = vmatmul.f32.gmra.mxu0 %v3029
        %v3356 = vpop.f32.mrf.mxu0
        %v3357 = vadd.f32 %v3316, %v3356
        %3358 = vmatmul.f32.gmra.mxu0 %v3032
        %v3359 = vpop.f32.mrf.mxu0
        %v3360 = vadd.f32 %v3319, %v3359
        %3361 = vdwg.mxu0
        %3362 = vmatpush.msra.mxu0 %v2430
        %3363 = vmatpush.msra.mxu0 %v2422
        %3364 = vmatpush.msra.mxu0 %v2414
        %3365 = vmatpush.msra.mxu0 %v2406
        %3366 = vmatpush.msra.mxu0 %v2398
        %3367 = vmatpush.msra.mxu0 %v2390
        %3368 = vmatpush.msra.mxu0 %v2382
        %3369 = vmatpush.msra.mxu0 %v2374
        %3370 = vmatpush.msra.mxu0 %v2686
        %3371 = vmatpush.msra.mxu0 %v2678
        %3372 = vmatpush.msra.mxu0 %v2670
        %3373 = vmatpush.msra.mxu0 %v2662
        %3374 = vmatpush.msra.mxu0 %v2654
        %3375 = vmatpush.msra.mxu0 %v2646
        %3376 = vmatpush.msra.mxu0 %v2638
        %3377 = vmatpush.msra.mxu0 %v2630
        %3378 = vmatmul.f32.gmra.mxu0 %v2946
        %v3379 = vpop.f32.mrf.mxu0
        %v3380 = vadd.f32 %v2973, %v3379
        %3381 = vmatmul.f32.gmra.mxu0 %v2948
        %v3382 = vpop.f32.mrf.mxu0
        %v3383 = vadd.f32 %v2978, %v3382
        %3384 = vmatmul.f32.gmra.mxu0 %v2950
        %v3385 = vpop.f32.mrf.mxu0
        %v3386 = vadd.f32 %v2983, %v3385
        %3387 = vmatmul.f32.gmra.mxu0 %v2952
        %v3388 = vpop.f32.mrf.mxu0
        %v3389 = vadd.f32 %v2988, %v3388
        %3390 = vmatmul.f32.gmra.mxu0 %v2954
        %v3391 = vpop.f32.mrf.mxu0
        %v3392 = vadd.f32 %v2993, %v3391
        %3393 = vmatmul.f32.gmra.mxu0 %v2956
        %v3394 = vpop.f32.mrf.mxu0
        %v3395 = vadd.f32 %v2998, %v3394
        %3396 = vmatmul.f32.gmra.mxu0 %v2958
        %v3397 = vpop.f32.mrf.mxu0
        %v3398 = vadd.f32 %v3003, %v3397
        %3399 = vmatmul.f32.gmra.mxu0 %v2960
        %v3400 = vpop.f32.mrf.mxu0
        %v3401 = vadd.f32 %v3008, %v3400
        %3402 = vdwg.mxu0
        %3403 = vmatpush.msra.mxu0 0.0
        %3404 = vmatpush.msra.mxu0 0.0
        %3405 = vmatpush.msra.mxu0 0.0
        %3406 = vmatpush.msra.mxu0 0.0
        %3407 = vmatpush.msra.mxu0 0.0
        %3408 = vmatpush.msra.mxu0 0.0
        %3409 = vmatpush.msra.mxu0 0.0
        %3410 = vmatpush.msra.mxu0 0.0
        %3411 = vmatpush.msra.mxu0 %v2942
        %3412 = vmatpush.msra.mxu0 %v2934
        %3413 = vmatpush.msra.mxu0 %v2926
        %3414 = vmatpush.msra.mxu0 %v2918
        %3415 = vmatpush.msra.mxu0 %v2910
        %3416 = vmatpush.msra.mxu0 %v2902
        %3417 = vmatpush.msra.mxu0 %v2894
        %3418 = vmatpush.msra.mxu0 %v2886
        %3419 = vmatmul.f32.gmra.mxu0 %v3011
        %v3420 = vpop.f32.mrf.mxu0
        %v3421 = vadd.f32 %v3380, %v3420
        %3422 = vmatmul.f32.gmra.mxu0 %v3014
        %v3423 = vpop.f32.mrf.mxu0
        %v3424 = vadd.f32 %v3383, %v3423
        %3425 = vmatmul.f32.gmra.mxu0 %v3017
        %v3426 = vpop.f32.mrf.mxu0
        %v3427 = vadd.f32 %v3386, %v3426
        %3428 = vmatmul.f32.gmra.mxu0 %v3020
        %v3429 = vpop.f32.mrf.mxu0
        %v3430 = vadd.f32 %v3389, %v3429
        %3431 = vmatmul.f32.gmra.mxu0 %v3023
        %v3432 = vpop.f32.mrf.mxu0
        %v3433 = vadd.f32 %v3392, %v3432
        %3434 = vmatmul.f32.gmra.mxu0 %v3026
        %v3435 = vpop.f32.mrf.mxu0
        %v3436 = vadd.f32 %v3395, %v3435
        %3437 = vmatmul.f32.gmra.mxu0 %v3029
        %v3438 = vpop.f32.mrf.mxu0
        %v3439 = vadd.f32 %v3398, %v3438
        %3440 = vmatmul.f32.gmra.mxu0 %v3032
        %v3441 = vpop.f32.mrf.mxu0
        %v3442 = vadd.f32 %v3401, %v3441
        %3443 = vdwg.mxu0
        %3444 = vmatpush.msra.mxu0 %v2431
        %3445 = vmatpush.msra.mxu0 %v2423
        %3446 = vmatpush.msra.mxu0 %v2415
        %3447 = vmatpush.msra.mxu0 %v2407
        %3448 = vmatpush.msra.mxu0 %v2399
        %3449 = vmatpush.msra.mxu0 %v2391
        %3450 = vmatpush.msra.mxu0 %v2383
        %3451 = vmatpush.msra.mxu0 %v2375
        %3452 = vmatpush.msra.mxu0 %v2687
        %3453 = vmatpush.msra.mxu0 %v2679
        %3454 = vmatpush.msra.mxu0 %v2671
        %3455 = vmatpush.msra.mxu0 %v2663
        %3456 = vmatpush.msra.mxu0 %v2655
        %3457 = vmatpush.msra.mxu0 %v2647
        %3458 = vmatpush.msra.mxu0 %v2639
        %3459 = vmatpush.msra.mxu0 %v2631
        %3460 = vmatmul.f32.gmra.mxu0 %v2946
        %v3461 = vpop.f32.mrf.mxu0
        %v3462 = vadd.f32 %v2973, %v3461
        %3463 = vmatmul.f32.gmra.mxu0 %v2948
        %v3464 = vpop.f32.mrf.mxu0
        %v3465 = vadd.f32 %v2978, %v3464
        %3466 = vmatmul.f32.gmra.mxu0 %v2950
        %v3467 = vpop.f32.mrf.mxu0
        %v3468 = vadd.f32 %v2983, %v3467
        %3469 = vmatmul.f32.gmra.mxu0 %v2952
        %v3470 = vpop.f32.mrf.mxu0
        %v3471 = vadd.f32 %v2988, %v3470
        %3472 = vmatmul.f32.gmra.mxu0 %v2954
        %v3473 = vpop.f32.mrf.mxu0
        %v3474 = vadd.f32 %v2993, %v3473
        %3475 = vmatmul.f32.gmra.mxu0 %v2956
        %v3476 = vpop.f32.mrf.mxu0
        %v3477 = vadd.f32 %v2998, %v3476
        %3478 = vmatmul.f32.gmra.mxu0 %v2958
        %v3479 = vpop.f32.mrf.mxu0
        %v3480 = vadd.f32 %v3003, %v3479
        %3481 = vmatmul.f32.gmra.mxu0 %v2960
        %v3482 = vpop.f32.mrf.mxu0
        %v3483 = vadd.f32 %v3008, %v3482
        %3484 = vdwg.mxu0
        %3485 = vmatpush.msra.mxu0 0.0
        %3486 = vmatpush.msra.mxu0 0.0
        %3487 = vmatpush.msra.mxu0 0.0
        %3488 = vmatpush.msra.mxu0 0.0
        %3489 = vmatpush.msra.mxu0 0.0
        %3490 = vmatpush.msra.mxu0 0.0
        %3491 = vmatpush.msra.mxu0 0.0
        %3492 = vmatpush.msra.mxu0 0.0
        %3493 = vmatpush.msra.mxu0 %v2943
        %3494 = vmatpush.msra.mxu0 %v2935
        %3495 = vmatpush.msra.mxu0 %v2927
        %3496 = vmatpush.msra.mxu0 %v2919
        %3497 = vmatpush.msra.mxu0 %v2911
        %3498 = vmatpush.msra.mxu0 %v2903
        %3499 = vmatpush.msra.mxu0 %v2895
        %3500 = vmatpush.msra.mxu0 %v2887
        %3501 = vmatmul.f32.gmra.mxu0 %v3011
        %v3502 = vpop.f32.mrf.mxu0
        %v3503 = vadd.f32 %v3462, %v3502
        %3504 = vmatmul.f32.gmra.mxu0 %v3014
        %v3505 = vpop.f32.mrf.mxu0
        %v3506 = vadd.f32 %v3465, %v3505
        %3507 = vmatmul.f32.gmra.mxu0 %v3017
        %v3508 = vpop.f32.mrf.mxu0
        %v3509 = vadd.f32 %v3468, %v3508
        %3510 = vmatmul.f32.gmra.mxu0 %v3020
        %v3511 = vpop.f32.mrf.mxu0
        %v3512 = vadd.f32 %v3471, %v3511
        %3513 = vmatmul.f32.gmra.mxu0 %v3023
        %v3514 = vpop.f32.mrf.mxu0
        %v3515 = vadd.f32 %v3474, %v3514
        %3516 = vmatmul.f32.gmra.mxu0 %v3026
        %v3517 = vpop.f32.mrf.mxu0
        %v3518 = vadd.f32 %v3477, %v3517
        %3519 = vmatmul.f32.gmra.mxu0 %v3029
        %v3520 = vpop.f32.mrf.mxu0
        %v3521 = vadd.f32 %v3480, %v3520
        %3522 = vmatmul.f32.gmra.mxu0 %v3032
        %v3523 = vpop.f32.mrf.mxu0
        %v3524 = vadd.f32 %v3483, %v3523
        %3525 = vdwg.mxu0
        %3526 = vmatpush.msra.mxu0 %v2432
        %3527 = vmatpush.msra.mxu0 %v2424
        %3528 = vmatpush.msra.mxu0 %v2416
        %3529 = vmatpush.msra.mxu0 %v2408
        %3530 = vmatpush.msra.mxu0 %v2400
        %3531 = vmatpush.msra.mxu0 %v2392
        %3532 = vmatpush.msra.mxu0 %v2384
        %3533 = vmatpush.msra.mxu0 %v2376
        %3534 = vmatpush.msra.mxu0 %v2688
        %3535 = vmatpush.msra.mxu0 %v2680
        %3536 = vmatpush.msra.mxu0 %v2672
        %3537 = vmatpush.msra.mxu0 %v2664
        %3538 = vmatpush.msra.mxu0 %v2656
        %3539 = vmatpush.msra.mxu0 %v2648
        %3540 = vmatpush.msra.mxu0 %v2640
        %3541 = vmatpush.msra.mxu0 %v2632
        %3542 = vmatmul.f32.gmra.mxu0 %v2946
        %v3543 = vpop.f32.mrf.mxu0
        %v3544 = vadd.f32 %v2973, %v3543
        %3545 = vmatmul.f32.gmra.mxu0 %v2948
        %v3546 = vpop.f32.mrf.mxu0
        %v3547 = vadd.f32 %v2978, %v3546
        %3548 = vmatmul.f32.gmra.mxu0 %v2950
        %v3549 = vpop.f32.mrf.mxu0
        %v3550 = vadd.f32 %v2983, %v3549
        %3551 = vmatmul.f32.gmra.mxu0 %v2952
        %v3552 = vpop.f32.mrf.mxu0
        %v3553 = vadd.f32 %v2988, %v3552
        %3554 = vmatmul.f32.gmra.mxu0 %v2954
        %v3555 = vpop.f32.mrf.mxu0
        %v3556 = vadd.f32 %v2993, %v3555
        %3557 = vmatmul.f32.gmra.mxu0 %v2956
        %v3558 = vpop.f32.mrf.mxu0
        %v3559 = vadd.f32 %v2998, %v3558
        %3560 = vmatmul.f32.gmra.mxu0 %v2958
        %v3561 = vpop.f32.mrf.mxu0
        %v3562 = vadd.f32 %v3003, %v3561
        %3563 = vmatmul.f32.gmra.mxu0 %v2960
        %v3564 = vpop.f32.mrf.mxu0
        %v3565 = vadd.f32 %v3008, %v3564
        %3566 = vdwg.mxu0
        %3567 = vmatpush.msra.mxu0 0.0
        %3568 = vmatpush.msra.mxu0 0.0
        %3569 = vmatpush.msra.mxu0 0.0
        %3570 = vmatpush.msra.mxu0 0.0
        %3571 = vmatpush.msra.mxu0 0.0
        %3572 = vmatpush.msra.mxu0 0.0
        %3573 = vmatpush.msra.mxu0 0.0
        %3574 = vmatpush.msra.mxu0 0.0
        %3575 = vmatpush.msra.mxu0 %v2944
        %3576 = vmatpush.msra.mxu0 %v2936
        %3577 = vmatpush.msra.mxu0 %v2928
        %3578 = vmatpush.msra.mxu0 %v2920
        %3579 = vmatpush.msra.mxu0 %v2912
        %3580 = vmatpush.msra.mxu0 %v2904
        %3581 = vmatpush.msra.mxu0 %v2896
        %3582 = vmatpush.msra.mxu0 %v2888
        %3583 = vmatmul.f32.gmra.mxu0 %v3011
        %v3584 = vpop.f32.mrf.mxu0
        %v3585 = vadd.f32 %v3544, %v3584
        %3586 = vmatmul.f32.gmra.mxu0 %v3014
        %v3587 = vpop.f32.mrf.mxu0
        %v3588 = vadd.f32 %v3547, %v3587
        %3589 = vmatmul.f32.gmra.mxu0 %v3017
        %v3590 = vpop.f32.mrf.mxu0
        %v3591 = vadd.f32 %v3550, %v3590
        %3592 = vmatmul.f32.gmra.mxu0 %v3020
        %v3593 = vpop.f32.mrf.mxu0
        %v3594 = vadd.f32 %v3553, %v3593
        %3595 = vmatmul.f32.gmra.mxu0 %v3023
        %v3596 = vpop.f32.mrf.mxu0
        %v3597 = vadd.f32 %v3556, %v3596
        %3598 = vmatmul.f32.gmra.mxu0 %v3026
        %v3599 = vpop.f32.mrf.mxu0
        %v3600 = vadd.f32 %v3559, %v3599
        %3601 = vmatmul.f32.gmra.mxu0 %v3029
        %v3602 = vpop.f32.mrf.mxu0
        %v3603 = vadd.f32 %v3562, %v3602
        %3604 = vmatmul.f32.gmra.mxu0 %v3032
        %v3605 = vpop.f32.mrf.mxu0
        %v3606 = vadd.f32 %v3565, %v3605
        %3607 = vdwg.mxu0
        %3608 = vmatpush.msra.mxu0 %v2433
        %3609 = vmatpush.msra.mxu0 %v2425
        %3610 = vmatpush.msra.mxu0 %v2417
        %3611 = vmatpush.msra.mxu0 %v2409
        %3612 = vmatpush.msra.mxu0 %v2401
        %3613 = vmatpush.msra.mxu0 %v2393
        %3614 = vmatpush.msra.mxu0 %v2385
        %3615 = vmatpush.msra.mxu0 %v2377
        %3616 = vmatpush.msra.mxu0 %v2689
        %3617 = vmatpush.msra.mxu0 %v2681
        %3618 = vmatpush.msra.mxu0 %v2673
        %3619 = vmatpush.msra.mxu0 %v2665
        %3620 = vmatpush.msra.mxu0 %v2657
        %3621 = vmatpush.msra.mxu0 %v2649
        %3622 = vmatpush.msra.mxu0 %v2641
        %3623 = vmatpush.msra.mxu0 %v2633
        %3624 = vmatmul.f32.gmra.mxu0 %v2946
        %v3625 = vpop.f32.mrf.mxu0
        %v3626 = vadd.f32 %v2973, %v3625
        %3627 = vmatmul.f32.gmra.mxu0 %v2948
        %v3628 = vpop.f32.mrf.mxu0
        %v3629 = vadd.f32 %v2978, %v3628
        %3630 = vmatmul.f32.gmra.mxu0 %v2950
        %v3631 = vpop.f32.mrf.mxu0
        %v3632 = vadd.f32 %v2983, %v3631
        %3633 = vmatmul.f32.gmra.mxu0 %v2952
        %v3634 = vpop.f32.mrf.mxu0
        %v3635 = vadd.f32 %v2988, %v3634
        %3636 = vmatmul.f32.gmra.mxu0 %v2954
        %v3637 = vpop.f32.mrf.mxu0
        %v3638 = vadd.f32 %v2993, %v3637
        %3639 = vmatmul.f32.gmra.mxu0 %v2956
        %v3640 = vpop.f32.mrf.mxu0
        %v3641 = vadd.f32 %v2998, %v3640
        %3642 = vmatmul.f32.gmra.mxu0 %v2958
        %v3643 = vpop.f32.mrf.mxu0
        %v3644 = vadd.f32 %v3003, %v3643
        %3645 = vmatmul.f32.gmra.mxu0 %v2960
        %v3646 = vpop.f32.mrf.mxu0
        %v3647 = vadd.f32 %v3008, %v3646
        %3648 = vdwg.mxu0
        %3649 = vmatpush.msra.mxu0 0.0
        %3650 = vmatpush.msra.mxu0 0.0
        %3651 = vmatpush.msra.mxu0 0.0
        %3652 = vmatpush.msra.mxu0 0.0
        %3653 = vmatpush.msra.mxu0 0.0
        %3654 = vmatpush.msra.mxu0 0.0
        %3655 = vmatpush.msra.mxu0 0.0
        %3656 = vmatpush.msra.mxu0 0.0
        %3657 = vmatpush.msra.mxu0 %v2945
        %3658 = vmatpush.msra.mxu0 %v2937
        %3659 = vmatpush.msra.mxu0 %v2929
        %3660 = vmatpush.msra.mxu0 %v2921
        %3661 = vmatpush.msra.mxu0 %v2913
        %3662 = vmatpush.msra.mxu0 %v2905
        %3663 = vmatpush.msra.mxu0 %v2897
        %3664 = vmatpush.msra.mxu0 %v2889
        %3665 = vmatmul.f32.gmra.mxu0 %v3011
        %v3666 = vpop.f32.mrf.mxu0
        %v3667 = vadd.f32 %v3626, %v3666
        %3668 = vmatmul.f32.gmra.mxu0 %v3014
        %v3669 = vpop.f32.mrf.mxu0
        %v3670 = vadd.f32 %v3629, %v3669
        %3671 = vmatmul.f32.gmra.mxu0 %v3017
        %v3672 = vpop.f32.mrf.mxu0
        %v3673 = vadd.f32 %v3632, %v3672
        %3674 = vmatmul.f32.gmra.mxu0 %v3020
        %v3675 = vpop.f32.mrf.mxu0
        %v3676 = vadd.f32 %v3635, %v3675
        %3677 = vmatmul.f32.gmra.mxu0 %v3023
        %v3678 = vpop.f32.mrf.mxu0
        %v3679 = vadd.f32 %v3638, %v3678
        %3680 = vmatmul.f32.gmra.mxu0 %v3026
        %v3681 = vpop.f32.mrf.mxu0
        %v3682 = vadd.f32 %v3641, %v3681
        %3683 = vmatmul.f32.gmra.mxu0 %v3029
        %v3684 = vpop.f32.mrf.mxu0
        %v3685 = vadd.f32 %v3644, %v3684
        %3686 = vmatmul.f32.gmra.mxu0 %v3032
        %v3687 = vpop.f32.mrf.mxu0
        %v3688 = vadd.f32 %v3647, %v3687
        %3689 = vdwg.mxu0
        %v3690 = vmax.f32 %v3093, 0.0
        %v3691 = vmax.f32 %v3175, 0.0
        %v3692 = vmax.f32 %v3257, 0.0
        %v3693 = vmax.f32 %v3339, 0.0
        %v3694 = vmax.f32 %v3421, 0.0
        %v3695 = vmax.f32 %v3503, 0.0
        %v3696 = vmax.f32 %v3585, 0.0
        %v3697 = vmax.f32 %v3667, 0.0
        %v3698 = vmax.f32 %v3096, 0.0
        %v3699 = vmax.f32 %v3178, 0.0
        %v3700 = vmax.f32 %v3260, 0.0
        %v3701 = vmax.f32 %v3342, 0.0
        %v3702 = vmax.f32 %v3424, 0.0
        %v3703 = vmax.f32 %v3506, 0.0
        %v3704 = vmax.f32 %v3588, 0.0
        %v3705 = vmax.f32 %v3670, 0.0
        %v3706 = vmax.f32 %v3099, 0.0
        %v3707 = vmax.f32 %v3181, 0.0
        %v3708 = vmax.f32 %v3263, 0.0
        %v3709 = vmax.f32 %v3345, 0.0
        %v3710 = vmax.f32 %v3427, 0.0
        %v3711 = vmax.f32 %v3509, 0.0
        %v3712 = vmax.f32 %v3591, 0.0
        %v3713 = vmax.f32 %v3673, 0.0
        %v3714 = vmax.f32 %v3102, 0.0
        %v3715 = vmax.f32 %v3184, 0.0
        %v3716 = vmax.f32 %v3266, 0.0
        %v3717 = vmax.f32 %v3348, 0.0
        %v3718 = vmax.f32 %v3430, 0.0
        %v3719 = vmax.f32 %v3512, 0.0
        %v3720 = vmax.f32 %v3594, 0.0
        %v3721 = vmax.f32 %v3676, 0.0
        %v3722 = vmax.f32 %v3105, 0.0
        %v3723 = vmax.f32 %v3187, 0.0
        %v3724 = vmax.f32 %v3269, 0.0
        %v3725 = vmax.f32 %v3351, 0.0
        %v3726 = vmax.f32 %v3433, 0.0
        %v3727 = vmax.f32 %v3515, 0.0
        %v3728 = vmax.f32 %v3597, 0.0
        %v3729 = vmax.f32 %v3679, 0.0
        %v3730 = vmax.f32 %v3108, 0.0
        %v3731 = vmax.f32 %v3190, 0.0
        %v3732 = vmax.f32 %v3272, 0.0
        %v3733 = vmax.f32 %v3354, 0.0
        %v3734 = vmax.f32 %v3436, 0.0
        %v3735 = vmax.f32 %v3518, 0.0
        %v3736 = vmax.f32 %v3600, 0.0
        %v3737 = vmax.f32 %v3682, 0.0
        %v3738 = vmax.f32 %v3111, 0.0
        %v3739 = vmax.f32 %v3193, 0.0
        %v3740 = vmax.f32 %v3275, 0.0
        %v3741 = vmax.f32 %v3357, 0.0
        %v3742 = vmax.f32 %v3439, 0.0
        %v3743 = vmax.f32 %v3521, 0.0
        %v3744 = vmax.f32 %v3603, 0.0
        %v3745 = vmax.f32 %v3685, 0.0
        %v3746 = vmax.f32 %v3114, 0.0
        %v3747 = vmax.f32 %v3196, 0.0
        %v3748 = vmax.f32 %v3278, 0.0
        %v3749 = vmax.f32 %v3360, 0.0
        %v3750 = vmax.f32 %v3442, 0.0
        %v3751 = vmax.f32 %v3524, 0.0
        %v3752 = vmax.f32 %v3606, 0.0
        %v3753 = vmax.f32 %v3688, 0.0
        %3754 = vst [vmem:[%s425] sm:$0xff] %v3690
        %3755 = vst [vmem:[%s425 + $0x8] sm:$0xff] %v3691
        %3756 = vst [vmem:[%s425 + $0x10] sm:$0xff] %v3692
        %3757 = vst [vmem:[%s425 + $0x18] sm:$0xff] %v3693
        %3758 = vst [vmem:[%s425 + $0x20] sm:$0xff] %v3694
        %3759 = vst [vmem:[%s425 + $0x28] sm:$0xff] %v3695
        %3760 = vst [vmem:[%s425 + $0x30] sm:$0xff] %v3696
        %3761 = vst [vmem:[%s425 + $0x38] sm:$0xff] %v3697
        %3762 = vst [vmem:[%s425 + $0x40] sm:$0xff] %v3698
        %3763 = vst [vmem:[%s425 + $0x48] sm:$0xff] %v3699
        %3764 = vst [vmem:[%s425 + $0x50] sm:$0xff] %v3700
        %3765 = vst [vmem:[%s425 + $0x58] sm:$0xff] %v3701
        %3766 = vst [vmem:[%s425 + $0x60] sm:$0xff] %v3702
        %3767 = vst [vmem:[%s425 + $0x68] sm:$0xff] %v3703
        %3768 = vst [vmem:[%s425 + $0x70] sm:$0xff] %v3704
        %3769 = vst [vmem:[%s425 + $0x78] sm:$0xff] %v3705
        %3770 = vst [vmem:[%s425 + $0x80] sm:$0xff] %v3706
        %3771 = vst [vmem:[%s425 + $0x88] sm:$0xff] %v3707
        %3772 = vst [vmem:[%s425 + $0x90] sm:$0xff] %v3708
        %3773 = vst [vmem:[%s425 + $0x98] sm:$0xff] %v3709
        %3774 = vst [vmem:[%s425 + $0xa0] sm:$0xff] %v3710
        %3775 = vst [vmem:[%s425 + $0xa8] sm:$0xff] %v3711
        %3776 = vst [vmem:[%s425 + $0xb0] sm:$0xff] %v3712
        %3777 = vst [vmem:[%s425 + $0xb8] sm:$0xff] %v3713
        %3778 = vst [vmem:[%s425 + $0xc0] sm:$0xff] %v3714
        %3779 = vst [vmem:[%s425 + $0xc8] sm:$0xff] %v3715
        %3780 = vst [vmem:[%s425 + $0xd0] sm:$0xff] %v3716
        %3781 = vst [vmem:[%s425 + $0xd8] sm:$0xff] %v3717
        %3782 = vst [vmem:[%s425 + $0xe0] sm:$0xff] %v3718
        %3783 = vst [vmem:[%s425 + $0xe8] sm:$0xff] %v3719
        %3784 = vst [vmem:[%s425 + $0xf0] sm:$0xff] %v3720
        %3785 = vst [vmem:[%s425 + $0xf8] sm:$0xff] %v3721
        %3786 = vst [vmem:[%s425 + $0x100] sm:$0xff] %v3722
        %3787 = vst [vmem:[%s425 + $0x108] sm:$0xff] %v3723
        %3788 = vst [vmem:[%s425 + $0x110] sm:$0xff] %v3724
        %3789 = vst [vmem:[%s425 + $0x118] sm:$0xff] %v3725
        %3790 = vst [vmem:[%s425 + $0x120] sm:$0xff] %v3726
        %3791 = vst [vmem:[%s425 + $0x128] sm:$0xff] %v3727
        %3792 = vst [vmem:[%s425 + $0x130] sm:$0xff] %v3728
        %3793 = vst [vmem:[%s425 + $0x138] sm:$0xff] %v3729
        %3794 = vst [vmem:[%s425 + $0x140] sm:$0xff] %v3730
        %3795 = vst [vmem:[%s425 + $0x148] sm:$0xff] %v3731
        %3796 = vst [vmem:[%s425 + $0x150] sm:$0xff] %v3732
        %3797 = vst [vmem:[%s425 + $0x158] sm:$0xff] %v3733
        %3798 = vst [vmem:[%s425 + $0x160] sm:$0xff] %v3734
        %3799 = vst [vmem:[%s425 + $0x168] sm:$0xff] %v3735
        %3800 = vst [vmem:[%s425 + $0x170] sm:$0xff] %v3736
        %3801 = vst [vmem:[%s425 + $0x178] sm:$0xff] %v3737
        %3802 = vst [vmem:[%s425 + $0x180] sm:$0xff] %v3738
        %3803 = vst [vmem:[%s425 + $0x188] sm:$0xff] %v3739
        %3804 = vst [vmem:[%s425 + $0x190] sm:$0xff] %v3740
        %3805 = vst [vmem:[%s425 + $0x198] sm:$0xff] %v3741
        %3806 = vst [vmem:[%s425 + $0x1a0] sm:$0xff] %v3742
        %3807 = vst [vmem:[%s425 + $0x1a8] sm:$0xff] %v3743
        %3808 = vst [vmem:[%s425 + $0x1b0] sm:$0xff] %v3744
        %3809 = vst [vmem:[%s425 + $0x1b8] sm:$0xff] %v3745
        %3810 = vst [vmem:[%s425 + $0x1c0] sm:$0xff] %v3746
        %3811 = vst [vmem:[%s425 + $0x1c8] sm:$0xff] %v3747
        %3812 = vst [vmem:[%s425 + $0x1d0] sm:$0xff] %v3748
        %3813 = vst [vmem:[%s425 + $0x1d8] sm:$0xff] %v3749
        %3814 = vst [vmem:[%s425 + $0x1e0] sm:$0xff] %v3750
        %3815 = vst [vmem:[%s425 + $0x1e8] sm:$0xff] %v3751
        %3816 = vst [vmem:[%s425 + $0x1f0] sm:$0xff] %v3752
        %3817 = vst [vmem:[%s425 + $0x1f8] sm:$0xff] %v3753
        %v3818 = vadd.f32 %v3690, %v3691
        %v3819 = vadd.f32 %v3818, %v3692
        %v3820 = vadd.f32 %v3819, %v3693
        %v3821 = vadd.f32 %v3820, %v3694
        %v3822 = vadd.f32 %v3821, %v3695
        %v3823 = vadd.f32 %v3822, %v3696
        %v3824 = vadd.f32 %v3823, %v3697
        %3825 = vadd.xlane.f32.xlu0 %v3824
        %v3826 = vpop.xlane.xlu0 %3825
        %v3827 = vadd.f32 %v3698, %v3699
        %v3828 = vadd.f32 %v3827, %v3700
        %v3829 = vadd.f32 %v3828, %v3701
        %v3830 = vadd.f32 %v3829, %v3702
        %v3831 = vadd.f32 %v3830, %v3703
        %v3832 = vadd.f32 %v3831, %v3704
        %v3833 = vadd.f32 %v3832, %v3705
        %3834 = vadd.xlane.f32.xlu0 %v3833
        %v3835 = vpop.xlane.xlu0 %3834
        %v3836 = vadd.f32 %v3706, %v3707
        %v3837 = vadd.f32 %v3836, %v3708
        %v3838 = vadd.f32 %v3837, %v3709
        %v3839 = vadd.f32 %v3838, %v3710
        %v3840 = vadd.f32 %v3839, %v3711
        %v3841 = vadd.f32 %v3840, %v3712
        %v3842 = vadd.f32 %v3841, %v3713
        %3843 = vadd.xlane.f32.xlu0 %v3842
        %v3844 = vpop.xlane.xlu0 %3843
        %v3845 = vadd.f32 %v3714, %v3715
        %v3846 = vadd.f32 %v3845, %v3716
        %v3847 = vadd.f32 %v3846, %v3717
        %v3848 = vadd.f32 %v3847, %v3718
        %v3849 = vadd.f32 %v3848, %v3719
        %v3850 = vadd.f32 %v3849, %v3720
        %v3851 = vadd.f32 %v3850, %v3721
        %3852 = vadd.xlane.f32.xlu0 %v3851
        %v3853 = vpop.xlane.xlu0 %3852
        %v3854 = vadd.f32 %v3722, %v3723
        %v3855 = vadd.f32 %v3854, %v3724
        %v3856 = vadd.f32 %v3855, %v3725
        %v3857 = vadd.f32 %v3856, %v3726
        %v3858 = vadd.f32 %v3857, %v3727
        %v3859 = vadd.f32 %v3858, %v3728
        %v3860 = vadd.f32 %v3859, %v3729
        %3861 = vadd.xlane.f32.xlu0 %v3860
        %v3862 = vpop.xlane.xlu0 %3861
        %v3863 = vadd.f32 %v3730, %v3731
        %v3864 = vadd.f32 %v3863, %v3732
        %v3865 = vadd.f32 %v3864, %v3733
        %v3866 = vadd.f32 %v3865, %v3734
        %v3867 = vadd.f32 %v3866, %v3735
        %v3868 = vadd.f32 %v3867, %v3736
        %v3869 = vadd.f32 %v3868, %v3737
        %3870 = vadd.xlane.f32.xlu0 %v3869
        %v3871 = vpop.xlane.xlu0 %3870
        %v3872 = vadd.f32 %v3738, %v3739
        %v3873 = vadd.f32 %v3872, %v3740
        %v3874 = vadd.f32 %v3873, %v3741
        %v3875 = vadd.f32 %v3874, %v3742
        %v3876 = vadd.f32 %v3875, %v3743
        %v3877 = vadd.f32 %v3876, %v3744
        %v3878 = vadd.f32 %v3877, %v3745
        %3879 = vadd.xlane.f32.xlu0 %v3878
        %v3880 = vpop.xlane.xlu0 %3879
        %v3881 = vadd.f32 %v3746, %v3747
        %v3882 = vadd.f32 %v3881, %v3748
        %v3883 = vadd.f32 %v3882, %v3749
        %v3884 = vadd.f32 %v3883, %v3750
        %v3885 = vadd.f32 %v3884, %v3751
        %v3886 = vadd.f32 %v3885, %v3752
        %v3887 = vadd.f32 %v3886, %v3753
        %3888 = vadd.xlane.f32.xlu0 %v3887
        %v3889 = vpop.xlane.xlu0 %3888
        %vm3890 = vcmask 7168
        %3891 = vst.msk [vmem:[%s446] sm:$0xff] %vm3890, %v3826
        %3892 = vst.msk [vmem:[%s446 + $0x8] sm:$0xff] %vm3890, %v3835
        %3893 = vst.msk [vmem:[%s446 + $0x10] sm:$0xff] %vm3890, %v3844
        %3894 = vst.msk [vmem:[%s446 + $0x18] sm:$0xff] %vm3890, %v3853
        %3895 = vst.msk [vmem:[%s446 + $0x20] sm:$0xff] %vm3890, %v3862
        %3896 = vst.msk [vmem:[%s446 + $0x28] sm:$0xff] %vm3890, %v3871
        %3897 = vst.msk [vmem:[%s446 + $0x30] sm:$0xff] %vm3890, %v3880
        %3898 = vst.msk [vmem:[%s446 + $0x38] sm:$0xff] %vm3890, %v3889
        %v3899 = vmul.f32 %v3690, %v3690
        %v3900 = vmul.f32 %v3691, %v3691
        %v3901 = vmul.f32 %v3692, %v3692
        %v3902 = vmul.f32 %v3693, %v3693
        %v3903 = vmul.f32 %v3694, %v3694
        %v3904 = vmul.f32 %v3695, %v3695
        %v3905 = vmul.f32 %v3696, %v3696
        %v3906 = vmul.f32 %v3697, %v3697
        %v3907 = vmul.f32 %v3698, %v3698
        %v3908 = vmul.f32 %v3699, %v3699
        %v3909 = vmul.f32 %v3700, %v3700
        %v3910 = vmul.f32 %v3701, %v3701
        %v3911 = vmul.f32 %v3702, %v3702
        %v3912 = vmul.f32 %v3703, %v3703
        %v3913 = vmul.f32 %v3704, %v3704
        %v3914 = vmul.f32 %v3705, %v3705
        %v3915 = vmul.f32 %v3706, %v3706
        %v3916 = vmul.f32 %v3707, %v3707
        %v3917 = vmul.f32 %v3708, %v3708
        %v3918 = vmul.f32 %v3709, %v3709
        %v3919 = vmul.f32 %v3710, %v3710
        %v3920 = vmul.f32 %v3711, %v3711
        %v3921 = vmul.f32 %v3712, %v3712
        %v3922 = vmul.f32 %v3713, %v3713
        %v3923 = vmul.f32 %v3714, %v3714
        %v3924 = vmul.f32 %v3715, %v3715
        %v3925 = vmul.f32 %v3716, %v3716
        %v3926 = vmul.f32 %v3717, %v3717
        %v3927 = vmul.f32 %v3718, %v3718
        %v3928 = vmul.f32 %v3719, %v3719
        %v3929 = vmul.f32 %v3720, %v3720
        %v3930 = vmul.f32 %v3721, %v3721
        %v3931 = vmul.f32 %v3722, %v3722
        %v3932 = vmul.f32 %v3723, %v3723
        %v3933 = vmul.f32 %v3724, %v3724
        %v3934 = vmul.f32 %v3725, %v3725
        %v3935 = vmul.f32 %v3726, %v3726
        %v3936 = vmul.f32 %v3727, %v3727
        %v3937 = vmul.f32 %v3728, %v3728
        %v3938 = vmul.f32 %v3729, %v3729
        %v3939 = vmul.f32 %v3730, %v3730
        %v3940 = vmul.f32 %v3731, %v3731
        %v3941 = vmul.f32 %v3732, %v3732
        %v3942 = vmul.f32 %v3733, %v3733
        %v3943 = vmul.f32 %v3734, %v3734
        %v3944 = vmul.f32 %v3735, %v3735
        %v3945 = vmul.f32 %v3736, %v3736
        %v3946 = vmul.f32 %v3737, %v3737
        %v3947 = vmul.f32 %v3738, %v3738
        %v3948 = vmul.f32 %v3739, %v3739
        %v3949 = vmul.f32 %v3740, %v3740
        %v3950 = vmul.f32 %v3741, %v3741
        %v3951 = vmul.f32 %v3742, %v3742
        %v3952 = vmul.f32 %v3743, %v3743
        %v3953 = vmul.f32 %v3744, %v3744
        %v3954 = vmul.f32 %v3745, %v3745
        %v3955 = vmul.f32 %v3746, %v3746
        %v3956 = vmul.f32 %v3747, %v3747
        %v3957 = vmul.f32 %v3748, %v3748
        %v3958 = vmul.f32 %v3749, %v3749
        %v3959 = vmul.f32 %v3750, %v3750
        %v3960 = vmul.f32 %v3751, %v3751
        %v3961 = vmul.f32 %v3752, %v3752
        %v3962 = vmul.f32 %v3753, %v3753
        %v3963 = vadd.f32 %v3899, %v3900
        %v3964 = vadd.f32 %v3963, %v3901
        %v3965 = vadd.f32 %v3964, %v3902
        %v3966 = vadd.f32 %v3965, %v3903
        %v3967 = vadd.f32 %v3966, %v3904
        %v3968 = vadd.f32 %v3967, %v3905
        %v3969 = vadd.f32 %v3968, %v3906
        %3970 = vadd.xlane.f32.xlu0 %v3969
        %v3971 = vpop.xlane.xlu0 %3970
        %v3972 = vadd.f32 %v3907, %v3908
        %v3973 = vadd.f32 %v3972, %v3909
        %v3974 = vadd.f32 %v3973, %v3910
        %v3975 = vadd.f32 %v3974, %v3911
        %v3976 = vadd.f32 %v3975, %v3912
        %v3977 = vadd.f32 %v3976, %v3913
        %v3978 = vadd.f32 %v3977, %v3914
        %3979 = vadd.xlane.f32.xlu0 %v3978
        %v3980 = vpop.xlane.xlu0 %3979
        %v3981 = vadd.f32 %v3915, %v3916
        %v3982 = vadd.f32 %v3981, %v3917
        %v3983 = vadd.f32 %v3982, %v3918
        %v3984 = vadd.f32 %v3983, %v3919
        %v3985 = vadd.f32 %v3984, %v3920
        %v3986 = vadd.f32 %v3985, %v3921
        %v3987 = vadd.f32 %v3986, %v3922
        %3988 = vadd.xlane.f32.xlu0 %v3987
        %v3989 = vpop.xlane.xlu0 %3988
        %v3990 = vadd.f32 %v3923, %v3924
        %v3991 = vadd.f32 %v3990, %v3925
        %v3992 = vadd.f32 %v3991, %v3926
        %v3993 = vadd.f32 %v3992, %v3927
        %v3994 = vadd.f32 %v3993, %v3928
        %v3995 = vadd.f32 %v3994, %v3929
        %v3996 = vadd.f32 %v3995, %v3930
        %3997 = vadd.xlane.f32.xlu0 %v3996
        %v3998 = vpop.xlane.xlu0 %3997
        %v3999 = vadd.f32 %v3931, %v3932
        %v4000 = vadd.f32 %v3999, %v3933
        %v4001 = vadd.f32 %v4000, %v3934
        %v4002 = vadd.f32 %v4001, %v3935
        %v4003 = vadd.f32 %v4002, %v3936
        %v4004 = vadd.f32 %v4003, %v3937
        %v4005 = vadd.f32 %v4004, %v3938
        %4006 = vadd.xlane.f32.xlu0 %v4005
        %v4007 = vpop.xlane.xlu0 %4006
        %v4008 = vadd.f32 %v3939, %v3940
        %v4009 = vadd.f32 %v4008, %v3941
        %v4010 = vadd.f32 %v4009, %v3942
        %v4011 = vadd.f32 %v4010, %v3943
        %v4012 = vadd.f32 %v4011, %v3944
        %v4013 = vadd.f32 %v4012, %v3945
        %v4014 = vadd.f32 %v4013, %v3946
        %4015 = vadd.xlane.f32.xlu0 %v4014
        %v4016 = vpop.xlane.xlu0 %4015
        %v4017 = vadd.f32 %v3947, %v3948
        %v4018 = vadd.f32 %v4017, %v3949
        %v4019 = vadd.f32 %v4018, %v3950
        %v4020 = vadd.f32 %v4019, %v3951
        %v4021 = vadd.f32 %v4020, %v3952
        %v4022 = vadd.f32 %v4021, %v3953
        %v4023 = vadd.f32 %v4022, %v3954
        %4024 = vadd.xlane.f32.xlu0 %v4023
        %v4025 = vpop.xlane.xlu0 %4024
        %v4026 = vadd.f32 %v3955, %v3956
        %v4027 = vadd.f32 %v4026, %v3957
        %v4028 = vadd.f32 %v4027, %v3958
        %v4029 = vadd.f32 %v4028, %v3959
        %v4030 = vadd.f32 %v4029, %v3960
        %v4031 = vadd.f32 %v4030, %v3961
        %v4032 = vadd.f32 %v4031, %v3962
        %4033 = vadd.xlane.f32.xlu0 %v4032
        %v4034 = vpop.xlane.xlu0 %4033
        %4035 = vst.msk [vmem:[%s451] sm:$0xff] %vm3890, %v3971
        %4036 = vst.msk [vmem:[%s451 + $0x8] sm:$0xff] %vm3890, %v3980
        %4037 = vst.msk [vmem:[%s451 + $0x10] sm:$0xff] %vm3890, %v3989
        %4038 = vst.msk [vmem:[%s451 + $0x18] sm:$0xff] %vm3890, %v3998
        %4039 = vst.msk [vmem:[%s451 + $0x20] sm:$0xff] %vm3890, %v4007
        %4040 = vst.msk [vmem:[%s451 + $0x28] sm:$0xff] %vm3890, %v4016
        %4041 = vst.msk [vmem:[%s451 + $0x30] sm:$0xff] %vm3890, %v4025
        %4042 = vst.msk [vmem:[%s451 + $0x38] sm:$0xff] %vm3890, %v4034
        %s4043 = sand.u32 %s181, 1
        %s4044 = sand.u32 %s181, 1
        %s4045 = smul.addr %s4044, 512
        %s4046 = scalar_lea.vmem [#allocation3], %s4045
        %p4047 = scmp.lt.s32.totalorder %s21, 1
        %s4048 = scalar_select %p4047, %s21, 1
        %s4049 = smul.addr %s4048, 8
        %s4050 = smul.addr %s4049, 8
        %s4051 = scalar_lea.vmem %s8, %s4050
        %p4052 = scmp.lt.s32.totalorder %s21, 1
        %s4053 = scalar_select %p4052, %s21, 1
        %s4054 = smul.addr %s4053, 8
        %s4055 = smul.addr %s4054, 8
        %s4056 = scalar_lea.vmem %s9, %s4055
        // Predicated region
        $region72: #{time_attention_forward.2} parent=66 // pred_check
          %p4057 = pneg %p191
        $region73: #{time_attention_forward.2} parent=66 // pred_check_branch
          %4059 = sbr.rel (%p4057) target = $region75
        $region74: #{time_attention_forward.2} parent=66 // pred_region
          %s4060 = smul.u32 8, %s21
          %s4061 = smul.addr %s4060, 8
          %s4062 = scalar_lea.vmem %s7, %s4061
          // Predicated region
          $region76: #{time_attention_forward.2} parent=74 // pred_check
            _
          $region77: #{time_attention_forward.2} parent=74 // pred_check_branch
            %4064 = sbr.rel (0) target = $region79
          $region78: #{time_attention_forward.2} parent=74 // pred_region
            // Predicated region
            $region80: #{time_attention_forward.2} parent=78 // pred_check
              _
            $region81: #{time_attention_forward.2} parent=78 // pred_check_branch
              %4066 = sbr.rel (0) target = $region83
            $region82: #{time_attention_forward.2} parent=78 // pred_region
              loop: start=0, step=1, limit=1
              $region84: #{time_attention_forward.2} parent=82 // loop_pre_header
                _
              $region85: #{time_attention_forward.2} parent=82 // loop_header
                %s4068 = sphi 0, %s4072
                %p4069 = scmp.ge.s32.totalorder %s4068, 1
                %s4073 = sphi %s4046, %s4046
                %s4074 = sphi %s4062, %s4062
              $region86: #{time_attention_forward.2} parent=82 // loop_header_branch
                %4071 = sbr.rel (%p4069) target = $region90
              $region87: #{time_attention_forward.2} parent=82 // loop_body
                %v4075 = vld [vmem:[%s4073] sm:$0xff]
                %4076 = vst [vmem:[%s4074] sm:$0xff] %v4075
                %v4077 = vld [vmem:[%s4073 + $0x8] sm:$0xff]
                %4078 = vst [vmem:[%s4074 + $0x8] sm:$0xff] %v4077
                %v4079 = vld [vmem:[%s4073 + $0x10] sm:$0xff]
                %4080 = vst [vmem:[%s4074 + $0x10] sm:$0xff] %v4079
                %v4081 = vld [vmem:[%s4073 + $0x18] sm:$0xff]
                %4082 = vst [vmem:[%s4074 + $0x18] sm:$0xff] %v4081
                %v4083 = vld [vmem:[%s4073 + $0x20] sm:$0xff]
                %4084 = vst [vmem:[%s4074 + $0x20] sm:$0xff] %v4083
                %v4085 = vld [vmem:[%s4073 + $0x28] sm:$0xff]
                %4086 = vst [vmem:[%s4074 + $0x28] sm:$0xff] %v4085
                %v4087 = vld [vmem:[%s4073 + $0x30] sm:$0xff]
                %4088 = vst [vmem:[%s4074 + $0x30] sm:$0xff] %v4087
                %v4089 = vld [vmem:[%s4073 + $0x38] sm:$0xff]
                %4090 = vst [vmem:[%s4074 + $0x38] sm:$0xff] %v4089
                %v4091 = vld [vmem:[%s4073 + $0x40] sm:$0xff]
                %4092 = vst [vmem:[%s4074 + $0x80] sm:$0xff] %v4091
                %v4093 = vld [vmem:[%s4073 + $0x48] sm:$0xff]
                %4094 = vst [vmem:[%s4074 + $0x88] sm:$0xff] %v4093
                %v4095 = vld [vmem:[%s4073 + $0x50] sm:$0xff]
                %4096 = vst [vmem:[%s4074 + $0x90] sm:$0xff] %v4095
                %v4097 = vld [vmem:[%s4073 + $0x58] sm:$0xff]
                %4098 = vst [vmem:[%s4074 + $0x98] sm:$0xff] %v4097
                %v4099 = vld [vmem:[%s4073 + $0x60] sm:$0xff]
                %4100 = vst [vmem:[%s4074 + $0xa0] sm:$0xff] %v4099
                %v4101 = vld [vmem:[%s4073 + $0x68] sm:$0xff]
                %4102 = vst [vmem:[%s4074 + $0xa8] sm:$0xff] %v4101
                %v4103 = vld [vmem:[%s4073 + $0x70] sm:$0xff]
                %4104 = vst [vmem:[%s4074 + $0xb0] sm:$0xff] %v4103
                %v4105 = vld [vmem:[%s4073 + $0x78] sm:$0xff]
                %4106 = vst [vmem:[%s4074 + $0xb8] sm:$0xff] %v4105
                %v4107 = vld [vmem:[%s4073 + $0x80] sm:$0xff]
                %4108 = vst [vmem:[%s4074 + $0x100] sm:$0xff] %v4107
                %v4109 = vld [vmem:[%s4073 + $0x88] sm:$0xff]
                %4110 = vst [vmem:[%s4074 + $0x108] sm:$0xff] %v4109
                %v4111 = vld [vmem:[%s4073 + $0x90] sm:$0xff]
                %4112 = vst [vmem:[%s4074 + $0x110] sm:$0xff] %v4111
                %v4113 = vld [vmem:[%s4073 + $0x98] sm:$0xff]
                %4114 = vst [vmem:[%s4074 + $0x118] sm:$0xff] %v4113
                %v4115 = vld [vmem:[%s4073 + $0xa0] sm:$0xff]
                %4116 = vst [vmem:[%s4074 + $0x120] sm:$0xff] %v4115
                %v4117 = vld [vmem:[%s4073 + $0xa8] sm:$0xff]
                %4118 = vst [vmem:[%s4074 + $0x128] sm:$0xff] %v4117
                %v4119 = vld [vmem:[%s4073 + $0xb0] sm:$0xff]
                %4120 = vst [vmem:[%s4074 + $0x130] sm:$0xff] %v4119
                %v4121 = vld [vmem:[%s4073 + $0xb8] sm:$0xff]
                %4122 = vst [vmem:[%s4074 + $0x138] sm:$0xff] %v4121
                %v4123 = vld [vmem:[%s4073 + $0xc0] sm:$0xff]
                %4124 = vst [vmem:[%s4074 + $0x180] sm:$0xff] %v4123
                %v4125 = vld [vmem:[%s4073 + $0xc8] sm:$0xff]
                %4126 = vst [vmem:[%s4074 + $0x188] sm:$0xff] %v4125
                %v4127 = vld [vmem:[%s4073 + $0xd0] sm:$0xff]
                %4128 = vst [vmem:[%s4074 + $0x190] sm:$0xff] %v4127
                %v4129 = vld [vmem:[%s4073 + $0xd8] sm:$0xff]
                %4130 = vst [vmem:[%s4074 + $0x198] sm:$0xff] %v4129
                %v4131 = vld [vmem:[%s4073 + $0xe0] sm:$0xff]
                %4132 = vst [vmem:[%s4074 + $0x1a0] sm:$0xff] %v4131
                %v4133 = vld [vmem:[%s4073 + $0xe8] sm:$0xff]
                %4134 = vst [vmem:[%s4074 + $0x1a8] sm:$0xff] %v4133
                %v4135 = vld [vmem:[%s4073 + $0xf0] sm:$0xff]
                %4136 = vst [vmem:[%s4074 + $0x1b0] sm:$0xff] %v4135
                %v4137 = vld [vmem:[%s4073 + $0xf8] sm:$0xff]
                %4138 = vst [vmem:[%s4074 + $0x1b8] sm:$0xff] %v4137
                %v4139 = vld [vmem:[%s4073 + $0x100] sm:$0xff]
                %4140 = vst [vmem:[%s4074 + $0x200] sm:$0xff] %v4139
                %v4141 = vld [vmem:[%s4073 + $0x108] sm:$0xff]
                %4142 = vst [vmem:[%s4074 + $0x208] sm:$0xff] %v4141
                %v4143 = vld [vmem:[%s4073 + $0x110] sm:$0xff]
                %4144 = vst [vmem:[%s4074 + $0x210] sm:$0xff] %v4143
                %v4145 = vld [vmem:[%s4073 + $0x118] sm:$0xff]
                %4146 = vst [vmem:[%s4074 + $0x218] sm:$0xff] %v4145
                %v4147 = vld [vmem:[%s4073 + $0x120] sm:$0xff]
                %4148 = vst [vmem:[%s4074 + $0x220] sm:$0xff] %v4147
                %v4149 = vld [vmem:[%s4073 + $0x128] sm:$0xff]
                %4150 = vst [vmem:[%s4074 + $0x228] sm:$0xff] %v4149
                %v4151 = vld [vmem:[%s4073 + $0x130] sm:$0xff]
                %4152 = vst [vmem:[%s4074 + $0x230] sm:$0xff] %v4151
                %v4153 = vld [vmem:[%s4073 + $0x138] sm:$0xff]
                %4154 = vst [vmem:[%s4074 + $0x238] sm:$0xff] %v4153
                %v4155 = vld [vmem:[%s4073 + $0x140] sm:$0xff]
                %4156 = vst [vmem:[%s4074 + $0x280] sm:$0xff] %v4155
                %v4157 = vld [vmem:[%s4073 + $0x148] sm:$0xff]
                %4158 = vst [vmem:[%s4074 + $0x288] sm:$0xff] %v4157
                %v4159 = vld [vmem:[%s4073 + $0x150] sm:$0xff]
                %4160 = vst [vmem:[%s4074 + $0x290] sm:$0xff] %v4159
                %v4161 = vld [vmem:[%s4073 + $0x158] sm:$0xff]
                %4162 = vst [vmem:[%s4074 + $0x298] sm:$0xff] %v4161
                %v4163 = vld [vmem:[%s4073 + $0x160] sm:$0xff]
                %4164 = vst [vmem:[%s4074 + $0x2a0] sm:$0xff] %v4163
                %v4165 = vld [vmem:[%s4073 + $0x168] sm:$0xff]
                %4166 = vst [vmem:[%s4074 + $0x2a8] sm:$0xff] %v4165
                %v4167 = vld [vmem:[%s4073 + $0x170] sm:$0xff]
                %4168 = vst [vmem:[%s4074 + $0x2b0] sm:$0xff] %v4167
                %v4169 = vld [vmem:[%s4073 + $0x178] sm:$0xff]
                %4170 = vst [vmem:[%s4074 + $0x2b8] sm:$0xff] %v4169
                %v4171 = vld [vmem:[%s4073 + $0x180] sm:$0xff]
                %4172 = vst [vmem:[%s4074 + $0x300] sm:$0xff] %v4171
                %v4173 = vld [vmem:[%s4073 + $0x188] sm:$0xff]
                %4174 = vst [vmem:[%s4074 + $0x308] sm:$0xff] %v4173
                %v4175 = vld [vmem:[%s4073 + $0x190] sm:$0xff]
                %4176 = vst [vmem:[%s4074 + $0x310] sm:$0xff] %v4175
                %v4177 = vld [vmem:[%s4073 + $0x198] sm:$0xff]
                %4178 = vst [vmem:[%s4074 + $0x318] sm:$0xff] %v4177
                %v4179 = vld [vmem:[%s4073 + $0x1a0] sm:$0xff]
                %4180 = vst [vmem:[%s4074 + $0x320] sm:$0xff] %v4179
                %v4181 = vld [vmem:[%s4073 + $0x1a8] sm:$0xff]
                %4182 = vst [vmem:[%s4074 + $0x328] sm:$0xff] %v4181
                %v4183 = vld [vmem:[%s4073 + $0x1b0] sm:$0xff]
                %4184 = vst [vmem:[%s4074 + $0x330] sm:$0xff] %v4183
                %v4185 = vld [vmem:[%s4073 + $0x1b8] sm:$0xff]
                %4186 = vst [vmem:[%s4074 + $0x338] sm:$0xff] %v4185
                %v4187 = vld [vmem:[%s4073 + $0x1c0] sm:$0xff]
                %4188 = vst [vmem:[%s4074 + $0x380] sm:$0xff] %v4187
                %v4189 = vld [vmem:[%s4073 + $0x1c8] sm:$0xff]
                %4190 = vst [vmem:[%s4074 + $0x388] sm:$0xff] %v4189
                %v4191 = vld [vmem:[%s4073 + $0x1d0] sm:$0xff]
                %4192 = vst [vmem:[%s4074 + $0x390] sm:$0xff] %v4191
                %v4193 = vld [vmem:[%s4073 + $0x1d8] sm:$0xff]
                %4194 = vst [vmem:[%s4074 + $0x398] sm:$0xff] %v4193
                %v4195 = vld [vmem:[%s4073 + $0x1e0] sm:$0xff]
                %4196 = vst [vmem:[%s4074 + $0x3a0] sm:$0xff] %v4195
                %v4197 = vld [vmem:[%s4073 + $0x1e8] sm:$0xff]
                %4198 = vst [vmem:[%s4074 + $0x3a8] sm:$0xff] %v4197
                %v4199 = vld [vmem:[%s4073 + $0x1f0] sm:$0xff]
                %4200 = vst [vmem:[%s4074 + $0x3b0] sm:$0xff] %v4199
                %v4201 = vld [vmem:[%s4073 + $0x1f8] sm:$0xff]
                %4202 = vst [vmem:[%s4074 + $0x3b8] sm:$0xff] %v4201
              $region88: #{time_attention_forward.2} parent=82 // loop_footer
                %s4072 = sadd.s32 1, %s4068
              $region89: #{time_attention_forward.2} parent=82 // loop_footer_branch
                %4067 = sbr.rel target = $region85
              $region90: #{time_attention_forward.2} parent=82 // loop_exit
                _
            $region83: #{time_attention_forward.2} parent=78 // pred_fallthru
              _
            // Predicated region
            $region91: #{time_attention_forward.2} parent=78 // pred_check
              _
            $region92: #{time_attention_forward.2} parent=78 // pred_check_branch
              %4204 = sbr.rel target = $region94
            $region93: #{time_attention_forward.2} parent=78 // pred_region
              _
            $region94: #{time_attention_forward.2} parent=78 // pred_fallthru
              _
          $region79: #{time_attention_forward.2} parent=74 // pred_fallthru
            _
          %4205 = vnop
        $region75: #{time_attention_forward.2} parent=66 // pred_fallthru
          _
        // Predicated region
        $region95: #{time_attention_forward.2} parent=66 // pred_check
          %p4206 = pneg %p217
        $region96: #{time_attention_forward.2} parent=66 // pred_check_branch
          %4208 = sbr.rel (%p4206) target = $region98
        $region97: #{time_attention_forward.2} parent=66 // pred_region
          _
        $region98: #{time_attention_forward.2} parent=66 // pred_fallthru
          _
        // Predicated region
        $region99: #{time_attention_forward.2} parent=66 // pred_check
          %p4209 = pneg %p243
        $region100: #{time_attention_forward.2} parent=66 // pred_check_branch
          %4211 = sbr.rel (%p4209) target = $region102
        $region101: #{time_attention_forward.2} parent=66 // pred_region
          _
        $region102: #{time_attention_forward.2} parent=66 // pred_fallthru
          _
      $region67: #{time_attention_forward.2} parent=5 // pred_fallthru
        _
      %p4212 = scmp.le.s32.totalorder 2, %s16
      // Predicated region
      $region103: #{time_attention_forward.2} parent=5 // pred_check
        %p4213 = pneg %p4212
      $region104: #{time_attention_forward.2} parent=5 // pred_check_branch
        %4215 = sbr.rel (%p4213) target = $region106
      $region105: #{time_attention_forward.2} parent=5 // pred_region
        %s4216 = ssub.s32 %s16, 2
        // Predicated region
        $region107: #{time_attention_forward.2} parent=105 // pred_check
          %p4217 = pneg %p197
        $region108: #{time_attention_forward.2} parent=105 // pred_check_branch
          %4219 = sbr.rel (%p4217) target = $region110
        $region109: #{time_attention_forward.2} parent=105 // pred_region
          %s4220 = sand.u32 %s182, 1
          %s4221 = sand.u32 %s182, 1
          %s4222 = smul.addr %s4221, 512
          %s4223 = scalar_lea.vmem [#allocation3], %s4222
        $region110: #{time_attention_forward.2} parent=105 // pred_fallthru
          _
        // Predicated region
        $region111: #{time_attention_forward.2} parent=105 // pred_check
          %p4224 = pneg %p223
        $region112: #{time_attention_forward.2} parent=105 // pred_check_branch
          %4226 = sbr.rel (%p4224) target = $region114
        $region113: #{time_attention_forward.2} parent=105 // pred_region
          %p4227 = scmp.lt.s32.totalorder %s22, 1
          %s4228 = scalar_select %p4227, %s22, 1
          %s4229 = smul.addr %s4228, 8
          %s4230 = smul.addr %s4229, 8
          %s4231 = scalar_lea.vmem %s8, %s4230
        $region114: #{time_attention_forward.2} parent=105 // pred_fallthru
          _
        // Predicated region
        $region115: #{time_attention_forward.2} parent=105 // pred_check
          %p4232 = pneg %p249
        $region116: #{time_attention_forward.2} parent=105 // pred_check_branch
          %4234 = sbr.rel (%p4232) target = $region118
        $region117: #{time_attention_forward.2} parent=105 // pred_region
          %p4235 = scmp.lt.s32.totalorder %s22, 1
          %s4236 = scalar_select %p4235, %s22, 1
          %s4237 = smul.addr %s4236, 8
          %s4238 = smul.addr %s4237, 8
          %s4239 = scalar_lea.vmem %s9, %s4238
        $region118: #{time_attention_forward.2} parent=105 // pred_fallthru
          _
      $region106: #{time_attention_forward.2} parent=5 // pred_fallthru
        _
    $region6: #{time_attention_forward.2} parent=1 // loop_footer
      %s20 = sadd.s32 1, %s16
    $region7: #{time_attention_forward.2} parent=1 // loop_footer_branch
      %15 = sbr.rel target = $region3
    $region8: #{time_attention_forward.2} parent=1 // loop_exit
      _

</llo_original>
